<compile_context>
chip_gen: v5e
topology: v5e:2x2
jax: 0.10.0
libtpu: 0.0.40
codegen_flags: <defaults>
</compile_context>

<pallas_src>
import functools

import jax
import jax.numpy as jnp
from jax import lax
from jax.experimental import pallas as pl
from jax.experimental.pallas import tpu as pltpu


# ----------------------------------------------------------------------------
# ResNet50 backbone (plain JAX glue — faithful forward, deterministic init)
# TODO(synk): backbone conv/BN2d/maxpool layers run in plain JAX (lax.conv),
#             not Pallas.
# ----------------------------------------------------------------------------

_STAGE_CFG = [(64, 3, 1), (128, 4, 2), (256, 6, 2), (512, 3, 2)]  # (mid, blocks, stride)
_EXPANSION = 4
_BN_EPS = 1e-5


def _conv_init(key, out_c, in_c, kh, kw):
    fan_in = in_c * kh * kw
    std = (2.0 / fan_in) ** 0.5
    return jax.random.normal(key, (out_c, in_c, kh, kw), jnp.float32) * std


def make_resnet50_params(key):
    keys = iter(jax.random.split(key, 256))
    params = {
        "conv1": _conv_init(next(keys), 64, 1, 7, 7),  # conv1 replaced: 1 input channel
        "bn1": (jnp.ones((64,), jnp.float32), jnp.zeros((64,), jnp.float32)),
        "stages": [],
    }
    in_c = 64
    for mid, nblocks, _ in _STAGE_CFG:
        blocks = []
        out_c = mid * _EXPANSION
        for b in range(nblocks):
            blk = {
                "conv1": _conv_init(next(keys), mid, in_c, 1, 1),
                "bn1": (jnp.ones((mid,), jnp.float32), jnp.zeros((mid,), jnp.float32)),
                "conv2": _conv_init(next(keys), mid, mid, 3, 3),
                "bn2": (jnp.ones((mid,), jnp.float32), jnp.zeros((mid,), jnp.float32)),
                "conv3": _conv_init(next(keys), out_c, mid, 1, 1),
                # zero_init_residual=True -> last BN gamma initialized to zero
                "bn3": (jnp.zeros((out_c,), jnp.float32), jnp.zeros((out_c,), jnp.float32)),
            }
            if b == 0:  # downsample branch on first block of each stage
                blk["down_conv"] = _conv_init(next(keys), out_c, in_c, 1, 1)
                blk["down_bn"] = (jnp.ones((out_c,), jnp.float32),
                                  jnp.zeros((out_c,), jnp.float32))
            blocks.append(blk)
            in_c = out_c
        params["stages"].append(blocks)
    return params


def _conv2d(x, w, stride, padding):
    return lax.conv_general_dilated(
        x, w,
        window_strides=(stride, stride),
        padding=((padding, padding), (padding, padding)),
        dimension_numbers=("NCHW", "OIHW", "NCHW"),
    )


def _batchnorm2d(x, gamma, beta, eps=_BN_EPS):
    # training-mode BN: batch statistics over (N, H, W), biased variance
    mean = jnp.mean(x, axis=(0, 2, 3), keepdims=True)
    var = jnp.mean((x - mean) ** 2, axis=(0, 2, 3), keepdims=True)
    xhat = (x - mean) * lax.rsqrt(var + eps)
    return xhat * gamma.reshape(1, -1, 1, 1) + beta.reshape(1, -1, 1, 1)


def _bottleneck(x, blk, stride):
    out = jax.nn.relu(_batchnorm2d(_conv2d(x, blk["conv1"], 1, 0), *blk["bn1"]))
    out = jax.nn.relu(_batchnorm2d(_conv2d(out, blk["conv2"], stride, 1), *blk["bn2"]))
    out = _batchnorm2d(_conv2d(out, blk["conv3"], 1, 0), *blk["bn3"])
    if "down_conv" in blk:
        identity = _batchnorm2d(_conv2d(x, blk["down_conv"], stride, 0), *blk["down_bn"])
    else:
        identity = x
    return jax.nn.relu(out + identity)


def resnet50_forward(x, params):
    x = jax.nn.relu(_batchnorm2d(_conv2d(x, params["conv1"], 2, 3), *params["bn1"]))
    # MaxPool2d(kernel=3, stride=2, padding=1); padded values are -inf
    x = lax.reduce_window(x, -jnp.inf, lax.max,
                          (1, 1, 3, 3), (1, 1, 2, 2),
                          ((0, 0), (0, 0), (1, 1), (1, 1)))
    for (mid, nblocks, stage_stride), blocks in zip(_STAGE_CFG, params["stages"]):
        for b in range(nblocks):
            x = _bottleneck(x, blocks[b], stage_stride if b == 0 else 1)
    # global average pool, fc = Identity  -> (N, 2048)
    return jnp.mean(x, axis=(2, 3))


# ----------------------------------------------------------------------------
# Fused Pallas kernel: projector (Linear -> BN1d -> ReLU ... -> Linear) for
# the CONCATENATED views (one matmul per layer) + per-view affine-free BN +
# cross-correlation + Barlow loss.
#
# All operands fit in VMEM at these sizes (bf16 weights ~1.2 MiB, activations
# and the (D,D) correlation are tiny), so the kernel is gridless: weights are
# DMA'd once, matmuls are lane-dense (output features on lanes), MXU feed is
# native bf16, and the scalar loss is emitted through an SMEM (1,1) output.
# TODO(synk): for the paper-scale config (8192-d projector, large batch) the
#             "everything resident, gridless" structure must be re-tiled
#             (K / N grid axes with a VMEM f32 accumulator, pl.Buffered(2-3)
#             weight tiles, explicit vmem_limit_bytes); this breaks first on
#             v7x (64 MiB VMEM, 32 MiB default scoped) and a parallel grid
#             axis would also be needed there to use both TensorCores.
# TODO(synk): the bf16 weight DMA could be prefetched behind the backbone via
#             a cross-call DMA future (separate side-effecting pallas_call).
# ----------------------------------------------------------------------------

def barlow_fused_kernel(*refs, n_hidden, n, lambd, eps):
    h_ref = refs[0]                  # (2n, feat) f32, views stacked along rows
    layer_refs = refs[1:-1]          # n_hidden * (w_bf16, gamma, beta), final w_bf16
    loss_ref = refs[-1]              # (1,1) SMEM scalar output

    def bn(x):                       # BatchNorm1d, training mode, biased variance (f32)
        m = jnp.mean(x, axis=0, keepdims=True)
        v = jnp.mean((x - m) ** 2, axis=0, keepdims=True)
        return (x - m) * lax.rsqrt(v + eps)

    # Projector on the concatenated batch; BN statistics per view (rows [0:n]
    # belong to view 1, rows [n:2n] to view 2).
    z = h_ref[...].astype(jnp.bfloat16)                      # (2n, feat) bf16 MXU feed
    for li in range(n_hidden):                               # Linear -> BN1d -> ReLU
        w_ref, g_ref, b_ref = layer_refs[3 * li:3 * li + 3]
        y = jnp.dot(z, w_ref[...], preferred_element_type=jnp.float32)   # (2n, d) f32
        y = jnp.concatenate([bn(y[:n]), bn(y[n:])], axis=0)              # per-view BN
        z = jnp.maximum(y * g_ref[...] + b_ref[...], 0.0).astype(jnp.bfloat16)
    zf = jnp.dot(z, layer_refs[-1][...],                     # final Linear (no bias)
                 preferred_element_type=jnp.float32)         # (2n, D) f32

    # Affine-free BN per view, then c = bn(z1).T @ bn(z2) / N  -> (D, D)
    z1b = bn(zf[:n])
    z2b = bn(zf[n:])
    inv_n = 1.0 / n
    c = lax.dot_general(z1b, z2b, (((0,), (0,)), ((), ())),
                        preferred_element_type=jnp.float32) * inv_n

    # diag(c) via a per-column batch dot (no (D,D) iota mask, no cancellation):
    diag = jnp.sum(z1b * z2b, axis=0, keepdims=True) * inv_n          # (1, D)
    on_diag = jnp.sum((diag - 1.0) ** 2)
    off_diag = jnp.sum(c * c) - jnp.sum(diag * diag)
    loss_ref[0, 0] = on_diag + lambd * off_diag


def pallas_barlow_head(h1, h2, pparams, *, lambd):
    n = h1.shape[0]
    n_hidden = (len(pparams) - 1) // 3
    h = jnp.concatenate([h1, h2], axis=0)                    # (2n, feat) f32

    kernel = functools.partial(barlow_fused_kernel,
                               n_hidden=n_hidden, n=n, lambd=lambd, eps=_BN_EPS)

    # Advisory cost estimate for XLA's scheduler around the custom call.
    weights = [pparams[3 * i] for i in range(n_hidden)] + [pparams[-1]]
    d_out = weights[-1].shape[1]
    flops = sum(2 * (2 * n) * w.shape[0] * w.shape[1] for w in weights)
    flops += 2 * n * d_out * d_out                           # correlation matmul
    transcendentals = 2 * sum(w.shape[1] for w in weights)   # rsqrt per BN feature
    bytes_accessed = (h.size * h.dtype.itemsize
                      + sum(p.size * p.dtype.itemsize for p in pparams) + 4)
    ce = pl.CostEstimate(flops=int(flops),
                         transcendentals=int(transcendentals),
                         bytes_accessed=int(bytes_accessed))

    num_inputs = 1 + len(pparams)
    loss = pl.pallas_call(
        kernel,
        out_shape=jax.ShapeDtypeStruct((1, 1), jnp.float32),
        in_specs=[pl.BlockSpec(memory_space=pltpu.MemorySpace.VMEM)] * num_inputs,
        out_specs=pl.BlockSpec(memory_space=pltpu.MemorySpace.SMEM),
        cost_estimate=ce,
    )(h, *pparams)
    return loss[0, 0]


# ----------------------------------------------------------------------------
# Projector params + full BarlowTwins forward
# ----------------------------------------------------------------------------

def make_projector_params(key, sizes):
    # Weights stored pre-transposed to (in_features, out_features) and cast to
    # bfloat16: native MXU feed (contraction on sublanes, output features on
    # lanes), half the HBM->VMEM bytes.  BN affine params stay f32.
    # Layout: n_hidden * (w, gamma, beta), then final w.
    params = []
    keys = jax.random.split(key, len(sizes) - 1)
    for i in range(len(sizes) - 1):
        fan_in = sizes[i]
        w = (jax.random.normal(keys[i], (sizes[i], sizes[i + 1]), jnp.float32)
             / (fan_in ** 0.5)).astype(jnp.bfloat16)
        params.append(w)
        if i < len(sizes) - 2:                         # hidden layer -> BN1d affine
            params.append(jnp.ones((1, sizes[i + 1]), jnp.float32))   # gamma
            params.append(jnp.zeros((1, sizes[i + 1]), jnp.float32))  # beta
    return tuple(params)


def barlow_twins_forward(y1, y2, bparams, pparams, *, lambd):
    h1 = resnet50_forward(y1, bparams)
    h2 = resnet50_forward(y2, bparams)
    # TODO(synk): distributed all_reduce of c skipped (cfg.meta.distributed = False);
    #             if enabled, c must be all-reduced and divided by the global batch.
    return pallas_barlow_head(h1, h2, pparams, lambd=lambd)


# ----------------------------------------------------------------------------
# Main
# ----------------------------------------------------------------------------

if __name__ == "__main__":
    LAMBD = 0.0051
    PROJECTION_SIZES = [2048, 256, 256, 128]   # sizes[0] must be ResNet50 feature dim

    key = jax.random.PRNGKey(0)
    k_y1, k_y2, k_backbone, k_proj = jax.random.split(key, 4)

    # Two augmented views, 1-channel (the module replaces conv1 with 1 input channel)
    y1 = jax.random.normal(k_y1, (2, 1, 32, 32), jnp.float32)
    y2 = jax.random.normal(k_y2, (2, 1, 32, 32), jnp.float32)

    bparams = make_resnet50_params(k_backbone)
    pparams = make_projector_params(k_proj, PROJECTION_SIZES)

    fwd = jax.jit(functools.partial(barlow_twins_forward, lambd=LAMBD))
    loss = fwd(y1, y2, bparams, pparams)
    jax.block_until_ready(loss)
    assert loss.shape == () and jnp.isfinite(loss)
    print("KERNEL_OK")
</pallas_src>

<mosaic_0001>
module attributes {stable_mosaic.version = 11 : i64} {
  func.func @barlow_fused_kernel(%arg0: memref<4x2048xf32, #tpu.memory_space<vmem>>, %arg1: memref<2048x256xbf16, #tpu.memory_space<vmem>>, %arg2: memref<1x256xf32, #tpu.memory_space<vmem>>, %arg3: memref<1x256xf32, #tpu.memory_space<vmem>>, %arg4: memref<256x256xbf16, #tpu.memory_space<vmem>>, %arg5: memref<1x256xf32, #tpu.memory_space<vmem>>, %arg6: memref<1x256xf32, #tpu.memory_space<vmem>>, %arg7: memref<256x128xbf16, #tpu.memory_space<vmem>>, %arg8: memref<1x1xf32, #tpu.memory_space<smem>>) attributes {dimension_semantics = [], scalar_prefetch = 0 : i64, scratch_operands = 0 : i64, tpu.core_type = #tpu.core_type<tc>} {
    %c0 = arith.constant 0 : index
    %c0_0 = arith.constant 0 : index
    %0 = vector.load %arg0[%c0, %c0_0] : memref<4x2048xf32, #tpu.memory_space<vmem>>, vector<4x2048xf32>
    %1 = arith.truncf %0 : vector<4x2048xf32> to vector<4x2048xbf16>
    %c0_1 = arith.constant 0 : index
    %c0_2 = arith.constant 0 : index
    %2 = vector.load %arg1[%c0_1, %c0_2] : memref<2048x256xbf16, #tpu.memory_space<vmem>>, vector<2048x256xbf16>
    %cst = arith.constant dense<0.000000e+00> : vector<4x256xf32>
    %3 = tpu.matmul %1, %2, %cst {dimension_numbers = #tpu.dot_dimension_numbers<[1], [0], [0], [1], [0, 0, 1, 1], [], []>} : vector<4x2048xbf16>, vector<2048x256xbf16>, vector<4x256xf32> -> vector<4x256xf32>
    %4 = vector.extract_strided_slice %3 {offsets = [0, 0], sizes = [2, 256], strides = [1, 1]} : vector<4x256xf32> to vector<2x256xf32>
    %cst_3 = arith.constant dense<0.000000e+00> : vector<256xf32>
    %5 = vector.multi_reduction <add>, %4, %cst_3 [0] : vector<2x256xf32> to vector<256xf32>
    %6 = vector.shape_cast %5 : vector<256xf32> to vector<1x256xf32>
    %cst_4 = arith.constant 2.000000e+00 : f32
    %7 = vector.broadcast %cst_4 : f32 to vector<1x256xf32>
    %8 = arith.divf %6, %7 : vector<1x256xf32>
    %9 = vector.broadcast %8 : vector<1x256xf32> to vector<2x256xf32>
    %10 = arith.subf %4, %9 : vector<2x256xf32>
    %11 = arith.mulf %10, %10 : vector<2x256xf32>
    %cst_5 = arith.constant dense<0.000000e+00> : vector<256xf32>
    %12 = vector.multi_reduction <add>, %11, %cst_5 [0] : vector<2x256xf32> to vector<256xf32>
    %13 = vector.shape_cast %12 : vector<256xf32> to vector<1x256xf32>
    %cst_6 = arith.constant 2.000000e+00 : f32
    %14 = vector.broadcast %cst_6 : f32 to vector<1x256xf32>
    %15 = arith.divf %13, %14 : vector<1x256xf32>
    %16 = vector.broadcast %8 : vector<1x256xf32> to vector<2x256xf32>
    %17 = arith.subf %4, %16 : vector<2x256xf32>
    %cst_7 = arith.constant 9.99999974E-6 : f32
    %18 = vector.broadcast %cst_7 : f32 to vector<1x256xf32>
    %19 = arith.addf %15, %18 : vector<1x256xf32>
    %20 = math.rsqrt %19 : vector<1x256xf32>
    %21 = vector.broadcast %20 : vector<1x256xf32> to vector<2x256xf32>
    %22 = arith.mulf %17, %21 : vector<2x256xf32>
    %23 = vector.extract_strided_slice %3 {offsets = [2, 0], sizes = [2, 256], strides = [1, 1]} : vector<4x256xf32> to vector<2x256xf32>
    %cst_8 = arith.constant dense<0.000000e+00> : vector<256xf32>
    %24 = vector.multi_reduction <add>, %23, %cst_8 [0] : vector<2x256xf32> to vector<256xf32>
    %25 = vector.shape_cast %24 : vector<256xf32> to vector<1x256xf32>
    %cst_9 = arith.constant 2.000000e+00 : f32
    %26 = vector.broadcast %cst_9 : f32 to vector<1x256xf32>
    %27 = arith.divf %25, %26 : vector<1x256xf32>
    %28 = vector.broadcast %27 : vector<1x256xf32> to vector<2x256xf32>
    %29 = arith.subf %23, %28 : vector<2x256xf32>
    %30 = arith.mulf %29, %29 : vector<2x256xf32>
    %cst_10 = arith.constant dense<0.000000e+00> : vector<256xf32>
    %31 = vector.multi_reduction <add>, %30, %cst_10 [0] : vector<2x256xf32> to vector<256xf32>
    %32 = vector.shape_cast %31 : vector<256xf32> to vector<1x256xf32>
    %cst_11 = arith.constant 2.000000e+00 : f32
    %33 = vector.broadcast %cst_11 : f32 to vector<1x256xf32>
    %34 = arith.divf %32, %33 : vector<1x256xf32>
    %35 = vector.broadcast %27 : vector<1x256xf32> to vector<2x256xf32>
    %36 = arith.subf %23, %35 : vector<2x256xf32>
    %cst_12 = arith.constant 9.99999974E-6 : f32
    %37 = vector.broadcast %cst_12 : f32 to vector<1x256xf32>
    %38 = arith.addf %34, %37 : vector<1x256xf32>
    %39 = math.rsqrt %38 : vector<1x256xf32>
    %40 = vector.broadcast %39 : vector<1x256xf32> to vector<2x256xf32>
    %41 = arith.mulf %36, %40 : vector<2x256xf32>
    %42 = tpu.concatenate %22, %41 in 0 : vector<2x256xf32>, vector<2x256xf32> -> vector<4x256xf32>
    %c0_13 = arith.constant 0 : index
    %c0_14 = arith.constant 0 : index
    %43 = vector.load %arg2[%c0_13, %c0_14] : memref<1x256xf32, #tpu.memory_space<vmem>>, vector<1x256xf32>
    %44 = vector.broadcast %43 : vector<1x256xf32> to vector<4x256xf32>
    %45 = arith.mulf %42, %44 : vector<4x256xf32>
    %c0_15 = arith.constant 0 : index
    %c0_16 = arith.constant 0 : index
    %46 = vector.load %arg3[%c0_15, %c0_16] : memref<1x256xf32, #tpu.memory_space<vmem>>, vector<1x256xf32>
    %47 = vector.broadcast %46 : vector<1x256xf32> to vector<4x256xf32>
    %48 = arith.addf %45, %47 : vector<4x256xf32>
    %cst_17 = arith.constant 0.000000e+00 : f32
    %49 = vector.broadcast %cst_17 : f32 to vector<4x256xf32>
    %50 = arith.maximumf %48, %49 : vector<4x256xf32>
    %51 = arith.truncf %50 : vector<4x256xf32> to vector<4x256xbf16>
    %c0_18 = arith.constant 0 : index
    %c0_19 = arith.constant 0 : index
    %52 = vector.load %arg4[%c0_18, %c0_19] : memref<256x256xbf16, #tpu.memory_space<vmem>>, vector<256x256xbf16>
    %cst_20 = arith.constant dense<0.000000e+00> : vector<4x256xf32>
    %53 = tpu.matmul %51, %52, %cst_20 {dimension_numbers = #tpu.dot_dimension_numbers<[1], [0], [0], [1], [0, 0, 1, 1], [], []>} : vector<4x256xbf16>, vector<256x256xbf16>, vector<4x256xf32> -> vector<4x256xf32>
    %54 = vector.extract_strided_slice %53 {offsets = [0, 0], sizes = [2, 256], strides = [1, 1]} : vector<4x256xf32> to vector<2x256xf32>
    %cst_21 = arith.constant dense<0.000000e+00> : vector<256xf32>
    %55 = vector.multi_reduction <add>, %54, %cst_21 [0] : vector<2x256xf32> to vector<256xf32>
    %56 = vector.shape_cast %55 : vector<256xf32> to vector<1x256xf32>
    %cst_22 = arith.constant 2.000000e+00 : f32
    %57 = vector.broadcast %cst_22 : f32 to vector<1x256xf32>
    %58 = arith.divf %56, %57 : vector<1x256xf32>
    %59 = vector.broadcast %58 : vector<1x256xf32> to vector<2x256xf32>
    %60 = arith.subf %54, %59 : vector<2x256xf32>
    %61 = arith.mulf %60, %60 : vector<2x256xf32>
    %cst_23 = arith.constant dense<0.000000e+00> : vector<256xf32>
    %62 = vector.multi_reduction <add>, %61, %cst_23 [0] : vector<2x256xf32> to vector<256xf32>
    %63 = vector.shape_cast %62 : vector<256xf32> to vector<1x256xf32>
    %cst_24 = arith.constant 2.000000e+00 : f32
    %64 = vector.broadcast %cst_24 : f32 to vector<1x256xf32>
    %65 = arith.divf %63, %64 : vector<1x256xf32>
    %66 = vector.broadcast %58 : vector<1x256xf32> to vector<2x256xf32>
    %67 = arith.subf %54, %66 : vector<2x256xf32>
    %cst_25 = arith.constant 9.99999974E-6 : f32
    %68 = vector.broadcast %cst_25 : f32 to vector<1x256xf32>
    %69 = arith.addf %65, %68 : vector<1x256xf32>
    %70 = math.rsqrt %69 : vector<1x256xf32>
    %71 = vector.broadcast %70 : vector<1x256xf32> to vector<2x256xf32>
    %72 = arith.mulf %67, %71 : vector<2x256xf32>
    %73 = vector.extract_strided_slice %53 {offsets = [2, 0], sizes = [2, 256], strides = [1, 1]} : vector<4x256xf32> to vector<2x256xf32>
    %cst_26 = arith.constant dense<0.000000e+00> : vector<256xf32>
    %74 = vector.multi_reduction <add>, %73, %cst_26 [0] : vector<2x256xf32> to vector<256xf32>
    %75 = vector.shape_cast %74 : vector<256xf32> to vector<1x256xf32>
    %cst_27 = arith.constant 2.000000e+00 : f32
    %76 = vector.broadcast %cst_27 : f32 to vector<1x256xf32>
    %77 = arith.divf %75, %76 : vector<1x256xf32>
    %78 = vector.broadcast %77 : vector<1x256xf32> to vector<2x256xf32>
    %79 = arith.subf %73, %78 : vector<2x256xf32>
    %80 = arith.mulf %79, %79 : vector<2x256xf32>
    %cst_28 = arith.constant dense<0.000000e+00> : vector<256xf32>
    %81 = vector.multi_reduction <add>, %80, %cst_28 [0] : vector<2x256xf32> to vector<256xf32>
    %82 = vector.shape_cast %81 : vector<256xf32> to vector<1x256xf32>
    %cst_29 = arith.constant 2.000000e+00 : f32
    %83 = vector.broadcast %cst_29 : f32 to vector<1x256xf32>
    %84 = arith.divf %82, %83 : vector<1x256xf32>
    %85 = vector.broadcast %77 : vector<1x256xf32> to vector<2x256xf32>
    %86 = arith.subf %73, %85 : vector<2x256xf32>
    %cst_30 = arith.constant 9.99999974E-6 : f32
    %87 = vector.broadcast %cst_30 : f32 to vector<1x256xf32>
    %88 = arith.addf %84, %87 : vector<1x256xf32>
    %89 = math.rsqrt %88 : vector<1x256xf32>
    %90 = vector.broadcast %89 : vector<1x256xf32> to vector<2x256xf32>
    %91 = arith.mulf %86, %90 : vector<2x256xf32>
    %92 = tpu.concatenate %72, %91 in 0 : vector<2x256xf32>, vector<2x256xf32> -> vector<4x256xf32>
    %c0_31 = arith.constant 0 : index
    %c0_32 = arith.constant 0 : index
    %93 = vector.load %arg5[%c0_31, %c0_32] : memref<1x256xf32, #tpu.memory_space<vmem>>, vector<1x256xf32>
    %94 = vector.broadcast %93 : vector<1x256xf32> to vector<4x256xf32>
    %95 = arith.mulf %92, %94 : vector<4x256xf32>
    %c0_33 = arith.constant 0 : index
    %c0_34 = arith.constant 0 : index
    %96 = vector.load %arg6[%c0_33, %c0_34] : memref<1x256xf32, #tpu.memory_space<vmem>>, vector<1x256xf32>
    %97 = vector.broadcast %96 : vector<1x256xf32> to vector<4x256xf32>
    %98 = arith.addf %95, %97 : vector<4x256xf32>
    %cst_35 = arith.constant 0.000000e+00 : f32
    %99 = vector.broadcast %cst_35 : f32 to vector<4x256xf32>
    %100 = arith.maximumf %98, %99 : vector<4x256xf32>
    %101 = arith.truncf %100 : vector<4x256xf32> to vector<4x256xbf16>
    %c0_36 = arith.constant 0 : index
    %c0_37 = arith.constant 0 : index
    %102 = vector.load %arg7[%c0_36, %c0_37] : memref<256x128xbf16, #tpu.memory_space<vmem>>, vector<256x128xbf16>
    %cst_38 = arith.constant dense<0.000000e+00> : vector<4x128xf32>
    %103 = tpu.matmul %101, %102, %cst_38 {dimension_numbers = #tpu.dot_dimension_numbers<[1], [0], [0], [1], [0, 0, 1, 1], [], []>} : vector<4x256xbf16>, vector<256x128xbf16>, vector<4x128xf32> -> vector<4x128xf32>
    %104 = vector.extract_strided_slice %103 {offsets = [0, 0], sizes = [2, 128], strides = [1, 1]} : vector<4x128xf32> to vector<2x128xf32>
    %cst_39 = arith.constant dense<0.000000e+00> : vector<128xf32>
    %105 = vector.multi_reduction <add>, %104, %cst_39 [0] : vector<2x128xf32> to vector<128xf32>
    %106 = vector.shape_cast %105 : vector<128xf32> to vector<1x128xf32>
    %cst_40 = arith.constant 2.000000e+00 : f32
    %107 = vector.broadcast %cst_40 : f32 to vector<1x128xf32>
    %108 = arith.divf %106, %107 : vector<1x128xf32>
    %109 = vector.broadcast %108 : vector<1x128xf32> to vector<2x128xf32>
    %110 = arith.subf %104, %109 : vector<2x128xf32>
    %111 = arith.mulf %110, %110 : vector<2x128xf32>
    %cst_41 = arith.constant dense<0.000000e+00> : vector<128xf32>
    %112 = vector.multi_reduction <add>, %111, %cst_41 [0] : vector<2x128xf32> to vector<128xf32>
    %113 = vector.shape_cast %112 : vector<128xf32> to vector<1x128xf32>
    %cst_42 = arith.constant 2.000000e+00 : f32
    %114 = vector.broadcast %cst_42 : f32 to vector<1x128xf32>
    %115 = arith.divf %113, %114 : vector<1x128xf32>
    %116 = vector.broadcast %108 : vector<1x128xf32> to vector<2x128xf32>
    %117 = arith.subf %104, %116 : vector<2x128xf32>
    %cst_43 = arith.constant 9.99999974E-6 : f32
    %118 = vector.broadcast %cst_43 : f32 to vector<1x128xf32>
    %119 = arith.addf %115, %118 : vector<1x128xf32>
    %120 = math.rsqrt %119 : vector<1x128xf32>
    %121 = vector.broadcast %120 : vector<1x128xf32> to vector<2x128xf32>
    %122 = arith.mulf %117, %121 : vector<2x128xf32>
    %123 = vector.extract_strided_slice %103 {offsets = [2, 0], sizes = [2, 128], strides = [1, 1]} : vector<4x128xf32> to vector<2x128xf32>
    %cst_44 = arith.constant dense<0.000000e+00> : vector<128xf32>
    %124 = vector.multi_reduction <add>, %123, %cst_44 [0] : vector<2x128xf32> to vector<128xf32>
    %125 = vector.shape_cast %124 : vector<128xf32> to vector<1x128xf32>
    %cst_45 = arith.constant 2.000000e+00 : f32
    %126 = vector.broadcast %cst_45 : f32 to vector<1x128xf32>
    %127 = arith.divf %125, %126 : vector<1x128xf32>
    %128 = vector.broadcast %127 : vector<1x128xf32> to vector<2x128xf32>
    %129 = arith.subf %123, %128 : vector<2x128xf32>
    %130 = arith.mulf %129, %129 : vector<2x128xf32>
    %cst_46 = arith.constant dense<0.000000e+00> : vector<128xf32>
    %131 = vector.multi_reduction <add>, %130, %cst_46 [0] : vector<2x128xf32> to vector<128xf32>
    %132 = vector.shape_cast %131 : vector<128xf32> to vector<1x128xf32>
    %cst_47 = arith.constant 2.000000e+00 : f32
    %133 = vector.broadcast %cst_47 : f32 to vector<1x128xf32>
    %134 = arith.divf %132, %133 : vector<1x128xf32>
    %135 = vector.broadcast %127 : vector<1x128xf32> to vector<2x128xf32>
    %136 = arith.subf %123, %135 : vector<2x128xf32>
    %cst_48 = arith.constant 9.99999974E-6 : f32
    %137 = vector.broadcast %cst_48 : f32 to vector<1x128xf32>
    %138 = arith.addf %134, %137 : vector<1x128xf32>
    %139 = math.rsqrt %138 : vector<1x128xf32>
    %140 = vector.broadcast %139 : vector<1x128xf32> to vector<2x128xf32>
    %141 = arith.mulf %136, %140 : vector<2x128xf32>
    %cst_49 = arith.constant dense<0.000000e+00> : vector<128x128xf32>
    %142 = tpu.matmul %122, %141, %cst_49 {dimension_numbers = #tpu.dot_dimension_numbers<[0], [0], [1], [1], [0, 1, 1, 1], [], []>} : vector<2x128xf32>, vector<2x128xf32>, vector<128x128xf32> -> vector<128x128xf32>
    %cst_50 = arith.constant 5.000000e-01 : f32
    %143 = vector.broadcast %cst_50 : f32 to vector<128x128xf32>
    %144 = arith.mulf %142, %143 : vector<128x128xf32>
    %145 = arith.mulf %122, %141 : vector<2x128xf32>
    %cst_51 = arith.constant dense<0.000000e+00> : vector<128xf32>
    %146 = vector.multi_reduction <add>, %145, %cst_51 [0] : vector<2x128xf32> to vector<128xf32>
    %147 = vector.shape_cast %146 : vector<128xf32> to vector<1x128xf32>
    %cst_52 = arith.constant 5.000000e-01 : f32
    %148 = vector.broadcast %cst_52 : f32 to vector<1x128xf32>
    %149 = arith.mulf %147, %148 : vector<1x128xf32>
    %cst_53 = arith.constant 1.000000e+00 : f32
    %150 = vector.broadcast %cst_53 : f32 to vector<1x128xf32>
    %151 = arith.subf %149, %150 : vector<1x128xf32>
    %152 = arith.mulf %151, %151 : vector<1x128xf32>
    %153 = vector.shape_cast %152 : vector<1x128xf32> to vector<1x1x128xf32>
    %cst_54 = arith.constant dense<0.000000e+00> : vector<1xf32>
    %154 = vector.multi_reduction <add>, %153, %cst_54 [1, 2] : vector<1x1x128xf32> to vector<1xf32>
    %155 = vector.shape_cast %154 : vector<1xf32> to vector<1x1x1xf32>
    %156 = vector.extract %155[0, 0, 0] : f32 from vector<1x1x1xf32>
    %157 = arith.mulf %144, %144 : vector<128x128xf32>
    %158 = vector.shape_cast %157 : vector<128x128xf32> to vector<1x128x128xf32>
    %cst_55 = arith.constant dense<0.000000e+00> : vector<1xf32>
    %159 = vector.multi_reduction <add>, %158, %cst_55 [1, 2] : vector<1x128x128xf32> to vector<1xf32>
    %160 = vector.shape_cast %159 : vector<1xf32> to vector<1x1x1xf32>
    %161 = vector.extract %160[0, 0, 0] : f32 from vector<1x1x1xf32>
    %162 = arith.mulf %149, %149 : vector<1x128xf32>
    %163 = vector.shape_cast %162 : vector<1x128xf32> to vector<1x1x128xf32>
    %cst_56 = arith.constant dense<0.000000e+00> : vector<1xf32>
    %164 = vector.multi_reduction <add>, %163, %cst_56 [1, 2] : vector<1x1x128xf32> to vector<1xf32>
    %165 = vector.shape_cast %164 : vector<1xf32> to vector<1x1x1xf32>
    %166 = vector.extract %165[0, 0, 0] : f32 from vector<1x1x1xf32>
    %167 = arith.subf %161, %166 : f32
    %cst_57 = arith.constant 5.100000e-03 : f32
    %168 = arith.mulf %cst_57, %167 : f32
    %169 = arith.addf %156, %168 : f32
    %c0_58 = arith.constant 0 : index
    %c0_59 = arith.constant 0 : index
    %170 = memref.load %arg8[%c0_58, %c0_59] : memref<1x1xf32, #tpu.memory_space<smem>>
    memref.store %169, %arg8[%c0_58, %c0_59] : memref<1x1xf32, #tpu.memory_space<smem>>
    return
  }
}

</mosaic_0001>

<llo_original>
// kernel: reverse
$region0: #{reverse}
  #allocation0 [shape = 's32[1]{0}', space=sflag, size = 0x4, scoped, tag = 'scoped memory for reverse']
  %s0 = inlined_call_operand.vmem [shape: f32[256,256,3,3], index: 0, kind: input, shape index: {}]
  %s1 = inlined_call_operand.vmem [shape: bf16[256,256,3,3], index: 1, kind: output, shape index: {}]
  %s2 = scalar_lea.vmem %s0, 4096
  %v3 = vld [vmem:[%s2] sm:$0xff]
  %s4 = scalar_lea.vmem %s0, 2560
  %v5 = vld [vmem:[%s4] sm:$0xff]
  %s6 = scalar_lea.vmem %s1, 768
  %s7 = scalar_lea.vmem %s0, 1024
  %v8 = vld [vmem:[%s7] sm:$0xff]
  %s9 = scalar_lea.vmem %s1, 1536
  %s10 = scalar_lea.vmem %s0, 3584
  %v11 = vld [vmem:[%s10] sm:$0xff]
  %s12 = scalar_lea.vmem %s1, 256
  %s13 = scalar_lea.vmem %s0, 2048
  %v14 = vld [vmem:[%s13] sm:$0xff]
  %s15 = scalar_lea.vmem %s1, 1024
  %s16 = scalar_lea.vmem %s0, 512
  %v17 = vld [vmem:[%s16] sm:$0xff]
  %s18 = scalar_lea.vmem %s1, 1792
  %s19 = scalar_lea.vmem %s0, 3072
  %v20 = vld [vmem:[%s19] sm:$0xff]
  %s21 = scalar_lea.vmem %s1, 512
  %s22 = scalar_lea.vmem %s0, 1536
  %v23 = vld [vmem:[%s22] sm:$0xff]
  %s24 = scalar_lea.vmem %s1, 1280
  %v25 = vld [vmem:[%s0] sm:$0xff]
  %s26 = scalar_lea.vmem %s1, 2048
  %s27 = scalar_lea.vmem %s0, 4112
  %v28 = vld [vmem:[%s27] sm:$0xff]
  %s29 = scalar_lea.vmem %s1, 8
  %s30 = scalar_lea.vmem %s0, 2576
  %v31 = vld [vmem:[%s30] sm:$0xff]
  %s32 = scalar_lea.vmem %s1, 776
  %s33 = scalar_lea.vmem %s0, 1040
  %v34 = vld [vmem:[%s33] sm:$0xff]
  %s35 = scalar_lea.vmem %s1, 1544
  %s36 = scalar_lea.vmem %s0, 3600
  %v37 = vld [vmem:[%s36] sm:$0xff]
  %s38 = scalar_lea.vmem %s1, 264
  %s39 = scalar_lea.vmem %s0, 2064
  %v40 = vld [vmem:[%s39] sm:$0xff]
  %s41 = scalar_lea.vmem %s1, 1032
  %s42 = scalar_lea.vmem %s0, 528
  %v43 = vld [vmem:[%s42] sm:$0xff]
  %s44 = scalar_lea.vmem %s1, 1800
  %s45 = scalar_lea.vmem %s0, 3088
  %v46 = vld [vmem:[%s45] sm:$0xff]
  %s47 = scalar_lea.vmem %s1, 520
  %s48 = scalar_lea.vmem %s0, 1552
  %v49 = vld [vmem:[%s48] sm:$0xff]
  %s50 = scalar_lea.vmem %s1, 1288
  %s51 = scalar_lea.vmem %s0, 16
  %v52 = vld [vmem:[%s51] sm:$0xff]
  %s53 = scalar_lea.vmem %s1, 2056
  %s54 = scalar_lea.vmem %s0, 4128
  %v55 = vld [vmem:[%s54] sm:$0xff]
  %s56 = scalar_lea.vmem %s1, 16
  %s57 = scalar_lea.vmem %s0, 2592
  %v58 = vld [vmem:[%s57] sm:$0xff]
  %s59 = scalar_lea.vmem %s1, 784
  %s60 = scalar_lea.vmem %s0, 1056
  %v61 = vld [vmem:[%s60] sm:$0xff]
  %s62 = scalar_lea.vmem %s1, 1552
  %s63 = scalar_lea.vmem %s0, 3616
  %v64 = vld [vmem:[%s63] sm:$0xff]
  %s65 = scalar_lea.vmem %s1, 272
  %s66 = scalar_lea.vmem %s0, 2080
  %v67 = vld [vmem:[%s66] sm:$0xff]
  %s68 = scalar_lea.vmem %s1, 1040
  %s69 = scalar_lea.vmem %s0, 544
  %v70 = vld [vmem:[%s69] sm:$0xff]
  %s71 = scalar_lea.vmem %s1, 1808
  %s72 = scalar_lea.vmem %s0, 3104
  %v73 = vld [vmem:[%s72] sm:$0xff]
  %s74 = scalar_lea.vmem %s1, 528
  %s75 = scalar_lea.vmem %s0, 1568
  %v76 = vld [vmem:[%s75] sm:$0xff]
  %s77 = scalar_lea.vmem %s1, 1296
  %s78 = scalar_lea.vmem %s0, 32
  %v79 = vld [vmem:[%s78] sm:$0xff]
  %s80 = scalar_lea.vmem %s1, 2064
  %s81 = scalar_lea.vmem %s0, 4144
  %v82 = vld [vmem:[%s81] sm:$0xff]
  %s83 = scalar_lea.vmem %s1, 24
  %s84 = scalar_lea.vmem %s0, 2608
  %v85 = vld [vmem:[%s84] sm:$0xff]
  %s86 = scalar_lea.vmem %s1, 792
  %s87 = scalar_lea.vmem %s0, 1072
  %v88 = vld [vmem:[%s87] sm:$0xff]
  %s89 = scalar_lea.vmem %s1, 1560
  %s90 = scalar_lea.vmem %s0, 3632
  %v91 = vld [vmem:[%s90] sm:$0xff]
  %s92 = scalar_lea.vmem %s1, 280
  %s93 = scalar_lea.vmem %s0, 2096
  %v94 = vld [vmem:[%s93] sm:$0xff]
  %s95 = scalar_lea.vmem %s1, 1048
  %s96 = scalar_lea.vmem %s0, 560
  %v97 = vld [vmem:[%s96] sm:$0xff]
  %s98 = scalar_lea.vmem %s1, 1816
  %s99 = scalar_lea.vmem %s0, 3120
  %v100 = vld [vmem:[%s99] sm:$0xff]
  %s101 = scalar_lea.vmem %s1, 536
  %s102 = scalar_lea.vmem %s0, 1584
  %v103 = vld [vmem:[%s102] sm:$0xff]
  %s104 = scalar_lea.vmem %s1, 1304
  %s105 = scalar_lea.vmem %s0, 48
  %v106 = vld [vmem:[%s105] sm:$0xff]
  %s107 = scalar_lea.vmem %s1, 2072
  %s108 = scalar_lea.vmem %s0, 4160
  %v109 = vld [vmem:[%s108] sm:$0xff]
  %s110 = scalar_lea.vmem %s1, 32
  %s111 = scalar_lea.vmem %s0, 2624
  %v112 = vld [vmem:[%s111] sm:$0xff]
  %s113 = scalar_lea.vmem %s1, 800
  %s114 = scalar_lea.vmem %s0, 1088
  %v115 = vld [vmem:[%s114] sm:$0xff]
  %s116 = scalar_lea.vmem %s1, 1568
  %s117 = scalar_lea.vmem %s0, 3648
  %v118 = vld [vmem:[%s117] sm:$0xff]
  %s119 = scalar_lea.vmem %s1, 288
  %s120 = scalar_lea.vmem %s0, 2112
  %v121 = vld [vmem:[%s120] sm:$0xff]
  %s122 = scalar_lea.vmem %s1, 1056
  %s123 = scalar_lea.vmem %s0, 576
  %v124 = vld [vmem:[%s123] sm:$0xff]
  %s125 = scalar_lea.vmem %s1, 1824
  %s126 = scalar_lea.vmem %s0, 3136
  %v127 = vld [vmem:[%s126] sm:$0xff]
  %s128 = scalar_lea.vmem %s1, 544
  %s129 = scalar_lea.vmem %s0, 1600
  %v130 = vld [vmem:[%s129] sm:$0xff]
  %s131 = scalar_lea.vmem %s1, 1312
  %s132 = scalar_lea.vmem %s0, 64
  %v133 = vld [vmem:[%s132] sm:$0xff]
  %s134 = scalar_lea.vmem %s1, 2080
  %s135 = scalar_lea.vmem %s0, 4176
  %v136 = vld [vmem:[%s135] sm:$0xff]
  %s137 = scalar_lea.vmem %s1, 40
  %s138 = scalar_lea.vmem %s0, 2640
  %v139 = vld [vmem:[%s138] sm:$0xff]
  %s140 = scalar_lea.vmem %s1, 808
  %s141 = scalar_lea.vmem %s0, 1104
  %v142 = vld [vmem:[%s141] sm:$0xff]
  %s143 = scalar_lea.vmem %s1, 1576
  %s144 = scalar_lea.vmem %s0, 3664
  %v145 = vld [vmem:[%s144] sm:$0xff]
  %s146 = scalar_lea.vmem %s1, 296
  %s147 = scalar_lea.vmem %s0, 2128
  %v148 = vld [vmem:[%s147] sm:$0xff]
  %s149 = scalar_lea.vmem %s1, 1064
  %s150 = scalar_lea.vmem %s0, 592
  %v151 = vld [vmem:[%s150] sm:$0xff]
  %s152 = scalar_lea.vmem %s1, 1832
  %s153 = scalar_lea.vmem %s0, 3152
  %v154 = vld [vmem:[%s153] sm:$0xff]
  %s155 = scalar_lea.vmem %s1, 552
  %s156 = scalar_lea.vmem %s0, 1616
  %v157 = vld [vmem:[%s156] sm:$0xff]
  %s158 = scalar_lea.vmem %s1, 1320
  %s159 = scalar_lea.vmem %s0, 80
  %v160 = vld [vmem:[%s159] sm:$0xff]
  %s161 = scalar_lea.vmem %s1, 2088
  %s162 = scalar_lea.vmem %s0, 4192
  %v163 = vld [vmem:[%s162] sm:$0xff]
  %s164 = scalar_lea.vmem %s1, 48
  %s165 = scalar_lea.vmem %s0, 2656
  %v166 = vld [vmem:[%s165] sm:$0xff]
  %s167 = scalar_lea.vmem %s1, 816
  %s168 = scalar_lea.vmem %s0, 1120
  %v169 = vld [vmem:[%s168] sm:$0xff]
  %s170 = scalar_lea.vmem %s1, 1584
  %s171 = scalar_lea.vmem %s0, 3680
  %v172 = vld [vmem:[%s171] sm:$0xff]
  %s173 = scalar_lea.vmem %s1, 304
  %s174 = scalar_lea.vmem %s0, 2144
  %v175 = vld [vmem:[%s174] sm:$0xff]
  %s176 = scalar_lea.vmem %s1, 1072
  %s177 = scalar_lea.vmem %s0, 608
  %v178 = vld [vmem:[%s177] sm:$0xff]
  %s179 = scalar_lea.vmem %s1, 1840
  %s180 = scalar_lea.vmem %s0, 3168
  %v181 = vld [vmem:[%s180] sm:$0xff]
  %s182 = scalar_lea.vmem %s1, 560
  %s183 = scalar_lea.vmem %s0, 1632
  %v184 = vld [vmem:[%s183] sm:$0xff]
  %s185 = scalar_lea.vmem %s1, 1328
  %s186 = scalar_lea.vmem %s0, 96
  %v187 = vld [vmem:[%s186] sm:$0xff]
  %s188 = scalar_lea.vmem %s1, 2096
  %s189 = scalar_lea.vmem %s0, 4208
  %v190 = vld [vmem:[%s189] sm:$0xff]
  %s191 = scalar_lea.vmem %s1, 56
  %s192 = scalar_lea.vmem %s0, 2672
  %v193 = vld [vmem:[%s192] sm:$0xff]
  %s194 = scalar_lea.vmem %s1, 824
  %s195 = scalar_lea.vmem %s0, 1136
  %v196 = vld [vmem:[%s195] sm:$0xff]
  %s197 = scalar_lea.vmem %s1, 1592
  %s198 = scalar_lea.vmem %s0, 3696
  %v199 = vld [vmem:[%s198] sm:$0xff]
  %s200 = scalar_lea.vmem %s1, 312
  %s201 = scalar_lea.vmem %s0, 2160
  %v202 = vld [vmem:[%s201] sm:$0xff]
  %s203 = scalar_lea.vmem %s1, 1080
  %s204 = scalar_lea.vmem %s0, 624
  %v205 = vld [vmem:[%s204] sm:$0xff]
  %s206 = scalar_lea.vmem %s1, 1848
  %s207 = scalar_lea.vmem %s0, 3184
  %v208 = vld [vmem:[%s207] sm:$0xff]
  %s209 = scalar_lea.vmem %s1, 568
  %s210 = scalar_lea.vmem %s0, 1648
  %v211 = vld [vmem:[%s210] sm:$0xff]
  %s212 = scalar_lea.vmem %s1, 1336
  %s213 = scalar_lea.vmem %s0, 112
  %v214 = vld [vmem:[%s213] sm:$0xff]
  %s215 = scalar_lea.vmem %s1, 2104
  %s216 = scalar_lea.vmem %s0, 4224
  %v217 = vld [vmem:[%s216] sm:$0xff]
  %s218 = scalar_lea.vmem %s1, 64
  %s219 = scalar_lea.vmem %s0, 2688
  %v220 = vld [vmem:[%s219] sm:$0xff]
  %s221 = scalar_lea.vmem %s1, 832
  %s222 = scalar_lea.vmem %s0, 1152
  %v223 = vld [vmem:[%s222] sm:$0xff]
  %s224 = scalar_lea.vmem %s1, 1600
  %s225 = scalar_lea.vmem %s0, 3712
  %v226 = vld [vmem:[%s225] sm:$0xff]
  %s227 = scalar_lea.vmem %s1, 320
  %s228 = scalar_lea.vmem %s0, 2176
  %v229 = vld [vmem:[%s228] sm:$0xff]
  %s230 = scalar_lea.vmem %s1, 1088
  %s231 = scalar_lea.vmem %s0, 640
  %v232 = vld [vmem:[%s231] sm:$0xff]
  %s233 = scalar_lea.vmem %s1, 1856
  %s234 = scalar_lea.vmem %s0, 3200
  %v235 = vld [vmem:[%s234] sm:$0xff]
  %s236 = scalar_lea.vmem %s1, 576
  %s237 = scalar_lea.vmem %s0, 1664
  %v238 = vld [vmem:[%s237] sm:$0xff]
  %s239 = scalar_lea.vmem %s1, 1344
  %s240 = scalar_lea.vmem %s0, 128
  %v241 = vld [vmem:[%s240] sm:$0xff]
  %s242 = scalar_lea.vmem %s1, 2112
  %s243 = scalar_lea.vmem %s0, 4240
  %v244 = vld [vmem:[%s243] sm:$0xff]
  %s245 = scalar_lea.vmem %s1, 72
  %s246 = scalar_lea.vmem %s0, 2704
  %v247 = vld [vmem:[%s246] sm:$0xff]
  %s248 = scalar_lea.vmem %s1, 840
  %s249 = scalar_lea.vmem %s0, 1168
  %v250 = vld [vmem:[%s249] sm:$0xff]
  %s251 = scalar_lea.vmem %s1, 1608
  %s252 = scalar_lea.vmem %s0, 3728
  %v253 = vld [vmem:[%s252] sm:$0xff]
  %s254 = scalar_lea.vmem %s1, 328
  %s255 = scalar_lea.vmem %s0, 2192
  %v256 = vld [vmem:[%s255] sm:$0xff]
  %s257 = scalar_lea.vmem %s1, 1096
  %s258 = scalar_lea.vmem %s0, 656
  %v259 = vld [vmem:[%s258] sm:$0xff]
  %s260 = scalar_lea.vmem %s1, 1864
  %s261 = scalar_lea.vmem %s0, 3216
  %v262 = vld [vmem:[%s261] sm:$0xff]
  %s263 = scalar_lea.vmem %s1, 584
  %s264 = scalar_lea.vmem %s0, 1680
  %v265 = vld [vmem:[%s264] sm:$0xff]
  %s266 = scalar_lea.vmem %s1, 1352
  %s267 = scalar_lea.vmem %s0, 144
  %v268 = vld [vmem:[%s267] sm:$0xff]
  %s269 = scalar_lea.vmem %s1, 2120
  %s270 = scalar_lea.vmem %s0, 4256
  %v271 = vld [vmem:[%s270] sm:$0xff]
  %s272 = scalar_lea.vmem %s1, 80
  %s273 = scalar_lea.vmem %s0, 2720
  %v274 = vld [vmem:[%s273] sm:$0xff]
  %s275 = scalar_lea.vmem %s1, 848
  %s276 = scalar_lea.vmem %s0, 1184
  %v277 = vld [vmem:[%s276] sm:$0xff]
  %s278 = scalar_lea.vmem %s1, 1616
  %s279 = scalar_lea.vmem %s0, 3744
  %v280 = vld [vmem:[%s279] sm:$0xff]
  %s281 = scalar_lea.vmem %s1, 336
  %s282 = scalar_lea.vmem %s0, 2208
  %v283 = vld [vmem:[%s282] sm:$0xff]
  %s284 = scalar_lea.vmem %s1, 1104
  %s285 = scalar_lea.vmem %s0, 672
  %v286 = vld [vmem:[%s285] sm:$0xff]
  %s287 = scalar_lea.vmem %s1, 1872
  %s288 = scalar_lea.vmem %s0, 3232
  %v289 = vld [vmem:[%s288] sm:$0xff]
  %s290 = scalar_lea.vmem %s1, 592
  %s291 = scalar_lea.vmem %s0, 1696
  %v292 = vld [vmem:[%s291] sm:$0xff]
  %s293 = scalar_lea.vmem %s1, 1360
  %s294 = scalar_lea.vmem %s0, 160
  %v295 = vld [vmem:[%s294] sm:$0xff]
  %s296 = scalar_lea.vmem %s1, 2128
  %s297 = scalar_lea.vmem %s0, 4272
  %v298 = vld [vmem:[%s297] sm:$0xff]
  %s299 = scalar_lea.vmem %s1, 88
  %s300 = scalar_lea.vmem %s0, 2736
  %v301 = vld [vmem:[%s300] sm:$0xff]
  %s302 = scalar_lea.vmem %s1, 856
  %s303 = scalar_lea.vmem %s0, 1200
  %v304 = vld [vmem:[%s303] sm:$0xff]
  %s305 = scalar_lea.vmem %s1, 1624
  %s306 = scalar_lea.vmem %s0, 3760
  %v307 = vld [vmem:[%s306] sm:$0xff]
  %s308 = scalar_lea.vmem %s1, 344
  %s309 = scalar_lea.vmem %s0, 2224
  %v310 = vld [vmem:[%s309] sm:$0xff]
  %s311 = scalar_lea.vmem %s1, 1112
  %s312 = scalar_lea.vmem %s0, 688
  %v313 = vld [vmem:[%s312] sm:$0xff]
  %s314 = scalar_lea.vmem %s1, 1880
  %s315 = scalar_lea.vmem %s0, 3248
  %v316 = vld [vmem:[%s315] sm:$0xff]
  %s317 = scalar_lea.vmem %s1, 600
  %s318 = scalar_lea.vmem %s0, 1712
  %v319 = vld [vmem:[%s318] sm:$0xff]
  %s320 = scalar_lea.vmem %s1, 1368
  %s321 = scalar_lea.vmem %s0, 176
  %v322 = vld [vmem:[%s321] sm:$0xff]
  %s323 = scalar_lea.vmem %s1, 2136
  %s324 = scalar_lea.vmem %s0, 4288
  %v325 = vld [vmem:[%s324] sm:$0xff]
  %s326 = scalar_lea.vmem %s1, 96
  %s327 = scalar_lea.vmem %s0, 2752
  %v328 = vld [vmem:[%s327] sm:$0xff]
  %s329 = scalar_lea.vmem %s1, 864
  %s330 = scalar_lea.vmem %s0, 1216
  %v331 = vld [vmem:[%s330] sm:$0xff]
  %s332 = scalar_lea.vmem %s1, 1632
  %s333 = scalar_lea.vmem %s0, 3776
  %v334 = vld [vmem:[%s333] sm:$0xff]
  %s335 = scalar_lea.vmem %s1, 352
  %s336 = scalar_lea.vmem %s0, 2240
  %v337 = vld [vmem:[%s336] sm:$0xff]
  %s338 = scalar_lea.vmem %s1, 1120
  %s339 = scalar_lea.vmem %s0, 704
  %v340 = vld [vmem:[%s339] sm:$0xff]
  %s341 = scalar_lea.vmem %s1, 1888
  %s342 = scalar_lea.vmem %s0, 3264
  %v343 = vld [vmem:[%s342] sm:$0xff]
  %s344 = scalar_lea.vmem %s1, 608
  %s345 = scalar_lea.vmem %s0, 1728
  %v346 = vld [vmem:[%s345] sm:$0xff]
  %s347 = scalar_lea.vmem %s1, 1376
  %s348 = scalar_lea.vmem %s0, 192
  %v349 = vld [vmem:[%s348] sm:$0xff]
  %s350 = scalar_lea.vmem %s1, 2144
  %s351 = scalar_lea.vmem %s0, 4304
  %v352 = vld [vmem:[%s351] sm:$0xff]
  %s353 = scalar_lea.vmem %s1, 104
  %s354 = scalar_lea.vmem %s0, 2768
  %v355 = vld [vmem:[%s354] sm:$0xff]
  %s356 = scalar_lea.vmem %s1, 872
  %s357 = scalar_lea.vmem %s0, 1232
  %v358 = vld [vmem:[%s357] sm:$0xff]
  %s359 = scalar_lea.vmem %s1, 1640
  %s360 = scalar_lea.vmem %s0, 3792
  %v361 = vld [vmem:[%s360] sm:$0xff]
  %s362 = scalar_lea.vmem %s1, 360
  %s363 = scalar_lea.vmem %s0, 2256
  %v364 = vld [vmem:[%s363] sm:$0xff]
  %s365 = scalar_lea.vmem %s1, 1128
  %s366 = scalar_lea.vmem %s0, 720
  %v367 = vld [vmem:[%s366] sm:$0xff]
  %s368 = scalar_lea.vmem %s1, 1896
  %s369 = scalar_lea.vmem %s0, 3280
  %v370 = vld [vmem:[%s369] sm:$0xff]
  %s371 = scalar_lea.vmem %s1, 616
  %s372 = scalar_lea.vmem %s0, 1744
  %v373 = vld [vmem:[%s372] sm:$0xff]
  %s374 = scalar_lea.vmem %s1, 1384
  %s375 = scalar_lea.vmem %s0, 208
  %v376 = vld [vmem:[%s375] sm:$0xff]
  %s377 = scalar_lea.vmem %s1, 2152
  %s378 = scalar_lea.vmem %s0, 4320
  %v379 = vld [vmem:[%s378] sm:$0xff]
  %s380 = scalar_lea.vmem %s1, 112
  %s381 = scalar_lea.vmem %s0, 2784
  %v382 = vld [vmem:[%s381] sm:$0xff]
  %s383 = scalar_lea.vmem %s1, 880
  %s384 = scalar_lea.vmem %s0, 1248
  %v385 = vld [vmem:[%s384] sm:$0xff]
  %s386 = scalar_lea.vmem %s1, 1648
  %s387 = scalar_lea.vmem %s0, 3808
  %v388 = vld [vmem:[%s387] sm:$0xff]
  %s389 = scalar_lea.vmem %s1, 368
  %s390 = scalar_lea.vmem %s0, 2272
  %v391 = vld [vmem:[%s390] sm:$0xff]
  %s392 = scalar_lea.vmem %s1, 1136
  %s393 = scalar_lea.vmem %s0, 736
  %v394 = vld [vmem:[%s393] sm:$0xff]
  %s395 = scalar_lea.vmem %s1, 1904
  %s396 = scalar_lea.vmem %s0, 3296
  %v397 = vld [vmem:[%s396] sm:$0xff]
  %s398 = scalar_lea.vmem %s1, 624
  %s399 = scalar_lea.vmem %s0, 1760
  %v400 = vld [vmem:[%s399] sm:$0xff]
  %s401 = scalar_lea.vmem %s1, 1392
  %s402 = scalar_lea.vmem %s0, 224
  %v403 = vld [vmem:[%s402] sm:$0xff]
  %s404 = scalar_lea.vmem %s1, 2160
  %s405 = scalar_lea.vmem %s0, 4336
  %v406 = vld [vmem:[%s405] sm:$0xff]
  %s407 = scalar_lea.vmem %s1, 120
  %s408 = scalar_lea.vmem %s0, 2800
  %v409 = vld [vmem:[%s408] sm:$0xff]
  %s410 = scalar_lea.vmem %s1, 888
  %s411 = scalar_lea.vmem %s0, 1264
  %v412 = vld [vmem:[%s411] sm:$0xff]
  %s413 = scalar_lea.vmem %s1, 1656
  %s414 = scalar_lea.vmem %s0, 3824
  %v415 = vld [vmem:[%s414] sm:$0xff]
  %s416 = scalar_lea.vmem %s1, 376
  %s417 = scalar_lea.vmem %s0, 2288
  %v418 = vld [vmem:[%s417] sm:$0xff]
  %s419 = scalar_lea.vmem %s1, 1144
  %s420 = scalar_lea.vmem %s0, 752
  %v421 = vld [vmem:[%s420] sm:$0xff]
  %s422 = scalar_lea.vmem %s1, 1912
  %s423 = scalar_lea.vmem %s0, 3312
  %v424 = vld [vmem:[%s423] sm:$0xff]
  %s425 = scalar_lea.vmem %s1, 632
  %s426 = scalar_lea.vmem %s0, 1776
  %v427 = vld [vmem:[%s426] sm:$0xff]
  %s428 = scalar_lea.vmem %s1, 1400
  %s429 = scalar_lea.vmem %s0, 240
  %v430 = vld [vmem:[%s429] sm:$0xff]
  %s431 = scalar_lea.vmem %s1, 2168
  %s432 = scalar_lea.vmem %s0, 4352
  %v433 = vld [vmem:[%s432] sm:$0xff]
  %s434 = scalar_lea.vmem %s1, 128
  %s435 = scalar_lea.vmem %s0, 2816
  %v436 = vld [vmem:[%s435] sm:$0xff]
  %s437 = scalar_lea.vmem %s1, 896
  %s438 = scalar_lea.vmem %s0, 1280
  %v439 = vld [vmem:[%s438] sm:$0xff]
  %s440 = scalar_lea.vmem %s1, 1664
  %s441 = scalar_lea.vmem %s0, 3840
  %v442 = vld [vmem:[%s441] sm:$0xff]
  %s443 = scalar_lea.vmem %s1, 384
  %s444 = scalar_lea.vmem %s0, 2304
  %v445 = vld [vmem:[%s444] sm:$0xff]
  %s446 = scalar_lea.vmem %s1, 1152
  %s447 = scalar_lea.vmem %s0, 768
  %v448 = vld [vmem:[%s447] sm:$0xff]
  %s449 = scalar_lea.vmem %s1, 1920
  %s450 = scalar_lea.vmem %s0, 3328
  %v451 = vld [vmem:[%s450] sm:$0xff]
  %s452 = scalar_lea.vmem %s1, 640
  %s453 = scalar_lea.vmem %s0, 1792
  %v454 = vld [vmem:[%s453] sm:$0xff]
  %s455 = scalar_lea.vmem %s1, 1408
  %s456 = scalar_lea.vmem %s0, 256
  %v457 = vld [vmem:[%s456] sm:$0xff]
  %s458 = scalar_lea.vmem %s1, 2176
  %s459 = scalar_lea.vmem %s0, 4368
  %v460 = vld [vmem:[%s459] sm:$0xff]
  %s461 = scalar_lea.vmem %s1, 136
  %s462 = scalar_lea.vmem %s0, 2832
  %v463 = vld [vmem:[%s462] sm:$0xff]
  %s464 = scalar_lea.vmem %s1, 904
  %s465 = scalar_lea.vmem %s0, 1296
  %v466 = vld [vmem:[%s465] sm:$0xff]
  %s467 = scalar_lea.vmem %s1, 1672
  %s468 = scalar_lea.vmem %s0, 3856
  %v469 = vld [vmem:[%s468] sm:$0xff]
  %s470 = scalar_lea.vmem %s1, 392
  %s471 = scalar_lea.vmem %s0, 2320
  %v472 = vld [vmem:[%s471] sm:$0xff]
  %s473 = scalar_lea.vmem %s1, 1160
  %s474 = scalar_lea.vmem %s0, 784
  %v475 = vld [vmem:[%s474] sm:$0xff]
  %s476 = scalar_lea.vmem %s1, 1928
  %s477 = scalar_lea.vmem %s0, 3344
  %v478 = vld [vmem:[%s477] sm:$0xff]
  %s479 = scalar_lea.vmem %s1, 648
  %s480 = scalar_lea.vmem %s0, 1808
  %v481 = vld [vmem:[%s480] sm:$0xff]
  %s482 = scalar_lea.vmem %s1, 1416
  %s483 = scalar_lea.vmem %s0, 272
  %v484 = vld [vmem:[%s483] sm:$0xff]
  %s485 = scalar_lea.vmem %s1, 2184
  %s486 = scalar_lea.vmem %s0, 4384
  %v487 = vld [vmem:[%s486] sm:$0xff]
  %s488 = scalar_lea.vmem %s1, 144
  %s489 = scalar_lea.vmem %s0, 2848
  %v490 = vld [vmem:[%s489] sm:$0xff]
  %s491 = scalar_lea.vmem %s1, 912
  %s492 = scalar_lea.vmem %s0, 1312
  %v493 = vld [vmem:[%s492] sm:$0xff]
  %s494 = scalar_lea.vmem %s1, 1680
  %s495 = scalar_lea.vmem %s0, 3872
  %v496 = vld [vmem:[%s495] sm:$0xff]
  %s497 = scalar_lea.vmem %s1, 400
  %s498 = scalar_lea.vmem %s0, 2336
  %v499 = vld [vmem:[%s498] sm:$0xff]
  %s500 = scalar_lea.vmem %s1, 1168
  %s501 = scalar_lea.vmem %s0, 800
  %v502 = vld [vmem:[%s501] sm:$0xff]
  %s503 = scalar_lea.vmem %s1, 1936
  %s504 = scalar_lea.vmem %s0, 3360
  %v505 = vld [vmem:[%s504] sm:$0xff]
  %s506 = scalar_lea.vmem %s1, 656
  %s507 = scalar_lea.vmem %s0, 1824
  %v508 = vld [vmem:[%s507] sm:$0xff]
  %s509 = scalar_lea.vmem %s1, 1424
  %s510 = scalar_lea.vmem %s0, 288
  %v511 = vld [vmem:[%s510] sm:$0xff]
  %s512 = scalar_lea.vmem %s1, 2192
  %s513 = scalar_lea.vmem %s0, 4400
  %v514 = vld [vmem:[%s513] sm:$0xff]
  %s515 = scalar_lea.vmem %s1, 152
  %s516 = scalar_lea.vmem %s0, 2864
  %v517 = vld [vmem:[%s516] sm:$0xff]
  %s518 = scalar_lea.vmem %s1, 920
  %s519 = scalar_lea.vmem %s0, 1328
  %v520 = vld [vmem:[%s519] sm:$0xff]
  %s521 = scalar_lea.vmem %s1, 1688
  %s522 = scalar_lea.vmem %s0, 3888
  %v523 = vld [vmem:[%s522] sm:$0xff]
  %s524 = scalar_lea.vmem %s1, 408
  %s525 = scalar_lea.vmem %s0, 2352
  %v526 = vld [vmem:[%s525] sm:$0xff]
  %s527 = scalar_lea.vmem %s1, 1176
  %s528 = scalar_lea.vmem %s0, 816
  %v529 = vld [vmem:[%s528] sm:$0xff]
  %s530 = scalar_lea.vmem %s1, 1944
  %s531 = scalar_lea.vmem %s0, 3376
  %v532 = vld [vmem:[%s531] sm:$0xff]
  %s533 = scalar_lea.vmem %s1, 664
  %s534 = scalar_lea.vmem %s0, 1840
  %v535 = vld [vmem:[%s534] sm:$0xff]
  %s536 = scalar_lea.vmem %s1, 1432
  %s537 = scalar_lea.vmem %s0, 304
  %v538 = vld [vmem:[%s537] sm:$0xff]
  %s539 = scalar_lea.vmem %s1, 2200
  %s540 = scalar_lea.vmem %s0, 4416
  %v541 = vld [vmem:[%s540] sm:$0xff]
  %s542 = scalar_lea.vmem %s1, 160
  %s543 = scalar_lea.vmem %s0, 2880
  %v544 = vld [vmem:[%s543] sm:$0xff]
  %s545 = scalar_lea.vmem %s1, 928
  %s546 = scalar_lea.vmem %s0, 1344
  %v547 = vld [vmem:[%s546] sm:$0xff]
  %s548 = scalar_lea.vmem %s1, 1696
  %s549 = scalar_lea.vmem %s0, 3904
  %v550 = vld [vmem:[%s549] sm:$0xff]
  %s551 = scalar_lea.vmem %s1, 416
  %s552 = scalar_lea.vmem %s0, 2368
  %v553 = vld [vmem:[%s552] sm:$0xff]
  %s554 = scalar_lea.vmem %s1, 1184
  %s555 = scalar_lea.vmem %s0, 832
  %v556 = vld [vmem:[%s555] sm:$0xff]
  %s557 = scalar_lea.vmem %s1, 1952
  %s558 = scalar_lea.vmem %s0, 3392
  %v559 = vld [vmem:[%s558] sm:$0xff]
  %s560 = scalar_lea.vmem %s1, 672
  %s561 = scalar_lea.vmem %s0, 1856
  %v562 = vld [vmem:[%s561] sm:$0xff]
  %s563 = scalar_lea.vmem %s1, 1440
  %s564 = scalar_lea.vmem %s0, 320
  %v565 = vld [vmem:[%s564] sm:$0xff]
  %s566 = scalar_lea.vmem %s1, 2208
  %s567 = scalar_lea.vmem %s0, 4432
  %v568 = vld [vmem:[%s567] sm:$0xff]
  %s569 = scalar_lea.vmem %s1, 168
  %s570 = scalar_lea.vmem %s0, 2896
  %v571 = vld [vmem:[%s570] sm:$0xff]
  %s572 = scalar_lea.vmem %s1, 936
  %s573 = scalar_lea.vmem %s0, 1360
  %v574 = vld [vmem:[%s573] sm:$0xff]
  %s575 = scalar_lea.vmem %s1, 1704
  %s576 = scalar_lea.vmem %s0, 3920
  %v577 = vld [vmem:[%s576] sm:$0xff]
  %s578 = scalar_lea.vmem %s1, 424
  %s579 = scalar_lea.vmem %s0, 2384
  %v580 = vld [vmem:[%s579] sm:$0xff]
  %s581 = scalar_lea.vmem %s1, 1192
  %s582 = scalar_lea.vmem %s0, 848
  %v583 = vld [vmem:[%s582] sm:$0xff]
  %s584 = scalar_lea.vmem %s1, 1960
  %s585 = scalar_lea.vmem %s0, 3408
  %v586 = vld [vmem:[%s585] sm:$0xff]
  %s587 = scalar_lea.vmem %s1, 680
  %s588 = scalar_lea.vmem %s0, 1872
  %v589 = vld [vmem:[%s588] sm:$0xff]
  %s590 = scalar_lea.vmem %s1, 1448
  %s591 = scalar_lea.vmem %s0, 336
  %v592 = vld [vmem:[%s591] sm:$0xff]
  %s593 = scalar_lea.vmem %s1, 2216
  %s594 = scalar_lea.vmem %s0, 4448
  %v595 = vld [vmem:[%s594] sm:$0xff]
  %s596 = scalar_lea.vmem %s1, 176
  %s597 = scalar_lea.vmem %s0, 2912
  %v598 = vld [vmem:[%s597] sm:$0xff]
  %s599 = scalar_lea.vmem %s1, 944
  %s600 = scalar_lea.vmem %s0, 1376
  %v601 = vld [vmem:[%s600] sm:$0xff]
  %s602 = scalar_lea.vmem %s1, 1712
  %s603 = scalar_lea.vmem %s0, 3936
  %v604 = vld [vmem:[%s603] sm:$0xff]
  %s605 = scalar_lea.vmem %s1, 432
  %s606 = scalar_lea.vmem %s0, 2400
  %v607 = vld [vmem:[%s606] sm:$0xff]
  %s608 = scalar_lea.vmem %s1, 1200
  %s609 = scalar_lea.vmem %s0, 864
  %v610 = vld [vmem:[%s609] sm:$0xff]
  %s611 = scalar_lea.vmem %s1, 1968
  %s612 = scalar_lea.vmem %s0, 3424
  %v613 = vld [vmem:[%s612] sm:$0xff]
  %s614 = scalar_lea.vmem %s1, 688
  %s615 = scalar_lea.vmem %s0, 1888
  %v616 = vld [vmem:[%s615] sm:$0xff]
  %s617 = scalar_lea.vmem %s1, 1456
  %s618 = scalar_lea.vmem %s0, 352
  %v619 = vld [vmem:[%s618] sm:$0xff]
  %s620 = scalar_lea.vmem %s1, 2224
  %s621 = scalar_lea.vmem %s0, 4464
  %v622 = vld [vmem:[%s621] sm:$0xff]
  %s623 = scalar_lea.vmem %s1, 184
  %s624 = scalar_lea.vmem %s0, 2928
  %v625 = vld [vmem:[%s624] sm:$0xff]
  %s626 = scalar_lea.vmem %s1, 952
  %s627 = scalar_lea.vmem %s0, 1392
  %v628 = vld [vmem:[%s627] sm:$0xff]
  %s629 = scalar_lea.vmem %s1, 1720
  %s630 = scalar_lea.vmem %s0, 3952
  %v631 = vld [vmem:[%s630] sm:$0xff]
  %s632 = scalar_lea.vmem %s1, 440
  %s633 = scalar_lea.vmem %s0, 2416
  %v634 = vld [vmem:[%s633] sm:$0xff]
  %s635 = scalar_lea.vmem %s1, 1208
  %s636 = scalar_lea.vmem %s0, 880
  %v637 = vld [vmem:[%s636] sm:$0xff]
  %s638 = scalar_lea.vmem %s1, 1976
  %s639 = scalar_lea.vmem %s0, 3440
  %v640 = vld [vmem:[%s639] sm:$0xff]
  %s641 = scalar_lea.vmem %s1, 696
  %s642 = scalar_lea.vmem %s0, 1904
  %v643 = vld [vmem:[%s642] sm:$0xff]
  %s644 = scalar_lea.vmem %s1, 1464
  %s645 = scalar_lea.vmem %s0, 368
  %v646 = vld [vmem:[%s645] sm:$0xff]
  %s647 = scalar_lea.vmem %s1, 2232
  %s648 = scalar_lea.vmem %s0, 4480
  %v649 = vld [vmem:[%s648] sm:$0xff]
  %s650 = scalar_lea.vmem %s1, 192
  %s651 = scalar_lea.vmem %s0, 2944
  %v652 = vld [vmem:[%s651] sm:$0xff]
  %s653 = scalar_lea.vmem %s1, 960
  %s654 = scalar_lea.vmem %s0, 1408
  %v655 = vld [vmem:[%s654] sm:$0xff]
  %s656 = scalar_lea.vmem %s1, 1728
  %s657 = scalar_lea.vmem %s0, 3968
  %v658 = vld [vmem:[%s657] sm:$0xff]
  %s659 = scalar_lea.vmem %s1, 448
  %s660 = scalar_lea.vmem %s0, 2432
  %v661 = vld [vmem:[%s660] sm:$0xff]
  %s662 = scalar_lea.vmem %s1, 1216
  %s663 = scalar_lea.vmem %s0, 896
  %v664 = vld [vmem:[%s663] sm:$0xff]
  %s665 = scalar_lea.vmem %s1, 1984
  %s666 = scalar_lea.vmem %s0, 3456
  %v667 = vld [vmem:[%s666] sm:$0xff]
  %s668 = scalar_lea.vmem %s1, 704
  %s669 = scalar_lea.vmem %s0, 1920
  %v670 = vld [vmem:[%s669] sm:$0xff]
  %s671 = scalar_lea.vmem %s1, 1472
  %s672 = scalar_lea.vmem %s0, 384
  %v673 = vld [vmem:[%s672] sm:$0xff]
  %s674 = scalar_lea.vmem %s1, 2240
  %s675 = scalar_lea.vmem %s0, 4496
  %v676 = vld [vmem:[%s675] sm:$0xff]
  %s677 = scalar_lea.vmem %s1, 200
  %s678 = scalar_lea.vmem %s0, 2960
  %v679 = vld [vmem:[%s678] sm:$0xff]
  %s680 = scalar_lea.vmem %s1, 968
  %s681 = scalar_lea.vmem %s0, 1424
  %v682 = vld [vmem:[%s681] sm:$0xff]
  %s683 = scalar_lea.vmem %s1, 1736
  %s684 = scalar_lea.vmem %s0, 3984
  %v685 = vld [vmem:[%s684] sm:$0xff]
  %s686 = scalar_lea.vmem %s1, 456
  %s687 = scalar_lea.vmem %s0, 2448
  %v688 = vld [vmem:[%s687] sm:$0xff]
  %s689 = scalar_lea.vmem %s1, 1224
  %s690 = scalar_lea.vmem %s0, 912
  %v691 = vld [vmem:[%s690] sm:$0xff]
  %s692 = scalar_lea.vmem %s1, 1992
  %s693 = scalar_lea.vmem %s0, 3472
  %v694 = vld [vmem:[%s693] sm:$0xff]
  %s695 = scalar_lea.vmem %s1, 712
  %s696 = scalar_lea.vmem %s0, 1936
  %v697 = vld [vmem:[%s696] sm:$0xff]
  %s698 = scalar_lea.vmem %s1, 1480
  %s699 = scalar_lea.vmem %s0, 400
  %v700 = vld [vmem:[%s699] sm:$0xff]
  %s701 = scalar_lea.vmem %s1, 2248
  %s702 = scalar_lea.vmem %s0, 4512
  %v703 = vld [vmem:[%s702] sm:$0xff]
  %s704 = scalar_lea.vmem %s1, 208
  %s705 = scalar_lea.vmem %s0, 2976
  %v706 = vld [vmem:[%s705] sm:$0xff]
  %s707 = scalar_lea.vmem %s1, 976
  %s708 = scalar_lea.vmem %s0, 1440
  %v709 = vld [vmem:[%s708] sm:$0xff]
  %s710 = scalar_lea.vmem %s1, 1744
  %s711 = scalar_lea.vmem %s0, 4000
  %v712 = vld [vmem:[%s711] sm:$0xff]
  %s713 = scalar_lea.vmem %s1, 464
  %s714 = scalar_lea.vmem %s0, 2464
  %v715 = vld [vmem:[%s714] sm:$0xff]
  %s716 = scalar_lea.vmem %s1, 1232
  %s717 = scalar_lea.vmem %s0, 928
  %v718 = vld [vmem:[%s717] sm:$0xff]
  %s719 = scalar_lea.vmem %s1, 2000
  %s720 = scalar_lea.vmem %s0, 3488
  %v721 = vld [vmem:[%s720] sm:$0xff]
  %s722 = scalar_lea.vmem %s1, 720
  %s723 = scalar_lea.vmem %s0, 1952
  %v724 = vld [vmem:[%s723] sm:$0xff]
  %s725 = scalar_lea.vmem %s1, 1488
  %s726 = scalar_lea.vmem %s0, 416
  %v727 = vld [vmem:[%s726] sm:$0xff]
  %s728 = scalar_lea.vmem %s1, 2256
  %s729 = scalar_lea.vmem %s0, 4528
  %v730 = vld [vmem:[%s729] sm:$0xff]
  %s731 = scalar_lea.vmem %s1, 216
  %s732 = scalar_lea.vmem %s0, 2992
  %v733 = vld [vmem:[%s732] sm:$0xff]
  %s734 = scalar_lea.vmem %s1, 984
  %s735 = scalar_lea.vmem %s0, 1456
  %v736 = vld [vmem:[%s735] sm:$0xff]
  %s737 = scalar_lea.vmem %s1, 1752
  %s738 = scalar_lea.vmem %s0, 4016
  %v739 = vld [vmem:[%s738] sm:$0xff]
  %s740 = scalar_lea.vmem %s1, 472
  %s741 = scalar_lea.vmem %s0, 2480
  %v742 = vld [vmem:[%s741] sm:$0xff]
  %s743 = scalar_lea.vmem %s1, 1240
  %s744 = scalar_lea.vmem %s0, 944
  %v745 = vld [vmem:[%s744] sm:$0xff]
  %s746 = scalar_lea.vmem %s1, 2008
  %s747 = scalar_lea.vmem %s0, 3504
  %v748 = vld [vmem:[%s747] sm:$0xff]
  %s749 = scalar_lea.vmem %s1, 728
  %s750 = scalar_lea.vmem %s0, 1968
  %v751 = vld [vmem:[%s750] sm:$0xff]
  %s752 = scalar_lea.vmem %s1, 1496
  %s753 = scalar_lea.vmem %s0, 432
  %v754 = vld [vmem:[%s753] sm:$0xff]
  %s755 = scalar_lea.vmem %s1, 2264
  %s756 = scalar_lea.vmem %s0, 4544
  %v757 = vld [vmem:[%s756] sm:$0xff]
  %s758 = scalar_lea.vmem %s1, 224
  %s759 = scalar_lea.vmem %s0, 3008
  %v760 = vld [vmem:[%s759] sm:$0xff]
  %s761 = scalar_lea.vmem %s1, 992
  %s762 = scalar_lea.vmem %s0, 1472
  %v763 = vld [vmem:[%s762] sm:$0xff]
  %s764 = scalar_lea.vmem %s1, 1760
  %s765 = scalar_lea.vmem %s0, 4032
  %v766 = vld [vmem:[%s765] sm:$0xff]
  %s767 = scalar_lea.vmem %s1, 480
  %s768 = scalar_lea.vmem %s0, 2496
  %v769 = vld [vmem:[%s768] sm:$0xff]
  %s770 = scalar_lea.vmem %s1, 1248
  %s771 = scalar_lea.vmem %s0, 960
  %v772 = vld [vmem:[%s771] sm:$0xff]
  %s773 = scalar_lea.vmem %s1, 2016
  %s774 = scalar_lea.vmem %s0, 3520
  %v775 = vld [vmem:[%s774] sm:$0xff]
  %s776 = scalar_lea.vmem %s1, 736
  %s777 = scalar_lea.vmem %s0, 1984
  %v778 = vld [vmem:[%s777] sm:$0xff]
  %s779 = scalar_lea.vmem %s1, 1504
  %s780 = scalar_lea.vmem %s0, 448
  %v781 = vld [vmem:[%s780] sm:$0xff]
  %s782 = scalar_lea.vmem %s1, 2272
  %s783 = scalar_lea.vmem %s0, 4560
  %v784 = vld [vmem:[%s783] sm:$0xff]
  %s785 = scalar_lea.vmem %s1, 232
  %s786 = scalar_lea.vmem %s0, 3024
  %v787 = vld [vmem:[%s786] sm:$0xff]
  %s788 = scalar_lea.vmem %s1, 1000
  %s789 = scalar_lea.vmem %s0, 1488
  %v790 = vld [vmem:[%s789] sm:$0xff]
  %s791 = scalar_lea.vmem %s1, 1768
  %s792 = scalar_lea.vmem %s0, 4048
  %v793 = vld [vmem:[%s792] sm:$0xff]
  %s794 = scalar_lea.vmem %s1, 488
  %s795 = scalar_lea.vmem %s0, 2512
  %v796 = vld [vmem:[%s795] sm:$0xff]
  %s797 = scalar_lea.vmem %s1, 1256
  %s798 = scalar_lea.vmem %s0, 976
  %v799 = vld [vmem:[%s798] sm:$0xff]
  %s800 = scalar_lea.vmem %s1, 2024
  %s801 = scalar_lea.vmem %s0, 3536
  %v802 = vld [vmem:[%s801] sm:$0xff]
  %s803 = scalar_lea.vmem %s1, 744
  %s804 = scalar_lea.vmem %s0, 2000
  %v805 = vld [vmem:[%s804] sm:$0xff]
  %s806 = scalar_lea.vmem %s1, 1512
  %s807 = scalar_lea.vmem %s0, 464
  %v808 = vld [vmem:[%s807] sm:$0xff]
  %s809 = scalar_lea.vmem %s1, 2280
  %s810 = scalar_lea.vmem %s0, 4576
  %v811 = vld [vmem:[%s810] sm:$0xff]
  %s812 = scalar_lea.vmem %s1, 240
  %s813 = scalar_lea.vmem %s0, 3040
  %v814 = vld [vmem:[%s813] sm:$0xff]
  %s815 = scalar_lea.vmem %s1, 1008
  %s816 = scalar_lea.vmem %s0, 1504
  %v817 = vld [vmem:[%s816] sm:$0xff]
  %s818 = scalar_lea.vmem %s1, 1776
  %s819 = scalar_lea.vmem %s0, 4064
  %v820 = vld [vmem:[%s819] sm:$0xff]
  %s821 = scalar_lea.vmem %s1, 496
  %s822 = scalar_lea.vmem %s0, 2528
  %v823 = vld [vmem:[%s822] sm:$0xff]
  %s824 = scalar_lea.vmem %s1, 1264
  %s825 = scalar_lea.vmem %s0, 992
  %v826 = vld [vmem:[%s825] sm:$0xff]
  %s827 = scalar_lea.vmem %s1, 2032
  %s828 = scalar_lea.vmem %s0, 3552
  %v829 = vld [vmem:[%s828] sm:$0xff]
  %s830 = scalar_lea.vmem %s1, 752
  %s831 = scalar_lea.vmem %s0, 2016
  %v832 = vld [vmem:[%s831] sm:$0xff]
  %s833 = scalar_lea.vmem %s1, 1520
  %s834 = scalar_lea.vmem %s0, 480
  %v835 = vld [vmem:[%s834] sm:$0xff]
  %s836 = scalar_lea.vmem %s1, 2288
  %s837 = scalar_lea.vmem %s0, 4592
  %v838 = vld [vmem:[%s837] sm:$0xff]
  %s839 = scalar_lea.vmem %s1, 248
  %s840 = scalar_lea.vmem %s0, 3056
  %v841 = vld [vmem:[%s840] sm:$0xff]
  %s842 = scalar_lea.vmem %s1, 1016
  %s843 = scalar_lea.vmem %s0, 1520
  %v844 = vld [vmem:[%s843] sm:$0xff]
  %s845 = scalar_lea.vmem %s1, 1784
  %s846 = scalar_lea.vmem %s0, 4080
  %v847 = vld [vmem:[%s846] sm:$0xff]
  %s848 = scalar_lea.vmem %s1, 504
  %s849 = scalar_lea.vmem %s0, 2544
  %v850 = vld [vmem:[%s849] sm:$0xff]
  %s851 = scalar_lea.vmem %s1, 1272
  %s852 = scalar_lea.vmem %s0, 1008
  %v853 = vld [vmem:[%s852] sm:$0xff]
  %s854 = scalar_lea.vmem %s1, 2040
  %s855 = scalar_lea.vmem %s0, 3568
  %v856 = vld [vmem:[%s855] sm:$0xff]
  %s857 = scalar_lea.vmem %s1, 760
  %s858 = scalar_lea.vmem %s0, 2032
  %v859 = vld [vmem:[%s858] sm:$0xff]
  %s860 = scalar_lea.vmem %s1, 1528
  %s861 = scalar_lea.vmem %s0, 496
  %v862 = vld [vmem:[%s861] sm:$0xff]
  %s863 = scalar_lea.vmem %s1, 2296
  %s864 = scalar_lea.vmem %s0, 4104
  %v865 = vld [vmem:[%s864] sm:$0xff]
  %s866 = scalar_lea.vmem %s1, 4
  %s867 = scalar_lea.vmem %s866, 4294967292
  %v868 = vpack.c.bf16 %v865, %v3
  %869 = vst [vmem:[%s867] sm:$0xff] %v868
  %s870 = scalar_lea.vmem %s0, 2568
  %v871 = vld [vmem:[%s870] sm:$0xff]
  %s872 = scalar_lea.vmem %s1, 772
  %s873 = scalar_lea.vmem %s872, 4294967292
  %v874 = vpack.c.bf16 %v871, %v5
  %875 = vst [vmem:[%s873] sm:$0xff] %v874
  %s876 = scalar_lea.vmem %s0, 1032
  %v877 = vld [vmem:[%s876] sm:$0xff]
  %s878 = scalar_lea.vmem %s1, 1540
  %s879 = scalar_lea.vmem %s878, 4294967292
  %v880 = vpack.c.bf16 %v877, %v8
  %881 = vst [vmem:[%s879] sm:$0xff] %v880
  %s882 = scalar_lea.vmem %s0, 3592
  %v883 = vld [vmem:[%s882] sm:$0xff]
  %s884 = scalar_lea.vmem %s1, 260
  %s885 = scalar_lea.vmem %s884, 4294967292
  %v886 = vpack.c.bf16 %v883, %v11
  %887 = vst [vmem:[%s885] sm:$0xff] %v886
  %s888 = scalar_lea.vmem %s0, 2056
  %v889 = vld [vmem:[%s888] sm:$0xff]
  %s890 = scalar_lea.vmem %s1, 1028
  %s891 = scalar_lea.vmem %s890, 4294967292
  %v892 = vpack.c.bf16 %v889, %v14
  %893 = vst [vmem:[%s891] sm:$0xff] %v892
  %s894 = scalar_lea.vmem %s0, 520
  %v895 = vld [vmem:[%s894] sm:$0xff]
  %s896 = scalar_lea.vmem %s1, 1796
  %s897 = scalar_lea.vmem %s896, 4294967292
  %v898 = vpack.c.bf16 %v895, %v17
  %899 = vst [vmem:[%s897] sm:$0xff] %v898
  %s900 = scalar_lea.vmem %s0, 3080
  %v901 = vld [vmem:[%s900] sm:$0xff]
  %s902 = scalar_lea.vmem %s1, 516
  %s903 = scalar_lea.vmem %s902, 4294967292
  %v904 = vpack.c.bf16 %v901, %v20
  %905 = vst [vmem:[%s903] sm:$0xff] %v904
  %s906 = scalar_lea.vmem %s0, 1544
  %v907 = vld [vmem:[%s906] sm:$0xff]
  %s908 = scalar_lea.vmem %s1, 1284
  %s909 = scalar_lea.vmem %s908, 4294967292
  %v910 = vpack.c.bf16 %v907, %v23
  %911 = vst [vmem:[%s909] sm:$0xff] %v910
  %s912 = scalar_lea.vmem %s0, 8
  %v913 = vld [vmem:[%s912] sm:$0xff]
  %s914 = scalar_lea.vmem %s1, 2052
  %s915 = scalar_lea.vmem %s914, 4294967292
  %v916 = vpack.c.bf16 %v913, %v25
  %917 = vst [vmem:[%s915] sm:$0xff] %v916
  %s918 = scalar_lea.vmem %s0, 4120
  %v919 = vld [vmem:[%s918] sm:$0xff]
  %s920 = scalar_lea.vmem %s1, 12
  %s921 = scalar_lea.vmem %s920, 4294967292
  %v922 = vpack.c.bf16 %v919, %v28
  %923 = vst [vmem:[%s921] sm:$0xff] %v922
  %s924 = scalar_lea.vmem %s0, 2584
  %v925 = vld [vmem:[%s924] sm:$0xff]
  %s926 = scalar_lea.vmem %s1, 780
  %s927 = scalar_lea.vmem %s926, 4294967292
  %v928 = vpack.c.bf16 %v925, %v31
  %929 = vst [vmem:[%s927] sm:$0xff] %v928
  %s930 = scalar_lea.vmem %s0, 1048
  %v931 = vld [vmem:[%s930] sm:$0xff]
  %s932 = scalar_lea.vmem %s1, 1548
  %s933 = scalar_lea.vmem %s932, 4294967292
  %v934 = vpack.c.bf16 %v931, %v34
  %935 = vst [vmem:[%s933] sm:$0xff] %v934
  %s936 = scalar_lea.vmem %s0, 3608
  %v937 = vld [vmem:[%s936] sm:$0xff]
  %s938 = scalar_lea.vmem %s1, 268
  %s939 = scalar_lea.vmem %s938, 4294967292
  %v940 = vpack.c.bf16 %v937, %v37
  %941 = vst [vmem:[%s939] sm:$0xff] %v940
  %s942 = scalar_lea.vmem %s0, 2072
  %v943 = vld [vmem:[%s942] sm:$0xff]
  %s944 = scalar_lea.vmem %s1, 1036
  %s945 = scalar_lea.vmem %s944, 4294967292
  %v946 = vpack.c.bf16 %v943, %v40
  %947 = vst [vmem:[%s945] sm:$0xff] %v946
  %s948 = scalar_lea.vmem %s0, 536
  %v949 = vld [vmem:[%s948] sm:$0xff]
  %s950 = scalar_lea.vmem %s1, 1804
  %s951 = scalar_lea.vmem %s950, 4294967292
  %v952 = vpack.c.bf16 %v949, %v43
  %953 = vst [vmem:[%s951] sm:$0xff] %v952
  %s954 = scalar_lea.vmem %s0, 3096
  %v955 = vld [vmem:[%s954] sm:$0xff]
  %s956 = scalar_lea.vmem %s1, 524
  %s957 = scalar_lea.vmem %s956, 4294967292
  %v958 = vpack.c.bf16 %v955, %v46
  %959 = vst [vmem:[%s957] sm:$0xff] %v958
  %s960 = scalar_lea.vmem %s0, 1560
  %v961 = vld [vmem:[%s960] sm:$0xff]
  %s962 = scalar_lea.vmem %s1, 1292
  %s963 = scalar_lea.vmem %s962, 4294967292
  %v964 = vpack.c.bf16 %v961, %v49
  %965 = vst [vmem:[%s963] sm:$0xff] %v964
  %s966 = scalar_lea.vmem %s0, 24
  %v967 = vld [vmem:[%s966] sm:$0xff]
  %s968 = scalar_lea.vmem %s1, 2060
  %s969 = scalar_lea.vmem %s968, 4294967292
  %v970 = vpack.c.bf16 %v967, %v52
  %971 = vst [vmem:[%s969] sm:$0xff] %v970
  %s972 = scalar_lea.vmem %s0, 4136
  %v973 = vld [vmem:[%s972] sm:$0xff]
  %s974 = scalar_lea.vmem %s1, 20
  %s975 = scalar_lea.vmem %s974, 4294967292
  %v976 = vpack.c.bf16 %v973, %v55
  %977 = vst [vmem:[%s975] sm:$0xff] %v976
  %s978 = scalar_lea.vmem %s0, 2600
  %v979 = vld [vmem:[%s978] sm:$0xff]
  %s980 = scalar_lea.vmem %s1, 788
  %s981 = scalar_lea.vmem %s980, 4294967292
  %v982 = vpack.c.bf16 %v979, %v58
  %983 = vst [vmem:[%s981] sm:$0xff] %v982
  %s984 = scalar_lea.vmem %s0, 1064
  %v985 = vld [vmem:[%s984] sm:$0xff]
  %s986 = scalar_lea.vmem %s1, 1556
  %s987 = scalar_lea.vmem %s986, 4294967292
  %v988 = vpack.c.bf16 %v985, %v61
  %989 = vst [vmem:[%s987] sm:$0xff] %v988
  %s990 = scalar_lea.vmem %s0, 3624
  %v991 = vld [vmem:[%s990] sm:$0xff]
  %s992 = scalar_lea.vmem %s1, 276
  %s993 = scalar_lea.vmem %s992, 4294967292
  %v994 = vpack.c.bf16 %v991, %v64
  %995 = vst [vmem:[%s993] sm:$0xff] %v994
  %s996 = scalar_lea.vmem %s0, 2088
  %v997 = vld [vmem:[%s996] sm:$0xff]
  %s998 = scalar_lea.vmem %s1, 1044
  %s999 = scalar_lea.vmem %s998, 4294967292
  %v1000 = vpack.c.bf16 %v997, %v67
  %1001 = vst [vmem:[%s999] sm:$0xff] %v1000
  %s1002 = scalar_lea.vmem %s0, 552
  %v1003 = vld [vmem:[%s1002] sm:$0xff]
  %s1004 = scalar_lea.vmem %s1, 1812
  %s1005 = scalar_lea.vmem %s1004, 4294967292
  %v1006 = vpack.c.bf16 %v1003, %v70
  %1007 = vst [vmem:[%s1005] sm:$0xff] %v1006
  %s1008 = scalar_lea.vmem %s0, 3112
  %v1009 = vld [vmem:[%s1008] sm:$0xff]
  %s1010 = scalar_lea.vmem %s1, 532
  %s1011 = scalar_lea.vmem %s1010, 4294967292
  %v1012 = vpack.c.bf16 %v1009, %v73
  %1013 = vst [vmem:[%s1011] sm:$0xff] %v1012
  %s1014 = scalar_lea.vmem %s0, 1576
  %v1015 = vld [vmem:[%s1014] sm:$0xff]
  %s1016 = scalar_lea.vmem %s1, 1300
  %s1017 = scalar_lea.vmem %s1016, 4294967292
  %v1018 = vpack.c.bf16 %v1015, %v76
  %1019 = vst [vmem:[%s1017] sm:$0xff] %v1018
  %s1020 = scalar_lea.vmem %s0, 40
  %v1021 = vld [vmem:[%s1020] sm:$0xff]
  %s1022 = scalar_lea.vmem %s1, 2068
  %s1023 = scalar_lea.vmem %s1022, 4294967292
  %v1024 = vpack.c.bf16 %v1021, %v79
  %1025 = vst [vmem:[%s1023] sm:$0xff] %v1024
  %s1026 = scalar_lea.vmem %s0, 4152
  %v1027 = vld [vmem:[%s1026] sm:$0xff]
  %s1028 = scalar_lea.vmem %s1, 28
  %s1029 = scalar_lea.vmem %s1028, 4294967292
  %v1030 = vpack.c.bf16 %v1027, %v82
  %1031 = vst [vmem:[%s1029] sm:$0xff] %v1030
  %s1032 = scalar_lea.vmem %s0, 2616
  %v1033 = vld [vmem:[%s1032] sm:$0xff]
  %s1034 = scalar_lea.vmem %s1, 796
  %s1035 = scalar_lea.vmem %s1034, 4294967292
  %v1036 = vpack.c.bf16 %v1033, %v85
  %1037 = vst [vmem:[%s1035] sm:$0xff] %v1036
  %s1038 = scalar_lea.vmem %s0, 1080
  %v1039 = vld [vmem:[%s1038] sm:$0xff]
  %s1040 = scalar_lea.vmem %s1, 1564
  %s1041 = scalar_lea.vmem %s1040, 4294967292
  %v1042 = vpack.c.bf16 %v1039, %v88
  %1043 = vst [vmem:[%s1041] sm:$0xff] %v1042
  %s1044 = scalar_lea.vmem %s0, 3640
  %v1045 = vld [vmem:[%s1044] sm:$0xff]
  %s1046 = scalar_lea.vmem %s1, 284
  %s1047 = scalar_lea.vmem %s1046, 4294967292
  %v1048 = vpack.c.bf16 %v1045, %v91
  %1049 = vst [vmem:[%s1047] sm:$0xff] %v1048
  %s1050 = scalar_lea.vmem %s0, 2104
  %v1051 = vld [vmem:[%s1050] sm:$0xff]
  %s1052 = scalar_lea.vmem %s1, 1052
  %s1053 = scalar_lea.vmem %s1052, 4294967292
  %v1054 = vpack.c.bf16 %v1051, %v94
  %1055 = vst [vmem:[%s1053] sm:$0xff] %v1054
  %s1056 = scalar_lea.vmem %s0, 568
  %v1057 = vld [vmem:[%s1056] sm:$0xff]
  %s1058 = scalar_lea.vmem %s1, 1820
  %s1059 = scalar_lea.vmem %s1058, 4294967292
  %v1060 = vpack.c.bf16 %v1057, %v97
  %1061 = vst [vmem:[%s1059] sm:$0xff] %v1060
  %s1062 = scalar_lea.vmem %s0, 3128
  %v1063 = vld [vmem:[%s1062] sm:$0xff]
  %s1064 = scalar_lea.vmem %s1, 540
  %s1065 = scalar_lea.vmem %s1064, 4294967292
  %v1066 = vpack.c.bf16 %v1063, %v100
  %1067 = vst [vmem:[%s1065] sm:$0xff] %v1066
  %s1068 = scalar_lea.vmem %s0, 1592
  %v1069 = vld [vmem:[%s1068] sm:$0xff]
  %s1070 = scalar_lea.vmem %s1, 1308
  %s1071 = scalar_lea.vmem %s1070, 4294967292
  %v1072 = vpack.c.bf16 %v1069, %v103
  %1073 = vst [vmem:[%s1071] sm:$0xff] %v1072
  %s1074 = scalar_lea.vmem %s0, 56
  %v1075 = vld [vmem:[%s1074] sm:$0xff]
  %s1076 = scalar_lea.vmem %s1, 2076
  %s1077 = scalar_lea.vmem %s1076, 4294967292
  %v1078 = vpack.c.bf16 %v1075, %v106
  %1079 = vst [vmem:[%s1077] sm:$0xff] %v1078
  %s1080 = scalar_lea.vmem %s0, 4168
  %v1081 = vld [vmem:[%s1080] sm:$0xff]
  %s1082 = scalar_lea.vmem %s1, 36
  %s1083 = scalar_lea.vmem %s1082, 4294967292
  %v1084 = vpack.c.bf16 %v1081, %v109
  %1085 = vst [vmem:[%s1083] sm:$0xff] %v1084
  %s1086 = scalar_lea.vmem %s0, 2632
  %v1087 = vld [vmem:[%s1086] sm:$0xff]
  %s1088 = scalar_lea.vmem %s1, 804
  %s1089 = scalar_lea.vmem %s1088, 4294967292
  %v1090 = vpack.c.bf16 %v1087, %v112
  %1091 = vst [vmem:[%s1089] sm:$0xff] %v1090
  %s1092 = scalar_lea.vmem %s0, 1096
  %v1093 = vld [vmem:[%s1092] sm:$0xff]
  %s1094 = scalar_lea.vmem %s1, 1572
  %s1095 = scalar_lea.vmem %s1094, 4294967292
  %v1096 = vpack.c.bf16 %v1093, %v115
  %1097 = vst [vmem:[%s1095] sm:$0xff] %v1096
  %s1098 = scalar_lea.vmem %s0, 3656
  %v1099 = vld [vmem:[%s1098] sm:$0xff]
  %s1100 = scalar_lea.vmem %s1, 292
  %s1101 = scalar_lea.vmem %s1100, 4294967292
  %v1102 = vpack.c.bf16 %v1099, %v118
  %1103 = vst [vmem:[%s1101] sm:$0xff] %v1102
  %s1104 = scalar_lea.vmem %s0, 2120
  %v1105 = vld [vmem:[%s1104] sm:$0xff]
  %s1106 = scalar_lea.vmem %s1, 1060
  %s1107 = scalar_lea.vmem %s1106, 4294967292
  %v1108 = vpack.c.bf16 %v1105, %v121
  %1109 = vst [vmem:[%s1107] sm:$0xff] %v1108
  %s1110 = scalar_lea.vmem %s0, 584
  %v1111 = vld [vmem:[%s1110] sm:$0xff]
  %s1112 = scalar_lea.vmem %s1, 1828
  %s1113 = scalar_lea.vmem %s1112, 4294967292
  %v1114 = vpack.c.bf16 %v1111, %v124
  %1115 = vst [vmem:[%s1113] sm:$0xff] %v1114
  %s1116 = scalar_lea.vmem %s0, 3144
  %v1117 = vld [vmem:[%s1116] sm:$0xff]
  %s1118 = scalar_lea.vmem %s1, 548
  %s1119 = scalar_lea.vmem %s1118, 4294967292
  %v1120 = vpack.c.bf16 %v1117, %v127
  %1121 = vst [vmem:[%s1119] sm:$0xff] %v1120
  %s1122 = scalar_lea.vmem %s0, 1608
  %v1123 = vld [vmem:[%s1122] sm:$0xff]
  %s1124 = scalar_lea.vmem %s1, 1316
  %s1125 = scalar_lea.vmem %s1124, 4294967292
  %v1126 = vpack.c.bf16 %v1123, %v130
  %1127 = vst [vmem:[%s1125] sm:$0xff] %v1126
  %s1128 = scalar_lea.vmem %s0, 72
  %v1129 = vld [vmem:[%s1128] sm:$0xff]
  %s1130 = scalar_lea.vmem %s1, 2084
  %s1131 = scalar_lea.vmem %s1130, 4294967292
  %v1132 = vpack.c.bf16 %v1129, %v133
  %1133 = vst [vmem:[%s1131] sm:$0xff] %v1132
  %s1134 = scalar_lea.vmem %s0, 4184
  %v1135 = vld [vmem:[%s1134] sm:$0xff]
  %s1136 = scalar_lea.vmem %s1, 44
  %s1137 = scalar_lea.vmem %s1136, 4294967292
  %v1138 = vpack.c.bf16 %v1135, %v136
  %1139 = vst [vmem:[%s1137] sm:$0xff] %v1138
  %s1140 = scalar_lea.vmem %s0, 2648
  %v1141 = vld [vmem:[%s1140] sm:$0xff]
  %s1142 = scalar_lea.vmem %s1, 812
  %s1143 = scalar_lea.vmem %s1142, 4294967292
  %v1144 = vpack.c.bf16 %v1141, %v139
  %1145 = vst [vmem:[%s1143] sm:$0xff] %v1144
  %s1146 = scalar_lea.vmem %s0, 1112
  %v1147 = vld [vmem:[%s1146] sm:$0xff]
  %s1148 = scalar_lea.vmem %s1, 1580
  %s1149 = scalar_lea.vmem %s1148, 4294967292
  %v1150 = vpack.c.bf16 %v1147, %v142
  %1151 = vst [vmem:[%s1149] sm:$0xff] %v1150
  %s1152 = scalar_lea.vmem %s0, 3672
  %v1153 = vld [vmem:[%s1152] sm:$0xff]
  %s1154 = scalar_lea.vmem %s1, 300
  %s1155 = scalar_lea.vmem %s1154, 4294967292
  %v1156 = vpack.c.bf16 %v1153, %v145
  %1157 = vst [vmem:[%s1155] sm:$0xff] %v1156
  %s1158 = scalar_lea.vmem %s0, 2136
  %v1159 = vld [vmem:[%s1158] sm:$0xff]
  %s1160 = scalar_lea.vmem %s1, 1068
  %s1161 = scalar_lea.vmem %s1160, 4294967292
  %v1162 = vpack.c.bf16 %v1159, %v148
  %1163 = vst [vmem:[%s1161] sm:$0xff] %v1162
  %s1164 = scalar_lea.vmem %s0, 600
  %v1165 = vld [vmem:[%s1164] sm:$0xff]
  %s1166 = scalar_lea.vmem %s1, 1836
  %s1167 = scalar_lea.vmem %s1166, 4294967292
  %v1168 = vpack.c.bf16 %v1165, %v151
  %1169 = vst [vmem:[%s1167] sm:$0xff] %v1168
  %s1170 = scalar_lea.vmem %s0, 3160
  %v1171 = vld [vmem:[%s1170] sm:$0xff]
  %s1172 = scalar_lea.vmem %s1, 556
  %s1173 = scalar_lea.vmem %s1172, 4294967292
  %v1174 = vpack.c.bf16 %v1171, %v154
  %1175 = vst [vmem:[%s1173] sm:$0xff] %v1174
  %s1176 = scalar_lea.vmem %s0, 1624
  %v1177 = vld [vmem:[%s1176] sm:$0xff]
  %s1178 = scalar_lea.vmem %s1, 1324
  %s1179 = scalar_lea.vmem %s1178, 4294967292
  %v1180 = vpack.c.bf16 %v1177, %v157
  %1181 = vst [vmem:[%s1179] sm:$0xff] %v1180
  %s1182 = scalar_lea.vmem %s0, 88
  %v1183 = vld [vmem:[%s1182] sm:$0xff]
  %s1184 = scalar_lea.vmem %s1, 2092
  %s1185 = scalar_lea.vmem %s1184, 4294967292
  %v1186 = vpack.c.bf16 %v1183, %v160
  %1187 = vst [vmem:[%s1185] sm:$0xff] %v1186
  %s1188 = scalar_lea.vmem %s0, 4200
  %v1189 = vld [vmem:[%s1188] sm:$0xff]
  %s1190 = scalar_lea.vmem %s1, 52
  %s1191 = scalar_lea.vmem %s1190, 4294967292
  %v1192 = vpack.c.bf16 %v1189, %v163
  %1193 = vst [vmem:[%s1191] sm:$0xff] %v1192
  %s1194 = scalar_lea.vmem %s0, 2664
  %v1195 = vld [vmem:[%s1194] sm:$0xff]
  %s1196 = scalar_lea.vmem %s1, 820
  %s1197 = scalar_lea.vmem %s1196, 4294967292
  %v1198 = vpack.c.bf16 %v1195, %v166
  %1199 = vst [vmem:[%s1197] sm:$0xff] %v1198
  %s1200 = scalar_lea.vmem %s0, 1128
  %v1201 = vld [vmem:[%s1200] sm:$0xff]
  %s1202 = scalar_lea.vmem %s1, 1588
  %s1203 = scalar_lea.vmem %s1202, 4294967292
  %v1204 = vpack.c.bf16 %v1201, %v169
  %1205 = vst [vmem:[%s1203] sm:$0xff] %v1204
  %s1206 = scalar_lea.vmem %s0, 3688
  %v1207 = vld [vmem:[%s1206] sm:$0xff]
  %s1208 = scalar_lea.vmem %s1, 308
  %s1209 = scalar_lea.vmem %s1208, 4294967292
  %v1210 = vpack.c.bf16 %v1207, %v172
  %1211 = vst [vmem:[%s1209] sm:$0xff] %v1210
  %s1212 = scalar_lea.vmem %s0, 2152
  %v1213 = vld [vmem:[%s1212] sm:$0xff]
  %s1214 = scalar_lea.vmem %s1, 1076
  %s1215 = scalar_lea.vmem %s1214, 4294967292
  %v1216 = vpack.c.bf16 %v1213, %v175
  %1217 = vst [vmem:[%s1215] sm:$0xff] %v1216
  %s1218 = scalar_lea.vmem %s0, 616
  %v1219 = vld [vmem:[%s1218] sm:$0xff]
  %s1220 = scalar_lea.vmem %s1, 1844
  %s1221 = scalar_lea.vmem %s1220, 4294967292
  %v1222 = vpack.c.bf16 %v1219, %v178
  %1223 = vst [vmem:[%s1221] sm:$0xff] %v1222
  %s1224 = scalar_lea.vmem %s0, 3176
  %v1225 = vld [vmem:[%s1224] sm:$0xff]
  %s1226 = scalar_lea.vmem %s1, 564
  %s1227 = scalar_lea.vmem %s1226, 4294967292
  %v1228 = vpack.c.bf16 %v1225, %v181
  %1229 = vst [vmem:[%s1227] sm:$0xff] %v1228
  %s1230 = scalar_lea.vmem %s0, 1640
  %v1231 = vld [vmem:[%s1230] sm:$0xff]
  %s1232 = scalar_lea.vmem %s1, 1332
  %s1233 = scalar_lea.vmem %s1232, 4294967292
  %v1234 = vpack.c.bf16 %v1231, %v184
  %1235 = vst [vmem:[%s1233] sm:$0xff] %v1234
  %s1236 = scalar_lea.vmem %s0, 104
  %v1237 = vld [vmem:[%s1236] sm:$0xff]
  %s1238 = scalar_lea.vmem %s1, 2100
  %s1239 = scalar_lea.vmem %s1238, 4294967292
  %v1240 = vpack.c.bf16 %v1237, %v187
  %1241 = vst [vmem:[%s1239] sm:$0xff] %v1240
  %s1242 = scalar_lea.vmem %s0, 4216
  %v1243 = vld [vmem:[%s1242] sm:$0xff]
  %s1244 = scalar_lea.vmem %s1, 60
  %s1245 = scalar_lea.vmem %s1244, 4294967292
  %v1246 = vpack.c.bf16 %v1243, %v190
  %1247 = vst [vmem:[%s1245] sm:$0xff] %v1246
  %s1248 = scalar_lea.vmem %s0, 2680
  %v1249 = vld [vmem:[%s1248] sm:$0xff]
  %s1250 = scalar_lea.vmem %s1, 828
  %s1251 = scalar_lea.vmem %s1250, 4294967292
  %v1252 = vpack.c.bf16 %v1249, %v193
  %1253 = vst [vmem:[%s1251] sm:$0xff] %v1252
  %s1254 = scalar_lea.vmem %s0, 1144
  %v1255 = vld [vmem:[%s1254] sm:$0xff]
  %s1256 = scalar_lea.vmem %s1, 1596
  %s1257 = scalar_lea.vmem %s1256, 4294967292
  %v1258 = vpack.c.bf16 %v1255, %v196
  %1259 = vst [vmem:[%s1257] sm:$0xff] %v1258
  %s1260 = scalar_lea.vmem %s0, 3704
  %v1261 = vld [vmem:[%s1260] sm:$0xff]
  %s1262 = scalar_lea.vmem %s1, 316
  %s1263 = scalar_lea.vmem %s1262, 4294967292
  %v1264 = vpack.c.bf16 %v1261, %v199
  %1265 = vst [vmem:[%s1263] sm:$0xff] %v1264
  %s1266 = scalar_lea.vmem %s0, 2168
  %v1267 = vld [vmem:[%s1266] sm:$0xff]
  %s1268 = scalar_lea.vmem %s1, 1084
  %s1269 = scalar_lea.vmem %s1268, 4294967292
  %v1270 = vpack.c.bf16 %v1267, %v202
  %1271 = vst [vmem:[%s1269] sm:$0xff] %v1270
  %s1272 = scalar_lea.vmem %s0, 632
  %v1273 = vld [vmem:[%s1272] sm:$0xff]
  %s1274 = scalar_lea.vmem %s1, 1852
  %s1275 = scalar_lea.vmem %s1274, 4294967292
  %v1276 = vpack.c.bf16 %v1273, %v205
  %1277 = vst [vmem:[%s1275] sm:$0xff] %v1276
  %s1278 = scalar_lea.vmem %s0, 3192
  %v1279 = vld [vmem:[%s1278] sm:$0xff]
  %s1280 = scalar_lea.vmem %s1, 572
  %s1281 = scalar_lea.vmem %s1280, 4294967292
  %v1282 = vpack.c.bf16 %v1279, %v208
  %1283 = vst [vmem:[%s1281] sm:$0xff] %v1282
  %s1284 = scalar_lea.vmem %s0, 1656
  %v1285 = vld [vmem:[%s1284] sm:$0xff]
  %s1286 = scalar_lea.vmem %s1, 1340
  %s1287 = scalar_lea.vmem %s1286, 4294967292
  %v1288 = vpack.c.bf16 %v1285, %v211
  %1289 = vst [vmem:[%s1287] sm:$0xff] %v1288
  %s1290 = scalar_lea.vmem %s0, 120
  %v1291 = vld [vmem:[%s1290] sm:$0xff]
  %s1292 = scalar_lea.vmem %s1, 2108
  %s1293 = scalar_lea.vmem %s1292, 4294967292
  %v1294 = vpack.c.bf16 %v1291, %v214
  %1295 = vst [vmem:[%s1293] sm:$0xff] %v1294
  %s1296 = scalar_lea.vmem %s0, 4232
  %v1297 = vld [vmem:[%s1296] sm:$0xff]
  %s1298 = scalar_lea.vmem %s1, 68
  %s1299 = scalar_lea.vmem %s1298, 4294967292
  %v1300 = vpack.c.bf16 %v1297, %v217
  %1301 = vst [vmem:[%s1299] sm:$0xff] %v1300
  %s1302 = scalar_lea.vmem %s0, 2696
  %v1303 = vld [vmem:[%s1302] sm:$0xff]
  %s1304 = scalar_lea.vmem %s1, 836
  %s1305 = scalar_lea.vmem %s1304, 4294967292
  %v1306 = vpack.c.bf16 %v1303, %v220
  %1307 = vst [vmem:[%s1305] sm:$0xff] %v1306
  %s1308 = scalar_lea.vmem %s0, 1160
  %v1309 = vld [vmem:[%s1308] sm:$0xff]
  %s1310 = scalar_lea.vmem %s1, 1604
  %s1311 = scalar_lea.vmem %s1310, 4294967292
  %v1312 = vpack.c.bf16 %v1309, %v223
  %1313 = vst [vmem:[%s1311] sm:$0xff] %v1312
  %s1314 = scalar_lea.vmem %s0, 3720
  %v1315 = vld [vmem:[%s1314] sm:$0xff]
  %s1316 = scalar_lea.vmem %s1, 324
  %s1317 = scalar_lea.vmem %s1316, 4294967292
  %v1318 = vpack.c.bf16 %v1315, %v226
  %1319 = vst [vmem:[%s1317] sm:$0xff] %v1318
  %s1320 = scalar_lea.vmem %s0, 2184
  %v1321 = vld [vmem:[%s1320] sm:$0xff]
  %s1322 = scalar_lea.vmem %s1, 1092
  %s1323 = scalar_lea.vmem %s1322, 4294967292
  %v1324 = vpack.c.bf16 %v1321, %v229
  %1325 = vst [vmem:[%s1323] sm:$0xff] %v1324
  %s1326 = scalar_lea.vmem %s0, 648
  %v1327 = vld [vmem:[%s1326] sm:$0xff]
  %s1328 = scalar_lea.vmem %s1, 1860
  %s1329 = scalar_lea.vmem %s1328, 4294967292
  %v1330 = vpack.c.bf16 %v1327, %v232
  %1331 = vst [vmem:[%s1329] sm:$0xff] %v1330
  %s1332 = scalar_lea.vmem %s0, 3208
  %v1333 = vld [vmem:[%s1332] sm:$0xff]
  %s1334 = scalar_lea.vmem %s1, 580
  %s1335 = scalar_lea.vmem %s1334, 4294967292
  %v1336 = vpack.c.bf16 %v1333, %v235
  %1337 = vst [vmem:[%s1335] sm:$0xff] %v1336
  %s1338 = scalar_lea.vmem %s0, 1672
  %v1339 = vld [vmem:[%s1338] sm:$0xff]
  %s1340 = scalar_lea.vmem %s1, 1348
  %s1341 = scalar_lea.vmem %s1340, 4294967292
  %v1342 = vpack.c.bf16 %v1339, %v238
  %1343 = vst [vmem:[%s1341] sm:$0xff] %v1342
  %s1344 = scalar_lea.vmem %s0, 136
  %v1345 = vld [vmem:[%s1344] sm:$0xff]
  %s1346 = scalar_lea.vmem %s1, 2116
  %s1347 = scalar_lea.vmem %s1346, 4294967292
  %v1348 = vpack.c.bf16 %v1345, %v241
  %1349 = vst [vmem:[%s1347] sm:$0xff] %v1348
  %s1350 = scalar_lea.vmem %s0, 4248
  %v1351 = vld [vmem:[%s1350] sm:$0xff]
  %s1352 = scalar_lea.vmem %s1, 76
  %s1353 = scalar_lea.vmem %s1352, 4294967292
  %v1354 = vpack.c.bf16 %v1351, %v244
  %1355 = vst [vmem:[%s1353] sm:$0xff] %v1354
  %s1356 = scalar_lea.vmem %s0, 2712
  %v1357 = vld [vmem:[%s1356] sm:$0xff]
  %s1358 = scalar_lea.vmem %s1, 844
  %s1359 = scalar_lea.vmem %s1358, 4294967292
  %v1360 = vpack.c.bf16 %v1357, %v247
  %1361 = vst [vmem:[%s1359] sm:$0xff] %v1360
  %s1362 = scalar_lea.vmem %s0, 1176
  %v1363 = vld [vmem:[%s1362] sm:$0xff]
  %s1364 = scalar_lea.vmem %s1, 1612
  %s1365 = scalar_lea.vmem %s1364, 4294967292
  %v1366 = vpack.c.bf16 %v1363, %v250
  %1367 = vst [vmem:[%s1365] sm:$0xff] %v1366
  %s1368 = scalar_lea.vmem %s0, 3736
  %v1369 = vld [vmem:[%s1368] sm:$0xff]
  %s1370 = scalar_lea.vmem %s1, 332
  %s1371 = scalar_lea.vmem %s1370, 4294967292
  %v1372 = vpack.c.bf16 %v1369, %v253
  %1373 = vst [vmem:[%s1371] sm:$0xff] %v1372
  %s1374 = scalar_lea.vmem %s0, 2200
  %v1375 = vld [vmem:[%s1374] sm:$0xff]
  %s1376 = scalar_lea.vmem %s1, 1100
  %s1377 = scalar_lea.vmem %s1376, 4294967292
  %v1378 = vpack.c.bf16 %v1375, %v256
  %1379 = vst [vmem:[%s1377] sm:$0xff] %v1378
  %s1380 = scalar_lea.vmem %s0, 664
  %v1381 = vld [vmem:[%s1380] sm:$0xff]
  %s1382 = scalar_lea.vmem %s1, 1868
  %s1383 = scalar_lea.vmem %s1382, 4294967292
  %v1384 = vpack.c.bf16 %v1381, %v259
  %1385 = vst [vmem:[%s1383] sm:$0xff] %v1384
  %s1386 = scalar_lea.vmem %s0, 3224
  %v1387 = vld [vmem:[%s1386] sm:$0xff]
  %s1388 = scalar_lea.vmem %s1, 588
  %s1389 = scalar_lea.vmem %s1388, 4294967292
  %v1390 = vpack.c.bf16 %v1387, %v262
  %1391 = vst [vmem:[%s1389] sm:$0xff] %v1390
  %s1392 = scalar_lea.vmem %s0, 1688
  %v1393 = vld [vmem:[%s1392] sm:$0xff]
  %s1394 = scalar_lea.vmem %s1, 1356
  %s1395 = scalar_lea.vmem %s1394, 4294967292
  %v1396 = vpack.c.bf16 %v1393, %v265
  %1397 = vst [vmem:[%s1395] sm:$0xff] %v1396
  %s1398 = scalar_lea.vmem %s0, 152
  %v1399 = vld [vmem:[%s1398] sm:$0xff]
  %s1400 = scalar_lea.vmem %s1, 2124
  %s1401 = scalar_lea.vmem %s1400, 4294967292
  %v1402 = vpack.c.bf16 %v1399, %v268
  %1403 = vst [vmem:[%s1401] sm:$0xff] %v1402
  %s1404 = scalar_lea.vmem %s0, 4264
  %v1405 = vld [vmem:[%s1404] sm:$0xff]
  %s1406 = scalar_lea.vmem %s1, 84
  %s1407 = scalar_lea.vmem %s1406, 4294967292
  %v1408 = vpack.c.bf16 %v1405, %v271
  %1409 = vst [vmem:[%s1407] sm:$0xff] %v1408
  %s1410 = scalar_lea.vmem %s0, 2728
  %v1411 = vld [vmem:[%s1410] sm:$0xff]
  %s1412 = scalar_lea.vmem %s1, 852
  %s1413 = scalar_lea.vmem %s1412, 4294967292
  %v1414 = vpack.c.bf16 %v1411, %v274
  %1415 = vst [vmem:[%s1413] sm:$0xff] %v1414
  %s1416 = scalar_lea.vmem %s0, 1192
  %v1417 = vld [vmem:[%s1416] sm:$0xff]
  %s1418 = scalar_lea.vmem %s1, 1620
  %s1419 = scalar_lea.vmem %s1418, 4294967292
  %v1420 = vpack.c.bf16 %v1417, %v277
  %1421 = vst [vmem:[%s1419] sm:$0xff] %v1420
  %s1422 = scalar_lea.vmem %s0, 3752
  %v1423 = vld [vmem:[%s1422] sm:$0xff]
  %s1424 = scalar_lea.vmem %s1, 340
  %s1425 = scalar_lea.vmem %s1424, 4294967292
  %v1426 = vpack.c.bf16 %v1423, %v280
  %1427 = vst [vmem:[%s1425] sm:$0xff] %v1426
  %s1428 = scalar_lea.vmem %s0, 2216
  %v1429 = vld [vmem:[%s1428] sm:$0xff]
  %s1430 = scalar_lea.vmem %s1, 1108
  %s1431 = scalar_lea.vmem %s1430, 4294967292
  %v1432 = vpack.c.bf16 %v1429, %v283
  %1433 = vst [vmem:[%s1431] sm:$0xff] %v1432
  %s1434 = scalar_lea.vmem %s0, 680
  %v1435 = vld [vmem:[%s1434] sm:$0xff]
  %s1436 = scalar_lea.vmem %s1, 1876
  %s1437 = scalar_lea.vmem %s1436, 4294967292
  %v1438 = vpack.c.bf16 %v1435, %v286
  %1439 = vst [vmem:[%s1437] sm:$0xff] %v1438
  %s1440 = scalar_lea.vmem %s0, 3240
  %v1441 = vld [vmem:[%s1440] sm:$0xff]
  %s1442 = scalar_lea.vmem %s1, 596
  %s1443 = scalar_lea.vmem %s1442, 4294967292
  %v1444 = vpack.c.bf16 %v1441, %v289
  %1445 = vst [vmem:[%s1443] sm:$0xff] %v1444
  %s1446 = scalar_lea.vmem %s0, 1704
  %v1447 = vld [vmem:[%s1446] sm:$0xff]
  %s1448 = scalar_lea.vmem %s1, 1364
  %s1449 = scalar_lea.vmem %s1448, 4294967292
  %v1450 = vpack.c.bf16 %v1447, %v292
  %1451 = vst [vmem:[%s1449] sm:$0xff] %v1450
  %s1452 = scalar_lea.vmem %s0, 168
  %v1453 = vld [vmem:[%s1452] sm:$0xff]
  %s1454 = scalar_lea.vmem %s1, 2132
  %s1455 = scalar_lea.vmem %s1454, 4294967292
  %v1456 = vpack.c.bf16 %v1453, %v295
  %1457 = vst [vmem:[%s1455] sm:$0xff] %v1456
  %s1458 = scalar_lea.vmem %s0, 4280
  %v1459 = vld [vmem:[%s1458] sm:$0xff]
  %s1460 = scalar_lea.vmem %s1, 92
  %s1461 = scalar_lea.vmem %s1460, 4294967292
  %v1462 = vpack.c.bf16 %v1459, %v298
  %1463 = vst [vmem:[%s1461] sm:$0xff] %v1462
  %s1464 = scalar_lea.vmem %s0, 2744
  %v1465 = vld [vmem:[%s1464] sm:$0xff]
  %s1466 = scalar_lea.vmem %s1, 860
  %s1467 = scalar_lea.vmem %s1466, 4294967292
  %v1468 = vpack.c.bf16 %v1465, %v301
  %1469 = vst [vmem:[%s1467] sm:$0xff] %v1468
  %s1470 = scalar_lea.vmem %s0, 1208
  %v1471 = vld [vmem:[%s1470] sm:$0xff]
  %s1472 = scalar_lea.vmem %s1, 1628
  %s1473 = scalar_lea.vmem %s1472, 4294967292
  %v1474 = vpack.c.bf16 %v1471, %v304
  %1475 = vst [vmem:[%s1473] sm:$0xff] %v1474
  %s1476 = scalar_lea.vmem %s0, 3768
  %v1477 = vld [vmem:[%s1476] sm:$0xff]
  %s1478 = scalar_lea.vmem %s1, 348
  %s1479 = scalar_lea.vmem %s1478, 4294967292
  %v1480 = vpack.c.bf16 %v1477, %v307
  %1481 = vst [vmem:[%s1479] sm:$0xff] %v1480
  %s1482 = scalar_lea.vmem %s0, 2232
  %v1483 = vld [vmem:[%s1482] sm:$0xff]
  %s1484 = scalar_lea.vmem %s1, 1116
  %s1485 = scalar_lea.vmem %s1484, 4294967292
  %v1486 = vpack.c.bf16 %v1483, %v310
  %1487 = vst [vmem:[%s1485] sm:$0xff] %v1486
  %s1488 = scalar_lea.vmem %s0, 696
  %v1489 = vld [vmem:[%s1488] sm:$0xff]
  %s1490 = scalar_lea.vmem %s1, 1884
  %s1491 = scalar_lea.vmem %s1490, 4294967292
  %v1492 = vpack.c.bf16 %v1489, %v313
  %1493 = vst [vmem:[%s1491] sm:$0xff] %v1492
  %s1494 = scalar_lea.vmem %s0, 3256
  %v1495 = vld [vmem:[%s1494] sm:$0xff]
  %s1496 = scalar_lea.vmem %s1, 604
  %s1497 = scalar_lea.vmem %s1496, 4294967292
  %v1498 = vpack.c.bf16 %v1495, %v316
  %1499 = vst [vmem:[%s1497] sm:$0xff] %v1498
  %s1500 = scalar_lea.vmem %s0, 1720
  %v1501 = vld [vmem:[%s1500] sm:$0xff]
  %s1502 = scalar_lea.vmem %s1, 1372
  %s1503 = scalar_lea.vmem %s1502, 4294967292
  %v1504 = vpack.c.bf16 %v1501, %v319
  %1505 = vst [vmem:[%s1503] sm:$0xff] %v1504
  %s1506 = scalar_lea.vmem %s0, 184
  %v1507 = vld [vmem:[%s1506] sm:$0xff]
  %s1508 = scalar_lea.vmem %s1, 2140
  %s1509 = scalar_lea.vmem %s1508, 4294967292
  %v1510 = vpack.c.bf16 %v1507, %v322
  %1511 = vst [vmem:[%s1509] sm:$0xff] %v1510
  %s1512 = scalar_lea.vmem %s0, 4296
  %v1513 = vld [vmem:[%s1512] sm:$0xff]
  %s1514 = scalar_lea.vmem %s1, 100
  %s1515 = scalar_lea.vmem %s1514, 4294967292
  %v1516 = vpack.c.bf16 %v1513, %v325
  %1517 = vst [vmem:[%s1515] sm:$0xff] %v1516
  %s1518 = scalar_lea.vmem %s0, 2760
  %v1519 = vld [vmem:[%s1518] sm:$0xff]
  %s1520 = scalar_lea.vmem %s1, 868
  %s1521 = scalar_lea.vmem %s1520, 4294967292
  %v1522 = vpack.c.bf16 %v1519, %v328
  %1523 = vst [vmem:[%s1521] sm:$0xff] %v1522
  %s1524 = scalar_lea.vmem %s0, 1224
  %v1525 = vld [vmem:[%s1524] sm:$0xff]
  %s1526 = scalar_lea.vmem %s1, 1636
  %s1527 = scalar_lea.vmem %s1526, 4294967292
  %v1528 = vpack.c.bf16 %v1525, %v331
  %1529 = vst [vmem:[%s1527] sm:$0xff] %v1528
  %s1530 = scalar_lea.vmem %s0, 3784
  %v1531 = vld [vmem:[%s1530] sm:$0xff]
  %s1532 = scalar_lea.vmem %s1, 356
  %s1533 = scalar_lea.vmem %s1532, 4294967292
  %v1534 = vpack.c.bf16 %v1531, %v334
  %1535 = vst [vmem:[%s1533] sm:$0xff] %v1534
  %s1536 = scalar_lea.vmem %s0, 2248
  %v1537 = vld [vmem:[%s1536] sm:$0xff]
  %s1538 = scalar_lea.vmem %s1, 1124
  %s1539 = scalar_lea.vmem %s1538, 4294967292
  %v1540 = vpack.c.bf16 %v1537, %v337
  %1541 = vst [vmem:[%s1539] sm:$0xff] %v1540
  %s1542 = scalar_lea.vmem %s0, 712
  %v1543 = vld [vmem:[%s1542] sm:$0xff]
  %s1544 = scalar_lea.vmem %s1, 1892
  %s1545 = scalar_lea.vmem %s1544, 4294967292
  %v1546 = vpack.c.bf16 %v1543, %v340
  %1547 = vst [vmem:[%s1545] sm:$0xff] %v1546
  %s1548 = scalar_lea.vmem %s0, 3272
  %v1549 = vld [vmem:[%s1548] sm:$0xff]
  %s1550 = scalar_lea.vmem %s1, 612
  %s1551 = scalar_lea.vmem %s1550, 4294967292
  %v1552 = vpack.c.bf16 %v1549, %v343
  %1553 = vst [vmem:[%s1551] sm:$0xff] %v1552
  %s1554 = scalar_lea.vmem %s0, 1736
  %v1555 = vld [vmem:[%s1554] sm:$0xff]
  %s1556 = scalar_lea.vmem %s1, 1380
  %s1557 = scalar_lea.vmem %s1556, 4294967292
  %v1558 = vpack.c.bf16 %v1555, %v346
  %1559 = vst [vmem:[%s1557] sm:$0xff] %v1558
  %s1560 = scalar_lea.vmem %s0, 200
  %v1561 = vld [vmem:[%s1560] sm:$0xff]
  %s1562 = scalar_lea.vmem %s1, 2148
  %s1563 = scalar_lea.vmem %s1562, 4294967292
  %v1564 = vpack.c.bf16 %v1561, %v349
  %1565 = vst [vmem:[%s1563] sm:$0xff] %v1564
  %s1566 = scalar_lea.vmem %s0, 4312
  %v1567 = vld [vmem:[%s1566] sm:$0xff]
  %s1568 = scalar_lea.vmem %s1, 108
  %s1569 = scalar_lea.vmem %s1568, 4294967292
  %v1570 = vpack.c.bf16 %v1567, %v352
  %1571 = vst [vmem:[%s1569] sm:$0xff] %v1570
  %s1572 = scalar_lea.vmem %s0, 2776
  %v1573 = vld [vmem:[%s1572] sm:$0xff]
  %s1574 = scalar_lea.vmem %s1, 876
  %s1575 = scalar_lea.vmem %s1574, 4294967292
  %v1576 = vpack.c.bf16 %v1573, %v355
  %1577 = vst [vmem:[%s1575] sm:$0xff] %v1576
  %s1578 = scalar_lea.vmem %s0, 1240
  %v1579 = vld [vmem:[%s1578] sm:$0xff]
  %s1580 = scalar_lea.vmem %s1, 1644
  %s1581 = scalar_lea.vmem %s1580, 4294967292
  %v1582 = vpack.c.bf16 %v1579, %v358
  %1583 = vst [vmem:[%s1581] sm:$0xff] %v1582
  %s1584 = scalar_lea.vmem %s0, 3800
  %v1585 = vld [vmem:[%s1584] sm:$0xff]
  %s1586 = scalar_lea.vmem %s1, 364
  %s1587 = scalar_lea.vmem %s1586, 4294967292
  %v1588 = vpack.c.bf16 %v1585, %v361
  %1589 = vst [vmem:[%s1587] sm:$0xff] %v1588
  %s1590 = scalar_lea.vmem %s0, 2264
  %v1591 = vld [vmem:[%s1590] sm:$0xff]
  %s1592 = scalar_lea.vmem %s1, 1132
  %s1593 = scalar_lea.vmem %s1592, 4294967292
  %v1594 = vpack.c.bf16 %v1591, %v364
  %1595 = vst [vmem:[%s1593] sm:$0xff] %v1594
  %s1596 = scalar_lea.vmem %s0, 728
  %v1597 = vld [vmem:[%s1596] sm:$0xff]
  %s1598 = scalar_lea.vmem %s1, 1900
  %s1599 = scalar_lea.vmem %s1598, 4294967292
  %v1600 = vpack.c.bf16 %v1597, %v367
  %1601 = vst [vmem:[%s1599] sm:$0xff] %v1600
  %s1602 = scalar_lea.vmem %s0, 3288
  %v1603 = vld [vmem:[%s1602] sm:$0xff]
  %s1604 = scalar_lea.vmem %s1, 620
  %s1605 = scalar_lea.vmem %s1604, 4294967292
  %v1606 = vpack.c.bf16 %v1603, %v370
  %1607 = vst [vmem:[%s1605] sm:$0xff] %v1606
  %s1608 = scalar_lea.vmem %s0, 1752
  %v1609 = vld [vmem:[%s1608] sm:$0xff]
  %s1610 = scalar_lea.vmem %s1, 1388
  %s1611 = scalar_lea.vmem %s1610, 4294967292
  %v1612 = vpack.c.bf16 %v1609, %v373
  %1613 = vst [vmem:[%s1611] sm:$0xff] %v1612
  %s1614 = scalar_lea.vmem %s0, 216
  %v1615 = vld [vmem:[%s1614] sm:$0xff]
  %s1616 = scalar_lea.vmem %s1, 2156
  %s1617 = scalar_lea.vmem %s1616, 4294967292
  %v1618 = vpack.c.bf16 %v1615, %v376
  %1619 = vst [vmem:[%s1617] sm:$0xff] %v1618
  %s1620 = scalar_lea.vmem %s0, 4328
  %v1621 = vld [vmem:[%s1620] sm:$0xff]
  %s1622 = scalar_lea.vmem %s1, 116
  %s1623 = scalar_lea.vmem %s1622, 4294967292
  %v1624 = vpack.c.bf16 %v1621, %v379
  %1625 = vst [vmem:[%s1623] sm:$0xff] %v1624
  %s1626 = scalar_lea.vmem %s0, 2792
  %v1627 = vld [vmem:[%s1626] sm:$0xff]
  %s1628 = scalar_lea.vmem %s1, 884
  %s1629 = scalar_lea.vmem %s1628, 4294967292
  %v1630 = vpack.c.bf16 %v1627, %v382
  %1631 = vst [vmem:[%s1629] sm:$0xff] %v1630
  %s1632 = scalar_lea.vmem %s0, 1256
  %v1633 = vld [vmem:[%s1632] sm:$0xff]
  %s1634 = scalar_lea.vmem %s1, 1652
  %s1635 = scalar_lea.vmem %s1634, 4294967292
  %v1636 = vpack.c.bf16 %v1633, %v385
  %1637 = vst [vmem:[%s1635] sm:$0xff] %v1636
  %s1638 = scalar_lea.vmem %s0, 3816
  %v1639 = vld [vmem:[%s1638] sm:$0xff]
  %s1640 = scalar_lea.vmem %s1, 372
  %s1641 = scalar_lea.vmem %s1640, 4294967292
  %v1642 = vpack.c.bf16 %v1639, %v388
  %1643 = vst [vmem:[%s1641] sm:$0xff] %v1642
  %s1644 = scalar_lea.vmem %s0, 2280
  %v1645 = vld [vmem:[%s1644] sm:$0xff]
  %s1646 = scalar_lea.vmem %s1, 1140
  %s1647 = scalar_lea.vmem %s1646, 4294967292
  %v1648 = vpack.c.bf16 %v1645, %v391
  %1649 = vst [vmem:[%s1647] sm:$0xff] %v1648
  %s1650 = scalar_lea.vmem %s0, 744
  %v1651 = vld [vmem:[%s1650] sm:$0xff]
  %s1652 = scalar_lea.vmem %s1, 1908
  %s1653 = scalar_lea.vmem %s1652, 4294967292
  %v1654 = vpack.c.bf16 %v1651, %v394
  %1655 = vst [vmem:[%s1653] sm:$0xff] %v1654
  %s1656 = scalar_lea.vmem %s0, 3304
  %v1657 = vld [vmem:[%s1656] sm:$0xff]
  %s1658 = scalar_lea.vmem %s1, 628
  %s1659 = scalar_lea.vmem %s1658, 4294967292
  %v1660 = vpack.c.bf16 %v1657, %v397
  %1661 = vst [vmem:[%s1659] sm:$0xff] %v1660
  %s1662 = scalar_lea.vmem %s0, 1768
  %v1663 = vld [vmem:[%s1662] sm:$0xff]
  %s1664 = scalar_lea.vmem %s1, 1396
  %s1665 = scalar_lea.vmem %s1664, 4294967292
  %v1666 = vpack.c.bf16 %v1663, %v400
  %1667 = vst [vmem:[%s1665] sm:$0xff] %v1666
  %s1668 = scalar_lea.vmem %s0, 232
  %v1669 = vld [vmem:[%s1668] sm:$0xff]
  %s1670 = scalar_lea.vmem %s1, 2164
  %s1671 = scalar_lea.vmem %s1670, 4294967292
  %v1672 = vpack.c.bf16 %v1669, %v403
  %1673 = vst [vmem:[%s1671] sm:$0xff] %v1672
  %s1674 = scalar_lea.vmem %s0, 4344
  %v1675 = vld [vmem:[%s1674] sm:$0xff]
  %s1676 = scalar_lea.vmem %s1, 124
  %s1677 = scalar_lea.vmem %s1676, 4294967292
  %v1678 = vpack.c.bf16 %v1675, %v406
  %1679 = vst [vmem:[%s1677] sm:$0xff] %v1678
  %s1680 = scalar_lea.vmem %s0, 2808
  %v1681 = vld [vmem:[%s1680] sm:$0xff]
  %s1682 = scalar_lea.vmem %s1, 892
  %s1683 = scalar_lea.vmem %s1682, 4294967292
  %v1684 = vpack.c.bf16 %v1681, %v409
  %1685 = vst [vmem:[%s1683] sm:$0xff] %v1684
  %s1686 = scalar_lea.vmem %s0, 1272
  %v1687 = vld [vmem:[%s1686] sm:$0xff]
  %s1688 = scalar_lea.vmem %s1, 1660
  %s1689 = scalar_lea.vmem %s1688, 4294967292
  %v1690 = vpack.c.bf16 %v1687, %v412
  %1691 = vst [vmem:[%s1689] sm:$0xff] %v1690
  %s1692 = scalar_lea.vmem %s0, 3832
  %v1693 = vld [vmem:[%s1692] sm:$0xff]
  %s1694 = scalar_lea.vmem %s1, 380
  %s1695 = scalar_lea.vmem %s1694, 4294967292
  %v1696 = vpack.c.bf16 %v1693, %v415
  %1697 = vst [vmem:[%s1695] sm:$0xff] %v1696
  %s1698 = scalar_lea.vmem %s0, 2296
  %v1699 = vld [vmem:[%s1698] sm:$0xff]
  %s1700 = scalar_lea.vmem %s1, 1148
  %s1701 = scalar_lea.vmem %s1700, 4294967292
  %v1702 = vpack.c.bf16 %v1699, %v418
  %1703 = vst [vmem:[%s1701] sm:$0xff] %v1702
  %s1704 = scalar_lea.vmem %s0, 760
  %v1705 = vld [vmem:[%s1704] sm:$0xff]
  %s1706 = scalar_lea.vmem %s1, 1916
  %s1707 = scalar_lea.vmem %s1706, 4294967292
  %v1708 = vpack.c.bf16 %v1705, %v421
  %1709 = vst [vmem:[%s1707] sm:$0xff] %v1708
  %s1710 = scalar_lea.vmem %s0, 3320
  %v1711 = vld [vmem:[%s1710] sm:$0xff]
  %s1712 = scalar_lea.vmem %s1, 636
  %s1713 = scalar_lea.vmem %s1712, 4294967292
  %v1714 = vpack.c.bf16 %v1711, %v424
  %1715 = vst [vmem:[%s1713] sm:$0xff] %v1714
  %s1716 = scalar_lea.vmem %s0, 1784
  %v1717 = vld [vmem:[%s1716] sm:$0xff]
  %s1718 = scalar_lea.vmem %s1, 1404
  %s1719 = scalar_lea.vmem %s1718, 4294967292
  %v1720 = vpack.c.bf16 %v1717, %v427
  %1721 = vst [vmem:[%s1719] sm:$0xff] %v1720
  %s1722 = scalar_lea.vmem %s0, 248
  %v1723 = vld [vmem:[%s1722] sm:$0xff]
  %s1724 = scalar_lea.vmem %s1, 2172
  %s1725 = scalar_lea.vmem %s1724, 4294967292
  %v1726 = vpack.c.bf16 %v1723, %v430
  %1727 = vst [vmem:[%s1725] sm:$0xff] %v1726
  %s1728 = scalar_lea.vmem %s0, 4360
  %v1729 = vld [vmem:[%s1728] sm:$0xff]
  %s1730 = scalar_lea.vmem %s1, 132
  %s1731 = scalar_lea.vmem %s1730, 4294967292
  %v1732 = vpack.c.bf16 %v1729, %v433
  %1733 = vst [vmem:[%s1731] sm:$0xff] %v1732
  %s1734 = scalar_lea.vmem %s0, 2824
  %v1735 = vld [vmem:[%s1734] sm:$0xff]
  %s1736 = scalar_lea.vmem %s1, 900
  %s1737 = scalar_lea.vmem %s1736, 4294967292
  %v1738 = vpack.c.bf16 %v1735, %v436
  %1739 = vst [vmem:[%s1737] sm:$0xff] %v1738
  %s1740 = scalar_lea.vmem %s0, 1288
  %v1741 = vld [vmem:[%s1740] sm:$0xff]
  %s1742 = scalar_lea.vmem %s1, 1668
  %s1743 = scalar_lea.vmem %s1742, 4294967292
  %v1744 = vpack.c.bf16 %v1741, %v439
  %1745 = vst [vmem:[%s1743] sm:$0xff] %v1744
  %s1746 = scalar_lea.vmem %s0, 3848
  %v1747 = vld [vmem:[%s1746] sm:$0xff]
  %s1748 = scalar_lea.vmem %s1, 388
  %s1749 = scalar_lea.vmem %s1748, 4294967292
  %v1750 = vpack.c.bf16 %v1747, %v442
  %1751 = vst [vmem:[%s1749] sm:$0xff] %v1750
  %s1752 = scalar_lea.vmem %s0, 2312
  %v1753 = vld [vmem:[%s1752] sm:$0xff]
  %s1754 = scalar_lea.vmem %s1, 1156
  %s1755 = scalar_lea.vmem %s1754, 4294967292
  %v1756 = vpack.c.bf16 %v1753, %v445
  %1757 = vst [vmem:[%s1755] sm:$0xff] %v1756
  %s1758 = scalar_lea.vmem %s0, 776
  %v1759 = vld [vmem:[%s1758] sm:$0xff]
  %s1760 = scalar_lea.vmem %s1, 1924
  %s1761 = scalar_lea.vmem %s1760, 4294967292
  %v1762 = vpack.c.bf16 %v1759, %v448
  %1763 = vst [vmem:[%s1761] sm:$0xff] %v1762
  %s1764 = scalar_lea.vmem %s0, 3336
  %v1765 = vld [vmem:[%s1764] sm:$0xff]
  %s1766 = scalar_lea.vmem %s1, 644
  %s1767 = scalar_lea.vmem %s1766, 4294967292
  %v1768 = vpack.c.bf16 %v1765, %v451
  %1769 = vst [vmem:[%s1767] sm:$0xff] %v1768
  %s1770 = scalar_lea.vmem %s0, 1800
  %v1771 = vld [vmem:[%s1770] sm:$0xff]
  %s1772 = scalar_lea.vmem %s1, 1412
  %s1773 = scalar_lea.vmem %s1772, 4294967292
  %v1774 = vpack.c.bf16 %v1771, %v454
  %1775 = vst [vmem:[%s1773] sm:$0xff] %v1774
  %s1776 = scalar_lea.vmem %s0, 264
  %v1777 = vld [vmem:[%s1776] sm:$0xff]
  %s1778 = scalar_lea.vmem %s1, 2180
  %s1779 = scalar_lea.vmem %s1778, 4294967292
  %v1780 = vpack.c.bf16 %v1777, %v457
  %1781 = vst [vmem:[%s1779] sm:$0xff] %v1780
  %s1782 = scalar_lea.vmem %s0, 4376
  %v1783 = vld [vmem:[%s1782] sm:$0xff]
  %s1784 = scalar_lea.vmem %s1, 140
  %s1785 = scalar_lea.vmem %s1784, 4294967292
  %v1786 = vpack.c.bf16 %v1783, %v460
  %1787 = vst [vmem:[%s1785] sm:$0xff] %v1786
  %s1788 = scalar_lea.vmem %s0, 2840
  %v1789 = vld [vmem:[%s1788] sm:$0xff]
  %s1790 = scalar_lea.vmem %s1, 908
  %s1791 = scalar_lea.vmem %s1790, 4294967292
  %v1792 = vpack.c.bf16 %v1789, %v463
  %1793 = vst [vmem:[%s1791] sm:$0xff] %v1792
  %s1794 = scalar_lea.vmem %s0, 1304
  %v1795 = vld [vmem:[%s1794] sm:$0xff]
  %s1796 = scalar_lea.vmem %s1, 1676
  %s1797 = scalar_lea.vmem %s1796, 4294967292
  %v1798 = vpack.c.bf16 %v1795, %v466
  %1799 = vst [vmem:[%s1797] sm:$0xff] %v1798
  %s1800 = scalar_lea.vmem %s0, 3864
  %v1801 = vld [vmem:[%s1800] sm:$0xff]
  %s1802 = scalar_lea.vmem %s1, 396
  %s1803 = scalar_lea.vmem %s1802, 4294967292
  %v1804 = vpack.c.bf16 %v1801, %v469
  %1805 = vst [vmem:[%s1803] sm:$0xff] %v1804
  %s1806 = scalar_lea.vmem %s0, 2328
  %v1807 = vld [vmem:[%s1806] sm:$0xff]
  %s1808 = scalar_lea.vmem %s1, 1164
  %s1809 = scalar_lea.vmem %s1808, 4294967292
  %v1810 = vpack.c.bf16 %v1807, %v472
  %1811 = vst [vmem:[%s1809] sm:$0xff] %v1810
  %s1812 = scalar_lea.vmem %s0, 792
  %v1813 = vld [vmem:[%s1812] sm:$0xff]
  %s1814 = scalar_lea.vmem %s1, 1932
  %s1815 = scalar_lea.vmem %s1814, 4294967292
  %v1816 = vpack.c.bf16 %v1813, %v475
  %1817 = vst [vmem:[%s1815] sm:$0xff] %v1816
  %s1818 = scalar_lea.vmem %s0, 3352
  %v1819 = vld [vmem:[%s1818] sm:$0xff]
  %s1820 = scalar_lea.vmem %s1, 652
  %s1821 = scalar_lea.vmem %s1820, 4294967292
  %v1822 = vpack.c.bf16 %v1819, %v478
  %1823 = vst [vmem:[%s1821] sm:$0xff] %v1822
  %s1824 = scalar_lea.vmem %s0, 1816
  %v1825 = vld [vmem:[%s1824] sm:$0xff]
  %s1826 = scalar_lea.vmem %s1, 1420
  %s1827 = scalar_lea.vmem %s1826, 4294967292
  %v1828 = vpack.c.bf16 %v1825, %v481
  %1829 = vst [vmem:[%s1827] sm:$0xff] %v1828
  %s1830 = scalar_lea.vmem %s0, 280
  %v1831 = vld [vmem:[%s1830] sm:$0xff]
  %s1832 = scalar_lea.vmem %s1, 2188
  %s1833 = scalar_lea.vmem %s1832, 4294967292
  %v1834 = vpack.c.bf16 %v1831, %v484
  %1835 = vst [vmem:[%s1833] sm:$0xff] %v1834
  %s1836 = scalar_lea.vmem %s0, 4392
  %v1837 = vld [vmem:[%s1836] sm:$0xff]
  %s1838 = scalar_lea.vmem %s1, 148
  %s1839 = scalar_lea.vmem %s1838, 4294967292
  %v1840 = vpack.c.bf16 %v1837, %v487
  %1841 = vst [vmem:[%s1839] sm:$0xff] %v1840
  %s1842 = scalar_lea.vmem %s0, 2856
  %v1843 = vld [vmem:[%s1842] sm:$0xff]
  %s1844 = scalar_lea.vmem %s1, 916
  %s1845 = scalar_lea.vmem %s1844, 4294967292
  %v1846 = vpack.c.bf16 %v1843, %v490
  %1847 = vst [vmem:[%s1845] sm:$0xff] %v1846
  %s1848 = scalar_lea.vmem %s0, 1320
  %v1849 = vld [vmem:[%s1848] sm:$0xff]
  %s1850 = scalar_lea.vmem %s1, 1684
  %s1851 = scalar_lea.vmem %s1850, 4294967292
  %v1852 = vpack.c.bf16 %v1849, %v493
  %1853 = vst [vmem:[%s1851] sm:$0xff] %v1852
  %s1854 = scalar_lea.vmem %s0, 3880
  %v1855 = vld [vmem:[%s1854] sm:$0xff]
  %s1856 = scalar_lea.vmem %s1, 404
  %s1857 = scalar_lea.vmem %s1856, 4294967292
  %v1858 = vpack.c.bf16 %v1855, %v496
  %1859 = vst [vmem:[%s1857] sm:$0xff] %v1858
  %s1860 = scalar_lea.vmem %s0, 2344
  %v1861 = vld [vmem:[%s1860] sm:$0xff]
  %s1862 = scalar_lea.vmem %s1, 1172
  %s1863 = scalar_lea.vmem %s1862, 4294967292
  %v1864 = vpack.c.bf16 %v1861, %v499
  %1865 = vst [vmem:[%s1863] sm:$0xff] %v1864
  %s1866 = scalar_lea.vmem %s0, 808
  %v1867 = vld [vmem:[%s1866] sm:$0xff]
  %s1868 = scalar_lea.vmem %s1, 1940
  %s1869 = scalar_lea.vmem %s1868, 4294967292
  %v1870 = vpack.c.bf16 %v1867, %v502
  %1871 = vst [vmem:[%s1869] sm:$0xff] %v1870
  %s1872 = scalar_lea.vmem %s0, 3368
  %v1873 = vld [vmem:[%s1872] sm:$0xff]
  %s1874 = scalar_lea.vmem %s1, 660
  %s1875 = scalar_lea.vmem %s1874, 4294967292
  %v1876 = vpack.c.bf16 %v1873, %v505
  %1877 = vst [vmem:[%s1875] sm:$0xff] %v1876
  %s1878 = scalar_lea.vmem %s0, 1832
  %v1879 = vld [vmem:[%s1878] sm:$0xff]
  %s1880 = scalar_lea.vmem %s1, 1428
  %s1881 = scalar_lea.vmem %s1880, 4294967292
  %v1882 = vpack.c.bf16 %v1879, %v508
  %1883 = vst [vmem:[%s1881] sm:$0xff] %v1882
  %s1884 = scalar_lea.vmem %s0, 296
  %v1885 = vld [vmem:[%s1884] sm:$0xff]
  %s1886 = scalar_lea.vmem %s1, 2196
  %s1887 = scalar_lea.vmem %s1886, 4294967292
  %v1888 = vpack.c.bf16 %v1885, %v511
  %1889 = vst [vmem:[%s1887] sm:$0xff] %v1888
  %s1890 = scalar_lea.vmem %s0, 4408
  %v1891 = vld [vmem:[%s1890] sm:$0xff]
  %s1892 = scalar_lea.vmem %s1, 156
  %s1893 = scalar_lea.vmem %s1892, 4294967292
  %v1894 = vpack.c.bf16 %v1891, %v514
  %1895 = vst [vmem:[%s1893] sm:$0xff] %v1894
  %s1896 = scalar_lea.vmem %s0, 2872
  %v1897 = vld [vmem:[%s1896] sm:$0xff]
  %s1898 = scalar_lea.vmem %s1, 924
  %s1899 = scalar_lea.vmem %s1898, 4294967292
  %v1900 = vpack.c.bf16 %v1897, %v517
  %1901 = vst [vmem:[%s1899] sm:$0xff] %v1900
  %s1902 = scalar_lea.vmem %s0, 1336
  %v1903 = vld [vmem:[%s1902] sm:$0xff]
  %s1904 = scalar_lea.vmem %s1, 1692
  %s1905 = scalar_lea.vmem %s1904, 4294967292
  %v1906 = vpack.c.bf16 %v1903, %v520
  %1907 = vst [vmem:[%s1905] sm:$0xff] %v1906
  %s1908 = scalar_lea.vmem %s0, 3896
  %v1909 = vld [vmem:[%s1908] sm:$0xff]
  %s1910 = scalar_lea.vmem %s1, 412
  %s1911 = scalar_lea.vmem %s1910, 4294967292
  %v1912 = vpack.c.bf16 %v1909, %v523
  %1913 = vst [vmem:[%s1911] sm:$0xff] %v1912
  %s1914 = scalar_lea.vmem %s0, 2360
  %v1915 = vld [vmem:[%s1914] sm:$0xff]
  %s1916 = scalar_lea.vmem %s1, 1180
  %s1917 = scalar_lea.vmem %s1916, 4294967292
  %v1918 = vpack.c.bf16 %v1915, %v526
  %1919 = vst [vmem:[%s1917] sm:$0xff] %v1918
  %s1920 = scalar_lea.vmem %s0, 824
  %v1921 = vld [vmem:[%s1920] sm:$0xff]
  %s1922 = scalar_lea.vmem %s1, 1948
  %s1923 = scalar_lea.vmem %s1922, 4294967292
  %v1924 = vpack.c.bf16 %v1921, %v529
  %1925 = vst [vmem:[%s1923] sm:$0xff] %v1924
  %s1926 = scalar_lea.vmem %s0, 3384
  %v1927 = vld [vmem:[%s1926] sm:$0xff]
  %s1928 = scalar_lea.vmem %s1, 668
  %s1929 = scalar_lea.vmem %s1928, 4294967292
  %v1930 = vpack.c.bf16 %v1927, %v532
  %1931 = vst [vmem:[%s1929] sm:$0xff] %v1930
  %s1932 = scalar_lea.vmem %s0, 1848
  %v1933 = vld [vmem:[%s1932] sm:$0xff]
  %s1934 = scalar_lea.vmem %s1, 1436
  %s1935 = scalar_lea.vmem %s1934, 4294967292
  %v1936 = vpack.c.bf16 %v1933, %v535
  %1937 = vst [vmem:[%s1935] sm:$0xff] %v1936
  %s1938 = scalar_lea.vmem %s0, 312
  %v1939 = vld [vmem:[%s1938] sm:$0xff]
  %s1940 = scalar_lea.vmem %s1, 2204
  %s1941 = scalar_lea.vmem %s1940, 4294967292
  %v1942 = vpack.c.bf16 %v1939, %v538
  %1943 = vst [vmem:[%s1941] sm:$0xff] %v1942
  %s1944 = scalar_lea.vmem %s0, 4424
  %v1945 = vld [vmem:[%s1944] sm:$0xff]
  %s1946 = scalar_lea.vmem %s1, 164
  %s1947 = scalar_lea.vmem %s1946, 4294967292
  %v1948 = vpack.c.bf16 %v1945, %v541
  %1949 = vst [vmem:[%s1947] sm:$0xff] %v1948
  %s1950 = scalar_lea.vmem %s0, 2888
  %v1951 = vld [vmem:[%s1950] sm:$0xff]
  %s1952 = scalar_lea.vmem %s1, 932
  %s1953 = scalar_lea.vmem %s1952, 4294967292
  %v1954 = vpack.c.bf16 %v1951, %v544
  %1955 = vst [vmem:[%s1953] sm:$0xff] %v1954
  %s1956 = scalar_lea.vmem %s0, 1352
  %v1957 = vld [vmem:[%s1956] sm:$0xff]
  %s1958 = scalar_lea.vmem %s1, 1700
  %s1959 = scalar_lea.vmem %s1958, 4294967292
  %v1960 = vpack.c.bf16 %v1957, %v547
  %1961 = vst [vmem:[%s1959] sm:$0xff] %v1960
  %s1962 = scalar_lea.vmem %s0, 3912
  %v1963 = vld [vmem:[%s1962] sm:$0xff]
  %s1964 = scalar_lea.vmem %s1, 420
  %s1965 = scalar_lea.vmem %s1964, 4294967292
  %v1966 = vpack.c.bf16 %v1963, %v550
  %1967 = vst [vmem:[%s1965] sm:$0xff] %v1966
  %s1968 = scalar_lea.vmem %s0, 2376
  %v1969 = vld [vmem:[%s1968] sm:$0xff]
  %s1970 = scalar_lea.vmem %s1, 1188
  %s1971 = scalar_lea.vmem %s1970, 4294967292
  %v1972 = vpack.c.bf16 %v1969, %v553
  %1973 = vst [vmem:[%s1971] sm:$0xff] %v1972
  %s1974 = scalar_lea.vmem %s0, 840
  %v1975 = vld [vmem:[%s1974] sm:$0xff]
  %s1976 = scalar_lea.vmem %s1, 1956
  %s1977 = scalar_lea.vmem %s1976, 4294967292
  %v1978 = vpack.c.bf16 %v1975, %v556
  %1979 = vst [vmem:[%s1977] sm:$0xff] %v1978
  %s1980 = scalar_lea.vmem %s0, 3400
  %v1981 = vld [vmem:[%s1980] sm:$0xff]
  %s1982 = scalar_lea.vmem %s1, 676
  %s1983 = scalar_lea.vmem %s1982, 4294967292
  %v1984 = vpack.c.bf16 %v1981, %v559
  %1985 = vst [vmem:[%s1983] sm:$0xff] %v1984
  %s1986 = scalar_lea.vmem %s0, 1864
  %v1987 = vld [vmem:[%s1986] sm:$0xff]
  %s1988 = scalar_lea.vmem %s1, 1444
  %s1989 = scalar_lea.vmem %s1988, 4294967292
  %v1990 = vpack.c.bf16 %v1987, %v562
  %1991 = vst [vmem:[%s1989] sm:$0xff] %v1990
  %s1992 = scalar_lea.vmem %s0, 328
  %v1993 = vld [vmem:[%s1992] sm:$0xff]
  %s1994 = scalar_lea.vmem %s1, 2212
  %s1995 = scalar_lea.vmem %s1994, 4294967292
  %v1996 = vpack.c.bf16 %v1993, %v565
  %1997 = vst [vmem:[%s1995] sm:$0xff] %v1996
  %s1998 = scalar_lea.vmem %s0, 4440
  %v1999 = vld [vmem:[%s1998] sm:$0xff]
  %s2000 = scalar_lea.vmem %s1, 172
  %s2001 = scalar_lea.vmem %s2000, 4294967292
  %v2002 = vpack.c.bf16 %v1999, %v568
  %2003 = vst [vmem:[%s2001] sm:$0xff] %v2002
  %s2004 = scalar_lea.vmem %s0, 2904
  %v2005 = vld [vmem:[%s2004] sm:$0xff]
  %s2006 = scalar_lea.vmem %s1, 940
  %s2007 = scalar_lea.vmem %s2006, 4294967292
  %v2008 = vpack.c.bf16 %v2005, %v571
  %2009 = vst [vmem:[%s2007] sm:$0xff] %v2008
  %s2010 = scalar_lea.vmem %s0, 1368
  %v2011 = vld [vmem:[%s2010] sm:$0xff]
  %s2012 = scalar_lea.vmem %s1, 1708
  %s2013 = scalar_lea.vmem %s2012, 4294967292
  %v2014 = vpack.c.bf16 %v2011, %v574
  %2015 = vst [vmem:[%s2013] sm:$0xff] %v2014
  %s2016 = scalar_lea.vmem %s0, 3928
  %v2017 = vld [vmem:[%s2016] sm:$0xff]
  %s2018 = scalar_lea.vmem %s1, 428
  %s2019 = scalar_lea.vmem %s2018, 4294967292
  %v2020 = vpack.c.bf16 %v2017, %v577
  %2021 = vst [vmem:[%s2019] sm:$0xff] %v2020
  %s2022 = scalar_lea.vmem %s0, 2392
  %v2023 = vld [vmem:[%s2022] sm:$0xff]
  %s2024 = scalar_lea.vmem %s1, 1196
  %s2025 = scalar_lea.vmem %s2024, 4294967292
  %v2026 = vpack.c.bf16 %v2023, %v580
  %2027 = vst [vmem:[%s2025] sm:$0xff] %v2026
  %s2028 = scalar_lea.vmem %s0, 856
  %v2029 = vld [vmem:[%s2028] sm:$0xff]
  %s2030 = scalar_lea.vmem %s1, 1964
  %s2031 = scalar_lea.vmem %s2030, 4294967292
  %v2032 = vpack.c.bf16 %v2029, %v583
  %2033 = vst [vmem:[%s2031] sm:$0xff] %v2032
  %s2034 = scalar_lea.vmem %s0, 3416
  %v2035 = vld [vmem:[%s2034] sm:$0xff]
  %s2036 = scalar_lea.vmem %s1, 684
  %s2037 = scalar_lea.vmem %s2036, 4294967292
  %v2038 = vpack.c.bf16 %v2035, %v586
  %2039 = vst [vmem:[%s2037] sm:$0xff] %v2038
  %s2040 = scalar_lea.vmem %s0, 1880
  %v2041 = vld [vmem:[%s2040] sm:$0xff]
  %s2042 = scalar_lea.vmem %s1, 1452
  %s2043 = scalar_lea.vmem %s2042, 4294967292
  %v2044 = vpack.c.bf16 %v2041, %v589
  %2045 = vst [vmem:[%s2043] sm:$0xff] %v2044
  %s2046 = scalar_lea.vmem %s0, 344
  %v2047 = vld [vmem:[%s2046] sm:$0xff]
  %s2048 = scalar_lea.vmem %s1, 2220
  %s2049 = scalar_lea.vmem %s2048, 4294967292
  %v2050 = vpack.c.bf16 %v2047, %v592
  %2051 = vst [vmem:[%s2049] sm:$0xff] %v2050
  %s2052 = scalar_lea.vmem %s0, 4456
  %v2053 = vld [vmem:[%s2052] sm:$0xff]
  %s2054 = scalar_lea.vmem %s1, 180
  %s2055 = scalar_lea.vmem %s2054, 4294967292
  %v2056 = vpack.c.bf16 %v2053, %v595
  %2057 = vst [vmem:[%s2055] sm:$0xff] %v2056
  %s2058 = scalar_lea.vmem %s0, 2920
  %v2059 = vld [vmem:[%s2058] sm:$0xff]
  %s2060 = scalar_lea.vmem %s1, 948
  %s2061 = scalar_lea.vmem %s2060, 4294967292
  %v2062 = vpack.c.bf16 %v2059, %v598
  %2063 = vst [vmem:[%s2061] sm:$0xff] %v2062
  %s2064 = scalar_lea.vmem %s0, 1384
  %v2065 = vld [vmem:[%s2064] sm:$0xff]
  %s2066 = scalar_lea.vmem %s1, 1716
  %s2067 = scalar_lea.vmem %s2066, 4294967292
  %v2068 = vpack.c.bf16 %v2065, %v601
  %2069 = vst [vmem:[%s2067] sm:$0xff] %v2068
  %s2070 = scalar_lea.vmem %s0, 3944
  %v2071 = vld [vmem:[%s2070] sm:$0xff]
  %s2072 = scalar_lea.vmem %s1, 436
  %s2073 = scalar_lea.vmem %s2072, 4294967292
  %v2074 = vpack.c.bf16 %v2071, %v604
  %2075 = vst [vmem:[%s2073] sm:$0xff] %v2074
  %s2076 = scalar_lea.vmem %s0, 2408
  %v2077 = vld [vmem:[%s2076] sm:$0xff]
  %s2078 = scalar_lea.vmem %s1, 1204
  %s2079 = scalar_lea.vmem %s2078, 4294967292
  %v2080 = vpack.c.bf16 %v2077, %v607
  %2081 = vst [vmem:[%s2079] sm:$0xff] %v2080
  %s2082 = scalar_lea.vmem %s0, 872
  %v2083 = vld [vmem:[%s2082] sm:$0xff]
  %s2084 = scalar_lea.vmem %s1, 1972
  %s2085 = scalar_lea.vmem %s2084, 4294967292
  %v2086 = vpack.c.bf16 %v2083, %v610
  %2087 = vst [vmem:[%s2085] sm:$0xff] %v2086
  %s2088 = scalar_lea.vmem %s0, 3432
  %v2089 = vld [vmem:[%s2088] sm:$0xff]
  %s2090 = scalar_lea.vmem %s1, 692
  %s2091 = scalar_lea.vmem %s2090, 4294967292
  %v2092 = vpack.c.bf16 %v2089, %v613
  %2093 = vst [vmem:[%s2091] sm:$0xff] %v2092
  %s2094 = scalar_lea.vmem %s0, 1896
  %v2095 = vld [vmem:[%s2094] sm:$0xff]
  %s2096 = scalar_lea.vmem %s1, 1460
  %s2097 = scalar_lea.vmem %s2096, 4294967292
  %v2098 = vpack.c.bf16 %v2095, %v616
  %2099 = vst [vmem:[%s2097] sm:$0xff] %v2098
  %s2100 = scalar_lea.vmem %s0, 360
  %v2101 = vld [vmem:[%s2100] sm:$0xff]
  %s2102 = scalar_lea.vmem %s1, 2228
  %s2103 = scalar_lea.vmem %s2102, 4294967292
  %v2104 = vpack.c.bf16 %v2101, %v619
  %2105 = vst [vmem:[%s2103] sm:$0xff] %v2104
  %s2106 = scalar_lea.vmem %s0, 4472
  %v2107 = vld [vmem:[%s2106] sm:$0xff]
  %s2108 = scalar_lea.vmem %s1, 188
  %s2109 = scalar_lea.vmem %s2108, 4294967292
  %v2110 = vpack.c.bf16 %v2107, %v622
  %2111 = vst [vmem:[%s2109] sm:$0xff] %v2110
  %s2112 = scalar_lea.vmem %s0, 2936
  %v2113 = vld [vmem:[%s2112] sm:$0xff]
  %s2114 = scalar_lea.vmem %s1, 956
  %s2115 = scalar_lea.vmem %s2114, 4294967292
  %v2116 = vpack.c.bf16 %v2113, %v625
  %2117 = vst [vmem:[%s2115] sm:$0xff] %v2116
  %s2118 = scalar_lea.vmem %s0, 1400
  %v2119 = vld [vmem:[%s2118] sm:$0xff]
  %s2120 = scalar_lea.vmem %s1, 1724
  %s2121 = scalar_lea.vmem %s2120, 4294967292
  %v2122 = vpack.c.bf16 %v2119, %v628
  %2123 = vst [vmem:[%s2121] sm:$0xff] %v2122
  %s2124 = scalar_lea.vmem %s0, 3960
  %v2125 = vld [vmem:[%s2124] sm:$0xff]
  %s2126 = scalar_lea.vmem %s1, 444
  %s2127 = scalar_lea.vmem %s2126, 4294967292
  %v2128 = vpack.c.bf16 %v2125, %v631
  %2129 = vst [vmem:[%s2127] sm:$0xff] %v2128
  %s2130 = scalar_lea.vmem %s0, 2424
  %v2131 = vld [vmem:[%s2130] sm:$0xff]
  %s2132 = scalar_lea.vmem %s1, 1212
  %s2133 = scalar_lea.vmem %s2132, 4294967292
  %v2134 = vpack.c.bf16 %v2131, %v634
  %2135 = vst [vmem:[%s2133] sm:$0xff] %v2134
  %s2136 = scalar_lea.vmem %s0, 888
  %v2137 = vld [vmem:[%s2136] sm:$0xff]
  %s2138 = scalar_lea.vmem %s1, 1980
  %s2139 = scalar_lea.vmem %s2138, 4294967292
  %v2140 = vpack.c.bf16 %v2137, %v637
  %2141 = vst [vmem:[%s2139] sm:$0xff] %v2140
  %s2142 = scalar_lea.vmem %s0, 3448
  %v2143 = vld [vmem:[%s2142] sm:$0xff]
  %s2144 = scalar_lea.vmem %s1, 700
  %s2145 = scalar_lea.vmem %s2144, 4294967292
  %v2146 = vpack.c.bf16 %v2143, %v640
  %2147 = vst [vmem:[%s2145] sm:$0xff] %v2146
  %s2148 = scalar_lea.vmem %s0, 1912
  %v2149 = vld [vmem:[%s2148] sm:$0xff]
  %s2150 = scalar_lea.vmem %s1, 1468
  %s2151 = scalar_lea.vmem %s2150, 4294967292
  %v2152 = vpack.c.bf16 %v2149, %v643
  %2153 = vst [vmem:[%s2151] sm:$0xff] %v2152
  %s2154 = scalar_lea.vmem %s0, 376
  %v2155 = vld [vmem:[%s2154] sm:$0xff]
  %s2156 = scalar_lea.vmem %s1, 2236
  %s2157 = scalar_lea.vmem %s2156, 4294967292
  %v2158 = vpack.c.bf16 %v2155, %v646
  %2159 = vst [vmem:[%s2157] sm:$0xff] %v2158
  %s2160 = scalar_lea.vmem %s0, 4488
  %v2161 = vld [vmem:[%s2160] sm:$0xff]
  %s2162 = scalar_lea.vmem %s1, 196
  %s2163 = scalar_lea.vmem %s2162, 4294967292
  %v2164 = vpack.c.bf16 %v2161, %v649
  %2165 = vst [vmem:[%s2163] sm:$0xff] %v2164
  %s2166 = scalar_lea.vmem %s0, 2952
  %v2167 = vld [vmem:[%s2166] sm:$0xff]
  %s2168 = scalar_lea.vmem %s1, 964
  %s2169 = scalar_lea.vmem %s2168, 4294967292
  %v2170 = vpack.c.bf16 %v2167, %v652
  %2171 = vst [vmem:[%s2169] sm:$0xff] %v2170
  %s2172 = scalar_lea.vmem %s0, 1416
  %v2173 = vld [vmem:[%s2172] sm:$0xff]
  %s2174 = scalar_lea.vmem %s1, 1732
  %s2175 = scalar_lea.vmem %s2174, 4294967292
  %v2176 = vpack.c.bf16 %v2173, %v655
  %2177 = vst [vmem:[%s2175] sm:$0xff] %v2176
  %s2178 = scalar_lea.vmem %s0, 3976
  %v2179 = vld [vmem:[%s2178] sm:$0xff]
  %s2180 = scalar_lea.vmem %s1, 452
  %s2181 = scalar_lea.vmem %s2180, 4294967292
  %v2182 = vpack.c.bf16 %v2179, %v658
  %2183 = vst [vmem:[%s2181] sm:$0xff] %v2182
  %s2184 = scalar_lea.vmem %s0, 2440
  %v2185 = vld [vmem:[%s2184] sm:$0xff]
  %s2186 = scalar_lea.vmem %s1, 1220
  %s2187 = scalar_lea.vmem %s2186, 4294967292
  %v2188 = vpack.c.bf16 %v2185, %v661
  %2189 = vst [vmem:[%s2187] sm:$0xff] %v2188
  %s2190 = scalar_lea.vmem %s0, 904
  %v2191 = vld [vmem:[%s2190] sm:$0xff]
  %s2192 = scalar_lea.vmem %s1, 1988
  %s2193 = scalar_lea.vmem %s2192, 4294967292
  %v2194 = vpack.c.bf16 %v2191, %v664
  %2195 = vst [vmem:[%s2193] sm:$0xff] %v2194
  %s2196 = scalar_lea.vmem %s0, 3464
  %v2197 = vld [vmem:[%s2196] sm:$0xff]
  %s2198 = scalar_lea.vmem %s1, 708
  %s2199 = scalar_lea.vmem %s2198, 4294967292
  %v2200 = vpack.c.bf16 %v2197, %v667
  %2201 = vst [vmem:[%s2199] sm:$0xff] %v2200
  %s2202 = scalar_lea.vmem %s0, 1928
  %v2203 = vld [vmem:[%s2202] sm:$0xff]
  %s2204 = scalar_lea.vmem %s1, 1476
  %s2205 = scalar_lea.vmem %s2204, 4294967292
  %v2206 = vpack.c.bf16 %v2203, %v670
  %2207 = vst [vmem:[%s2205] sm:$0xff] %v2206
  %s2208 = scalar_lea.vmem %s0, 392
  %v2209 = vld [vmem:[%s2208] sm:$0xff]
  %s2210 = scalar_lea.vmem %s1, 2244
  %s2211 = scalar_lea.vmem %s2210, 4294967292
  %v2212 = vpack.c.bf16 %v2209, %v673
  %2213 = vst [vmem:[%s2211] sm:$0xff] %v2212
  %s2214 = scalar_lea.vmem %s0, 4504
  %v2215 = vld [vmem:[%s2214] sm:$0xff]
  %s2216 = scalar_lea.vmem %s1, 204
  %s2217 = scalar_lea.vmem %s2216, 4294967292
  %v2218 = vpack.c.bf16 %v2215, %v676
  %2219 = vst [vmem:[%s2217] sm:$0xff] %v2218
  %s2220 = scalar_lea.vmem %s0, 2968
  %v2221 = vld [vmem:[%s2220] sm:$0xff]
  %s2222 = scalar_lea.vmem %s1, 972
  %s2223 = scalar_lea.vmem %s2222, 4294967292
  %v2224 = vpack.c.bf16 %v2221, %v679
  %2225 = vst [vmem:[%s2223] sm:$0xff] %v2224
  %s2226 = scalar_lea.vmem %s0, 1432
  %v2227 = vld [vmem:[%s2226] sm:$0xff]
  %s2228 = scalar_lea.vmem %s1, 1740
  %s2229 = scalar_lea.vmem %s2228, 4294967292
  %v2230 = vpack.c.bf16 %v2227, %v682
  %2231 = vst [vmem:[%s2229] sm:$0xff] %v2230
  %s2232 = scalar_lea.vmem %s0, 3992
  %v2233 = vld [vmem:[%s2232] sm:$0xff]
  %s2234 = scalar_lea.vmem %s1, 460
  %s2235 = scalar_lea.vmem %s2234, 4294967292
  %v2236 = vpack.c.bf16 %v2233, %v685
  %2237 = vst [vmem:[%s2235] sm:$0xff] %v2236
  %s2238 = scalar_lea.vmem %s0, 2456
  %v2239 = vld [vmem:[%s2238] sm:$0xff]
  %s2240 = scalar_lea.vmem %s1, 1228
  %s2241 = scalar_lea.vmem %s2240, 4294967292
  %v2242 = vpack.c.bf16 %v2239, %v688
  %2243 = vst [vmem:[%s2241] sm:$0xff] %v2242
  %s2244 = scalar_lea.vmem %s0, 920
  %v2245 = vld [vmem:[%s2244] sm:$0xff]
  %s2246 = scalar_lea.vmem %s1, 1996
  %s2247 = scalar_lea.vmem %s2246, 4294967292
  %v2248 = vpack.c.bf16 %v2245, %v691
  %2249 = vst [vmem:[%s2247] sm:$0xff] %v2248
  %s2250 = scalar_lea.vmem %s0, 3480
  %v2251 = vld [vmem:[%s2250] sm:$0xff]
  %s2252 = scalar_lea.vmem %s1, 716
  %s2253 = scalar_lea.vmem %s2252, 4294967292
  %v2254 = vpack.c.bf16 %v2251, %v694
  %2255 = vst [vmem:[%s2253] sm:$0xff] %v2254
  %s2256 = scalar_lea.vmem %s0, 1944
  %v2257 = vld [vmem:[%s2256] sm:$0xff]
  %s2258 = scalar_lea.vmem %s1, 1484
  %s2259 = scalar_lea.vmem %s2258, 4294967292
  %v2260 = vpack.c.bf16 %v2257, %v697
  %2261 = vst [vmem:[%s2259] sm:$0xff] %v2260
  %s2262 = scalar_lea.vmem %s0, 408
  %v2263 = vld [vmem:[%s2262] sm:$0xff]
  %s2264 = scalar_lea.vmem %s1, 2252
  %s2265 = scalar_lea.vmem %s2264, 4294967292
  %v2266 = vpack.c.bf16 %v2263, %v700
  %2267 = vst [vmem:[%s2265] sm:$0xff] %v2266
  %s2268 = scalar_lea.vmem %s0, 4520
  %v2269 = vld [vmem:[%s2268] sm:$0xff]
  %s2270 = scalar_lea.vmem %s1, 212
  %s2271 = scalar_lea.vmem %s2270, 4294967292
  %v2272 = vpack.c.bf16 %v2269, %v703
  %2273 = vst [vmem:[%s2271] sm:$0xff] %v2272
  %s2274 = scalar_lea.vmem %s0, 2984
  %v2275 = vld [vmem:[%s2274] sm:$0xff]
  %s2276 = scalar_lea.vmem %s1, 980
  %s2277 = scalar_lea.vmem %s2276, 4294967292
  %v2278 = vpack.c.bf16 %v2275, %v706
  %2279 = vst [vmem:[%s2277] sm:$0xff] %v2278
  %s2280 = scalar_lea.vmem %s0, 1448
  %v2281 = vld [vmem:[%s2280] sm:$0xff]
  %s2282 = scalar_lea.vmem %s1, 1748
  %s2283 = scalar_lea.vmem %s2282, 4294967292
  %v2284 = vpack.c.bf16 %v2281, %v709
  %2285 = vst [vmem:[%s2283] sm:$0xff] %v2284
  %s2286 = scalar_lea.vmem %s0, 4008
  %v2287 = vld [vmem:[%s2286] sm:$0xff]
  %s2288 = scalar_lea.vmem %s1, 468
  %s2289 = scalar_lea.vmem %s2288, 4294967292
  %v2290 = vpack.c.bf16 %v2287, %v712
  %2291 = vst [vmem:[%s2289] sm:$0xff] %v2290
  %s2292 = scalar_lea.vmem %s0, 2472
  %v2293 = vld [vmem:[%s2292] sm:$0xff]
  %s2294 = scalar_lea.vmem %s1, 1236
  %s2295 = scalar_lea.vmem %s2294, 4294967292
  %v2296 = vpack.c.bf16 %v2293, %v715
  %2297 = vst [vmem:[%s2295] sm:$0xff] %v2296
  %s2298 = scalar_lea.vmem %s0, 936
  %v2299 = vld [vmem:[%s2298] sm:$0xff]
  %s2300 = scalar_lea.vmem %s1, 2004
  %s2301 = scalar_lea.vmem %s2300, 4294967292
  %v2302 = vpack.c.bf16 %v2299, %v718
  %2303 = vst [vmem:[%s2301] sm:$0xff] %v2302
  %s2304 = scalar_lea.vmem %s0, 3496
  %v2305 = vld [vmem:[%s2304] sm:$0xff]
  %s2306 = scalar_lea.vmem %s1, 724
  %s2307 = scalar_lea.vmem %s2306, 4294967292
  %v2308 = vpack.c.bf16 %v2305, %v721
  %2309 = vst [vmem:[%s2307] sm:$0xff] %v2308
  %s2310 = scalar_lea.vmem %s0, 1960
  %v2311 = vld [vmem:[%s2310] sm:$0xff]
  %s2312 = scalar_lea.vmem %s1, 1492
  %s2313 = scalar_lea.vmem %s2312, 4294967292
  %v2314 = vpack.c.bf16 %v2311, %v724
  %2315 = vst [vmem:[%s2313] sm:$0xff] %v2314
  %s2316 = scalar_lea.vmem %s0, 424
  %v2317 = vld [vmem:[%s2316] sm:$0xff]
  %s2318 = scalar_lea.vmem %s1, 2260
  %s2319 = scalar_lea.vmem %s2318, 4294967292
  %v2320 = vpack.c.bf16 %v2317, %v727
  %2321 = vst [vmem:[%s2319] sm:$0xff] %v2320
  %s2322 = scalar_lea.vmem %s0, 4536
  %v2323 = vld [vmem:[%s2322] sm:$0xff]
  %s2324 = scalar_lea.vmem %s1, 220
  %s2325 = scalar_lea.vmem %s2324, 4294967292
  %v2326 = vpack.c.bf16 %v2323, %v730
  %2327 = vst [vmem:[%s2325] sm:$0xff] %v2326
  %s2328 = scalar_lea.vmem %s0, 3000
  %v2329 = vld [vmem:[%s2328] sm:$0xff]
  %s2330 = scalar_lea.vmem %s1, 988
  %s2331 = scalar_lea.vmem %s2330, 4294967292
  %v2332 = vpack.c.bf16 %v2329, %v733
  %2333 = vst [vmem:[%s2331] sm:$0xff] %v2332
  %s2334 = scalar_lea.vmem %s0, 1464
  %v2335 = vld [vmem:[%s2334] sm:$0xff]
  %s2336 = scalar_lea.vmem %s1, 1756
  %s2337 = scalar_lea.vmem %s2336, 4294967292
  %v2338 = vpack.c.bf16 %v2335, %v736
  %2339 = vst [vmem:[%s2337] sm:$0xff] %v2338
  %s2340 = scalar_lea.vmem %s0, 4024
  %v2341 = vld [vmem:[%s2340] sm:$0xff]
  %s2342 = scalar_lea.vmem %s1, 476
  %s2343 = scalar_lea.vmem %s2342, 4294967292
  %v2344 = vpack.c.bf16 %v2341, %v739
  %2345 = vst [vmem:[%s2343] sm:$0xff] %v2344
  %s2346 = scalar_lea.vmem %s0, 2488
  %v2347 = vld [vmem:[%s2346] sm:$0xff]
  %s2348 = scalar_lea.vmem %s1, 1244
  %s2349 = scalar_lea.vmem %s2348, 4294967292
  %v2350 = vpack.c.bf16 %v2347, %v742
  %2351 = vst [vmem:[%s2349] sm:$0xff] %v2350
  %s2352 = scalar_lea.vmem %s0, 952
  %v2353 = vld [vmem:[%s2352] sm:$0xff]
  %s2354 = scalar_lea.vmem %s1, 2012
  %s2355 = scalar_lea.vmem %s2354, 4294967292
  %v2356 = vpack.c.bf16 %v2353, %v745
  %2357 = vst [vmem:[%s2355] sm:$0xff] %v2356
  %s2358 = scalar_lea.vmem %s0, 3512
  %v2359 = vld [vmem:[%s2358] sm:$0xff]
  %s2360 = scalar_lea.vmem %s1, 732
  %s2361 = scalar_lea.vmem %s2360, 4294967292
  %v2362 = vpack.c.bf16 %v2359, %v748
  %2363 = vst [vmem:[%s2361] sm:$0xff] %v2362
  %s2364 = scalar_lea.vmem %s0, 1976
  %v2365 = vld [vmem:[%s2364] sm:$0xff]
  %s2366 = scalar_lea.vmem %s1, 1500
  %s2367 = scalar_lea.vmem %s2366, 4294967292
  %v2368 = vpack.c.bf16 %v2365, %v751
  %2369 = vst [vmem:[%s2367] sm:$0xff] %v2368
  %s2370 = scalar_lea.vmem %s0, 440
  %v2371 = vld [vmem:[%s2370] sm:$0xff]
  %s2372 = scalar_lea.vmem %s1, 2268
  %s2373 = scalar_lea.vmem %s2372, 4294967292
  %v2374 = vpack.c.bf16 %v2371, %v754
  %2375 = vst [vmem:[%s2373] sm:$0xff] %v2374
  %s2376 = scalar_lea.vmem %s0, 4552
  %v2377 = vld [vmem:[%s2376] sm:$0xff]
  %s2378 = scalar_lea.vmem %s1, 228
  %s2379 = scalar_lea.vmem %s2378, 4294967292
  %v2380 = vpack.c.bf16 %v2377, %v757
  %2381 = vst [vmem:[%s2379] sm:$0xff] %v2380
  %s2382 = scalar_lea.vmem %s0, 3016
  %v2383 = vld [vmem:[%s2382] sm:$0xff]
  %s2384 = scalar_lea.vmem %s1, 996
  %s2385 = scalar_lea.vmem %s2384, 4294967292
  %v2386 = vpack.c.bf16 %v2383, %v760
  %2387 = vst [vmem:[%s2385] sm:$0xff] %v2386
  %s2388 = scalar_lea.vmem %s0, 1480
  %v2389 = vld [vmem:[%s2388] sm:$0xff]
  %s2390 = scalar_lea.vmem %s1, 1764
  %s2391 = scalar_lea.vmem %s2390, 4294967292
  %v2392 = vpack.c.bf16 %v2389, %v763
  %2393 = vst [vmem:[%s2391] sm:$0xff] %v2392
  %s2394 = scalar_lea.vmem %s0, 4040
  %v2395 = vld [vmem:[%s2394] sm:$0xff]
  %s2396 = scalar_lea.vmem %s1, 484
  %s2397 = scalar_lea.vmem %s2396, 4294967292
  %v2398 = vpack.c.bf16 %v2395, %v766
  %2399 = vst [vmem:[%s2397] sm:$0xff] %v2398
  %s2400 = scalar_lea.vmem %s0, 2504
  %v2401 = vld [vmem:[%s2400] sm:$0xff]
  %s2402 = scalar_lea.vmem %s1, 1252
  %s2403 = scalar_lea.vmem %s2402, 4294967292
  %v2404 = vpack.c.bf16 %v2401, %v769
  %2405 = vst [vmem:[%s2403] sm:$0xff] %v2404
  %s2406 = scalar_lea.vmem %s0, 968
  %v2407 = vld [vmem:[%s2406] sm:$0xff]
  %s2408 = scalar_lea.vmem %s1, 2020
  %s2409 = scalar_lea.vmem %s2408, 4294967292
  %v2410 = vpack.c.bf16 %v2407, %v772
  %2411 = vst [vmem:[%s2409] sm:$0xff] %v2410
  %s2412 = scalar_lea.vmem %s0, 3528
  %v2413 = vld [vmem:[%s2412] sm:$0xff]
  %s2414 = scalar_lea.vmem %s1, 740
  %s2415 = scalar_lea.vmem %s2414, 4294967292
  %v2416 = vpack.c.bf16 %v2413, %v775
  %2417 = vst [vmem:[%s2415] sm:$0xff] %v2416
  %s2418 = scalar_lea.vmem %s0, 1992
  %v2419 = vld [vmem:[%s2418] sm:$0xff]
  %s2420 = scalar_lea.vmem %s1, 1508
  %s2421 = scalar_lea.vmem %s2420, 4294967292
  %v2422 = vpack.c.bf16 %v2419, %v778
  %2423 = vst [vmem:[%s2421] sm:$0xff] %v2422
  %s2424 = scalar_lea.vmem %s0, 456
  %v2425 = vld [vmem:[%s2424] sm:$0xff]
  %s2426 = scalar_lea.vmem %s1, 2276
  %s2427 = scalar_lea.vmem %s2426, 4294967292
  %v2428 = vpack.c.bf16 %v2425, %v781
  %2429 = vst [vmem:[%s2427] sm:$0xff] %v2428
  %s2430 = scalar_lea.vmem %s0, 4568
  %v2431 = vld [vmem:[%s2430] sm:$0xff]
  %s2432 = scalar_lea.vmem %s1, 236
  %s2433 = scalar_lea.vmem %s2432, 4294967292
  %v2434 = vpack.c.bf16 %v2431, %v784
  %2435 = vst [vmem:[%s2433] sm:$0xff] %v2434
  %s2436 = scalar_lea.vmem %s0, 3032
  %v2437 = vld [vmem:[%s2436] sm:$0xff]
  %s2438 = scalar_lea.vmem %s1, 1004
  %s2439 = scalar_lea.vmem %s2438, 4294967292
  %v2440 = vpack.c.bf16 %v2437, %v787
  %2441 = vst [vmem:[%s2439] sm:$0xff] %v2440
  %s2442 = scalar_lea.vmem %s0, 1496
  %v2443 = vld [vmem:[%s2442] sm:$0xff]
  %s2444 = scalar_lea.vmem %s1, 1772
  %s2445 = scalar_lea.vmem %s2444, 4294967292
  %v2446 = vpack.c.bf16 %v2443, %v790
  %2447 = vst [vmem:[%s2445] sm:$0xff] %v2446
  %s2448 = scalar_lea.vmem %s0, 4056
  %v2449 = vld [vmem:[%s2448] sm:$0xff]
  %s2450 = scalar_lea.vmem %s1, 492
  %s2451 = scalar_lea.vmem %s2450, 4294967292
  %v2452 = vpack.c.bf16 %v2449, %v793
  %2453 = vst [vmem:[%s2451] sm:$0xff] %v2452
  %s2454 = scalar_lea.vmem %s0, 2520
  %v2455 = vld [vmem:[%s2454] sm:$0xff]
  %s2456 = scalar_lea.vmem %s1, 1260
  %s2457 = scalar_lea.vmem %s2456, 4294967292
  %v2458 = vpack.c.bf16 %v2455, %v796
  %2459 = vst [vmem:[%s2457] sm:$0xff] %v2458
  %s2460 = scalar_lea.vmem %s0, 984
  %v2461 = vld [vmem:[%s2460] sm:$0xff]
  %s2462 = scalar_lea.vmem %s1, 2028
  %s2463 = scalar_lea.vmem %s2462, 4294967292
  %v2464 = vpack.c.bf16 %v2461, %v799
  %2465 = vst [vmem:[%s2463] sm:$0xff] %v2464
  %s2466 = scalar_lea.vmem %s0, 3544
  %v2467 = vld [vmem:[%s2466] sm:$0xff]
  %s2468 = scalar_lea.vmem %s1, 748
  %s2469 = scalar_lea.vmem %s2468, 4294967292
  %v2470 = vpack.c.bf16 %v2467, %v802
  %2471 = vst [vmem:[%s2469] sm:$0xff] %v2470
  %s2472 = scalar_lea.vmem %s0, 2008
  %v2473 = vld [vmem:[%s2472] sm:$0xff]
  %s2474 = scalar_lea.vmem %s1, 1516
  %s2475 = scalar_lea.vmem %s2474, 4294967292
  %v2476 = vpack.c.bf16 %v2473, %v805
  %2477 = vst [vmem:[%s2475] sm:$0xff] %v2476
  %s2478 = scalar_lea.vmem %s0, 472
  %v2479 = vld [vmem:[%s2478] sm:$0xff]
  %s2480 = scalar_lea.vmem %s1, 2284
  %s2481 = scalar_lea.vmem %s2480, 4294967292
  %v2482 = vpack.c.bf16 %v2479, %v808
  %2483 = vst [vmem:[%s2481] sm:$0xff] %v2482
  %s2484 = scalar_lea.vmem %s0, 4584
  %v2485 = vld [vmem:[%s2484] sm:$0xff]
  %s2486 = scalar_lea.vmem %s1, 244
  %s2487 = scalar_lea.vmem %s2486, 4294967292
  %v2488 = vpack.c.bf16 %v2485, %v811
  %2489 = vst [vmem:[%s2487] sm:$0xff] %v2488
  %s2490 = scalar_lea.vmem %s0, 3048
  %v2491 = vld [vmem:[%s2490] sm:$0xff]
  %s2492 = scalar_lea.vmem %s1, 1012
  %s2493 = scalar_lea.vmem %s2492, 4294967292
  %v2494 = vpack.c.bf16 %v2491, %v814
  %2495 = vst [vmem:[%s2493] sm:$0xff] %v2494
  %s2496 = scalar_lea.vmem %s0, 1512
  %v2497 = vld [vmem:[%s2496] sm:$0xff]
  %s2498 = scalar_lea.vmem %s1, 1780
  %s2499 = scalar_lea.vmem %s2498, 4294967292
  %v2500 = vpack.c.bf16 %v2497, %v817
  %2501 = vst [vmem:[%s2499] sm:$0xff] %v2500
  %s2502 = scalar_lea.vmem %s0, 4072
  %v2503 = vld [vmem:[%s2502] sm:$0xff]
  %s2504 = scalar_lea.vmem %s1, 500
  %s2505 = scalar_lea.vmem %s2504, 4294967292
  %v2506 = vpack.c.bf16 %v2503, %v820
  %2507 = vst [vmem:[%s2505] sm:$0xff] %v2506
  %s2508 = scalar_lea.vmem %s0, 2536
  %v2509 = vld [vmem:[%s2508] sm:$0xff]
  %s2510 = scalar_lea.vmem %s1, 1268
  %s2511 = scalar_lea.vmem %s2510, 4294967292
  %v2512 = vpack.c.bf16 %v2509, %v823
  %2513 = vst [vmem:[%s2511] sm:$0xff] %v2512
  %s2514 = scalar_lea.vmem %s0, 1000
  %v2515 = vld [vmem:[%s2514] sm:$0xff]
  %s2516 = scalar_lea.vmem %s1, 2036
  %s2517 = scalar_lea.vmem %s2516, 4294967292
  %v2518 = vpack.c.bf16 %v2515, %v826
  %2519 = vst [vmem:[%s2517] sm:$0xff] %v2518
  %s2520 = scalar_lea.vmem %s0, 3560
  %v2521 = vld [vmem:[%s2520] sm:$0xff]
  %s2522 = scalar_lea.vmem %s1, 756
  %s2523 = scalar_lea.vmem %s2522, 4294967292
  %v2524 = vpack.c.bf16 %v2521, %v829
  %2525 = vst [vmem:[%s2523] sm:$0xff] %v2524
  %s2526 = scalar_lea.vmem %s0, 2024
  %v2527 = vld [vmem:[%s2526] sm:$0xff]
  %s2528 = scalar_lea.vmem %s1, 1524
  %s2529 = scalar_lea.vmem %s2528, 4294967292
  %v2530 = vpack.c.bf16 %v2527, %v832
  %2531 = vst [vmem:[%s2529] sm:$0xff] %v2530
  %s2532 = scalar_lea.vmem %s0, 488
  %v2533 = vld [vmem:[%s2532] sm:$0xff]
  %s2534 = scalar_lea.vmem %s1, 2292
  %s2535 = scalar_lea.vmem %s2534, 4294967292
  %v2536 = vpack.c.bf16 %v2533, %v835
  %2537 = vst [vmem:[%s2535] sm:$0xff] %v2536
  %s2538 = scalar_lea.vmem %s0, 4600
  %v2539 = vld [vmem:[%s2538] sm:$0xff]
  %s2540 = scalar_lea.vmem %s1, 252
  %s2541 = scalar_lea.vmem %s2540, 4294967292
  %v2542 = vpack.c.bf16 %v2539, %v838
  %2543 = vst [vmem:[%s2541] sm:$0xff] %v2542
  %s2544 = scalar_lea.vmem %s0, 3064
  %v2545 = vld [vmem:[%s2544] sm:$0xff]
  %s2546 = scalar_lea.vmem %s1, 1020
  %s2547 = scalar_lea.vmem %s2546, 4294967292
  %v2548 = vpack.c.bf16 %v2545, %v841
  %2549 = vst [vmem:[%s2547] sm:$0xff] %v2548
  %s2550 = scalar_lea.vmem %s0, 1528
  %v2551 = vld [vmem:[%s2550] sm:$0xff]
  %s2552 = scalar_lea.vmem %s1, 1788
  %s2553 = scalar_lea.vmem %s2552, 4294967292
  %v2554 = vpack.c.bf16 %v2551, %v844
  %2555 = vst [vmem:[%s2553] sm:$0xff] %v2554
  %s2556 = scalar_lea.vmem %s0, 4088
  %v2557 = vld [vmem:[%s2556] sm:$0xff]
  %s2558 = scalar_lea.vmem %s1, 508
  %s2559 = scalar_lea.vmem %s2558, 4294967292
  %v2560 = vpack.c.bf16 %v2557, %v847
  %2561 = vst [vmem:[%s2559] sm:$0xff] %v2560
  %s2562 = scalar_lea.vmem %s0, 2552
  %v2563 = vld [vmem:[%s2562] sm:$0xff]
  %s2564 = scalar_lea.vmem %s1, 1276
  %s2565 = scalar_lea.vmem %s2564, 4294967292
  %v2566 = vpack.c.bf16 %v2563, %v850
  %2567 = vst [vmem:[%s2565] sm:$0xff] %v2566
  %s2568 = scalar_lea.vmem %s0, 1016
  %v2569 = vld [vmem:[%s2568] sm:$0xff]
  %s2570 = scalar_lea.vmem %s1, 2044
  %s2571 = scalar_lea.vmem %s2570, 4294967292
  %v2572 = vpack.c.bf16 %v2569, %v853
  %2573 = vst [vmem:[%s2571] sm:$0xff] %v2572
  %s2574 = scalar_lea.vmem %s0, 3576
  %v2575 = vld [vmem:[%s2574] sm:$0xff]
  %s2576 = scalar_lea.vmem %s1, 764
  %s2577 = scalar_lea.vmem %s2576, 4294967292
  %v2578 = vpack.c.bf16 %v2575, %v856
  %2579 = vst [vmem:[%s2577] sm:$0xff] %v2578
  %s2580 = scalar_lea.vmem %s0, 2040
  %v2581 = vld [vmem:[%s2580] sm:$0xff]
  %s2582 = scalar_lea.vmem %s1, 1532
  %s2583 = scalar_lea.vmem %s2582, 4294967292
  %v2584 = vpack.c.bf16 %v2581, %v859
  %2585 = vst [vmem:[%s2583] sm:$0xff] %v2584
  %s2586 = scalar_lea.vmem %s0, 504
  %v2587 = vld [vmem:[%s2586] sm:$0xff]
  %s2588 = scalar_lea.vmem %s1, 2300
  %s2589 = scalar_lea.vmem %s2588, 4294967292
  %v2590 = vpack.c.bf16 %v2587, %v862
  %2591 = vst [vmem:[%s2589] sm:$0xff] %v2590

// kernel: reverse.5
$region0: #{reverse.5}
  #allocation0 [shape = 's32[1]{0}', space=sflag, size = 0x4, scoped, tag = 'scoped memory for reverse.5']
  %s0 = inlined_call_operand.vmem [shape: f32[512,512,3,3], index: 0, kind: input, shape index: {}]
  %s1 = inlined_call_operand.vmem [shape: bf16[512,512,3,3], index: 1, kind: output, shape index: {}]
  loop: start=0, step=1, limit=28
  $region2: #{reverse.5} parent=0 // loop_pre_header
    _
  $region3: #{reverse.5} parent=0 // loop_header
    %s3 = sphi 0, %s7
    %p4 = scmp.ge.s32.totalorder %s3, 28
    %s18 = sphi 0, %s76
    %s19 = sphi 0, %s72
    %s20 = sphi 0, %s68
    %s21 = sphi 0, %s64
    %s22 = sphi 0, %s18
    %s23 = sphi 0, %s19
    %s24 = sphi 0, %s20
    %s25 = sphi 0, %s21
    %s26 = sphi 0, %s22
    %s27 = sphi 0, %s23
    %s28 = sphi 0, %s24
    %s29 = sphi 0, %s25
    %s30 = sphi 0, %s26
    %s31 = sphi 0, %s27
    %s32 = sphi 0, %s28
    %s33 = sphi 0, %s29
    %s34 = sphi 0, %s30
    %s35 = sphi 0, %s31
    %s36 = sphi 0, %s32
    %s37 = sphi 0, %s33
    %s38 = sphi 0, %s34
    %s39 = sphi 0, %s35
    %s40 = sphi 0, %s36
    %s41 = sphi 0, %s37
    %s42 = sphi 0, %s38
    %s43 = sphi 0, %s39
    %s44 = sphi 0, %s40
    %s45 = sphi 0, %s41
    %s46 = sphi 0, %s42
    %s47 = sphi 0, %s43
    %s48 = sphi 0, %s44
    %s49 = sphi 0, %s45
    %s50 = sphi 0, %s46
    %s51 = sphi 0, %s47
    %s52 = sphi 0, %s48
    %s53 = sphi 0, %s49
    %s54 = sphi 0, %s50
    %s55 = sphi 0, %s51
    %s56 = sphi 0, %s52
    %s57 = sphi 0, %s53
    %s58 = sphi 0, %s54
    %s59 = sphi 0, %s55
    %s60 = sphi 0, %s56
    %s61 = sphi 0, %s57
  $region4: #{reverse.5} parent=0 // loop_header_branch
    %6 = sbr.rel (%p4) target = $region8
  $region5: #{reverse.5} parent=0 // loop_body
    %s8 = ssub.s32 %s3, 1
    %s9 = ssub.s32 %s3, 2
    %s10 = ssub.s32 %s3, 3
    %s11 = ssub.s32 %s3, 4
    %s12 = ssub.s32 %s3, 5
    %s13 = ssub.s32 %s3, 6
    %s14 = ssub.s32 %s3, 7
    %s15 = ssub.s32 %s3, 8
    %s16 = ssub.s32 %s3, 9
    %s17 = ssub.s32 %s3, 10
    %s62 = sadd.s32 1, %s21
    %p63 = scmp.ge.s32.totalorder %s62, 1
    %s64 = scalar_select %p63, 0, %s62
    %s65 = sadd.s32 1, %s20
    %s66 = scalar_select %p63, %s65, %s20
    %p67 = scmp.ge.s32.totalorder %s66, 2
    %s68 = scalar_select %p67, 0, %s66
    %s69 = sadd.s32 1, %s19
    %s70 = scalar_select %p67, %s69, %s19
    %p71 = scmp.ge.s32.totalorder %s70, 3
    %s72 = scalar_select %p71, 0, %s70
    %s73 = sadd.s32 1, %s18
    %s74 = scalar_select %p71, %s73, %s18
    %p75 = scmp.ge.s32.totalorder %s74, 3
    %s76 = scalar_select %p75, 0, %s74
    %p77 = scmp.le.s32.totalorder 5, %s3
    %p78 = scmp.lt.s32.totalorder %s3, 23
    %p79 = pnand %p77, %p78
    %p80 = pneg %p79
    // Predicated region
    $region9: #{reverse.5} parent=5 // pred_check
      _
    $region10: #{reverse.5} parent=5 // pred_check_branch
      %82 = sbr.rel (%p79) target = $region12
    $region11: #{reverse.5} parent=5 // pred_region
      %s83 = ssub.s32 %s3, 5
    $region12: #{reverse.5} parent=5 // pred_fallthru
      _
    %p84 = scmp.lt.s32.totalorder %s3, 18
    // Predicated region
    $region13: #{reverse.5} parent=5 // pred_check
      %p85 = pneg %p84
    $region14: #{reverse.5} parent=5 // pred_check_branch
      %87 = sbr.rel (%p85) target = $region16
    $region15: #{reverse.5} parent=5 // pred_region
      %s88 = ssub.s32 2, %s18
      %s89 = ssub.s32 2, %s19
      %s90 = smul.u32 32, %s20
      %s91 = smul.u32 4, %s21
      %p92 = scmp.lt.s32.totalorder %s88, 2
      %s93 = scalar_select %p92, %s88, 2
      %p94 = scmp.lt.s32.totalorder %s89, 2
      %s95 = scalar_select %p94, %s89, 2
      %p96 = scmp.lt.s32.totalorder %s90, 63
      %s97 = scalar_select %p96, %s90, 63
      %p98 = scmp.lt.s32.totalorder %s91, 3
      %s99 = scalar_select %p98, %s91, 3
      %s100 = smul.addr %s97, 4
      %s101 = sadd.s32 %s99, %s100
      %s102 = smul.addr %s95, 256
      %s103 = sadd.s32 %s101, %s102
      %s104 = smul.addr %s93, 768
      %s105 = sadd.s32 %s103, %s104
      %s106 = smul.addr %s105, 8
      %s107 = scalar_lea.vmem %s0, %s106
      %s108 = ssub.s32 2, %s18
      %s109 = ssub.s32 2, %s19
      %s110 = smul.u32 32, %s20
      %s111 = smul.u32 4, %s21
    $region16: #{reverse.5} parent=5 // pred_fallthru
      _
    %p112 = scmp.le.s32.totalorder 5, %s3
    %p113 = scmp.lt.s32.totalorder %s3, 23
    %p114 = pnand %p112, %p113
    %p115 = pneg %p114
    // Predicated region
    $region17: #{reverse.5} parent=5 // pred_check
      _
    $region18: #{reverse.5} parent=5 // pred_check_branch
      %117 = sbr.rel (%p114) target = $region20
    $region19: #{reverse.5} parent=5 // pred_region
      %s118 = ssub.s32 %s3, 5
      %s119 = ssub.s32 2, %s38
      %s120 = ssub.s32 2, %s39
      %s121 = smul.u32 32, %s40
      %s122 = smul.u32 4, %s41
      %p123 = scmp.lt.s32.totalorder %s119, 2
      %s124 = scalar_select %p123, %s119, 2
      %p125 = scmp.lt.s32.totalorder %s120, 2
      %s126 = scalar_select %p125, %s120, 2
      %p127 = scmp.lt.s32.totalorder %s121, 63
      %s128 = scalar_select %p127, %s121, 63
      %p129 = scmp.lt.s32.totalorder %s122, 3
      %s130 = scalar_select %p129, %s122, 3
      %s131 = smul.addr %s128, 4
      %s132 = sadd.s32 %s130, %s131
      %s133 = smul.addr %s126, 256
      %s134 = sadd.s32 %s132, %s133
      %s135 = smul.addr %s124, 768
      %s136 = sadd.s32 %s134, %s135
      %s137 = smul.addr %s136, 8
      %s138 = scalar_lea.vmem %s0, %s137
      %s139 = smul.u32 32, %s40
      %s140 = smul.u32 4, %s41
      %p141 = scmp.lt.s32.totalorder %s38, 2
      %s142 = scalar_select %p141, %s38, 2
      %p143 = scmp.lt.s32.totalorder %s39, 2
      %s144 = scalar_select %p143, %s39, 2
      %p145 = scmp.lt.s32.totalorder %s139, 63
      %s146 = scalar_select %p145, %s139, 63
      %p147 = scmp.lt.s32.totalorder %s140, 3
      %s148 = scalar_select %p147, %s140, 3
      %s149 = smul.addr %s146, 4
      %s150 = sadd.s32 %s148, %s149
      %s151 = smul.addr %s144, 256
      %s152 = sadd.s32 %s150, %s151
      %s153 = smul.addr %s142, 768
      %s154 = sadd.s32 %s152, %s153
      %s155 = smul.addr %s154, 4
      %s156 = scalar_lea.vmem %s1, %s155
      %s157 = smul.u32 32, %s40
      %s158 = smul.u32 4, %s41
      %s159 = ssub.s32 2, %s38
      %s160 = ssub.s32 2, %s39
      %s161 = smul.u32 32, %s40
      %s162 = smul.u32 4, %s41
      %p163 = scmp.lt.s32.totalorder %s159, 2
      %s164 = scalar_select %p163, %s159, 2
      %p165 = scmp.lt.s32.totalorder %s160, 2
      %s166 = scalar_select %p165, %s160, 2
      %p167 = scmp.lt.s32.totalorder %s161, 63
      %s168 = scalar_select %p167, %s161, 63
      %p169 = scmp.lt.s32.totalorder %s162, 3
      %s170 = scalar_select %p169, %s162, 3
      %s171 = smul.addr %s168, 4
      %s172 = sadd.s32 %s170, %s171
      %s173 = smul.addr %s166, 256
      %s174 = sadd.s32 %s172, %s173
      %s175 = smul.addr %s164, 768
      %s176 = sadd.s32 %s174, %s175
      %s177 = smul.addr %s176, 8
      %s178 = scalar_lea.vmem %s0, %s177
      %s179 = ssub.s32 2, %s38
      %s180 = ssub.s32 2, %s39
      %s181 = smul.u32 32, %s40
      %s182 = smul.u32 4, %s41
      %s183 = smul.u32 32, %s40
      %s184 = smul.u32 4, %s41
      %p185 = scmp.lt.s32.totalorder %s38, 2
      %s186 = scalar_select %p185, %s38, 2
      %p187 = scmp.lt.s32.totalorder %s39, 2
      %s188 = scalar_select %p187, %s39, 2
      %p189 = scmp.lt.s32.totalorder %s183, 63
      %s190 = scalar_select %p189, %s183, 63
      %p191 = scmp.lt.s32.totalorder %s184, 3
      %s192 = scalar_select %p191, %s184, 3
      %s193 = smul.addr %s190, 4
      %s194 = sadd.s32 %s192, %s193
      %s195 = smul.addr %s188, 256
      %s196 = sadd.s32 %s194, %s195
      %s197 = smul.addr %s186, 768
      %s198 = sadd.s32 %s196, %s197
      %s199 = smul.addr %s198, 4
      %s200 = scalar_lea.vmem %s1, %s199
      %s201 = smul.u32 32, %s40
      %s202 = smul.u32 4, %s41
      %v203 = vld [vmem:[%s178] sm:$0xff]
      %s204 = scalar_lea.vmem %s178, 32
      %v205 = vld [vmem:[%s204] sm:$0xff]
      %s206 = scalar_lea.vmem %s200, 16
      %s207 = scalar_lea.vmem %s178, 64
      %v208 = vld [vmem:[%s207] sm:$0xff]
      %s209 = scalar_lea.vmem %s200, 32
      %s210 = scalar_lea.vmem %s178, 96
      %v211 = vld [vmem:[%s210] sm:$0xff]
      %s212 = scalar_lea.vmem %s200, 48
      %s213 = scalar_lea.vmem %s178, 128
      %v214 = vld [vmem:[%s213] sm:$0xff]
      %s215 = scalar_lea.vmem %s200, 64
      %s216 = scalar_lea.vmem %s178, 160
      %v217 = vld [vmem:[%s216] sm:$0xff]
      %s218 = scalar_lea.vmem %s200, 80
      %s219 = scalar_lea.vmem %s178, 192
      %v220 = vld [vmem:[%s219] sm:$0xff]
      %s221 = scalar_lea.vmem %s200, 96
      %s222 = scalar_lea.vmem %s178, 224
      %v223 = vld [vmem:[%s222] sm:$0xff]
      %s224 = scalar_lea.vmem %s200, 112
      %s225 = scalar_lea.vmem %s178, 256
      %v226 = vld [vmem:[%s225] sm:$0xff]
      %s227 = scalar_lea.vmem %s200, 128
      %s228 = scalar_lea.vmem %s178, 288
      %v229 = vld [vmem:[%s228] sm:$0xff]
      %s230 = scalar_lea.vmem %s200, 144
      %s231 = scalar_lea.vmem %s178, 320
      %v232 = vld [vmem:[%s231] sm:$0xff]
      %s233 = scalar_lea.vmem %s200, 160
      %s234 = scalar_lea.vmem %s178, 352
      %v235 = vld [vmem:[%s234] sm:$0xff]
      %s236 = scalar_lea.vmem %s200, 176
      %s237 = scalar_lea.vmem %s178, 384
      %v238 = vld [vmem:[%s237] sm:$0xff]
      %s239 = scalar_lea.vmem %s200, 192
      %s240 = scalar_lea.vmem %s178, 416
      %v241 = vld [vmem:[%s240] sm:$0xff]
      %s242 = scalar_lea.vmem %s200, 208
      %s243 = scalar_lea.vmem %s178, 448
      %v244 = vld [vmem:[%s243] sm:$0xff]
      %s245 = scalar_lea.vmem %s200, 224
      %s246 = scalar_lea.vmem %s178, 480
      %v247 = vld [vmem:[%s246] sm:$0xff]
      %s248 = scalar_lea.vmem %s200, 240
      %s249 = scalar_lea.vmem %s178, 512
      %v250 = vld [vmem:[%s249] sm:$0xff]
      %s251 = scalar_lea.vmem %s200, 256
      %s252 = scalar_lea.vmem %s178, 544
      %v253 = vld [vmem:[%s252] sm:$0xff]
      %s254 = scalar_lea.vmem %s200, 272
      %s255 = scalar_lea.vmem %s178, 576
      %v256 = vld [vmem:[%s255] sm:$0xff]
      %s257 = scalar_lea.vmem %s200, 288
      %s258 = scalar_lea.vmem %s178, 608
      %v259 = vld [vmem:[%s258] sm:$0xff]
      %s260 = scalar_lea.vmem %s200, 304
      %s261 = scalar_lea.vmem %s178, 640
      %v262 = vld [vmem:[%s261] sm:$0xff]
      %s263 = scalar_lea.vmem %s200, 320
      %s264 = scalar_lea.vmem %s178, 672
      %v265 = vld [vmem:[%s264] sm:$0xff]
      %s266 = scalar_lea.vmem %s200, 336
      %s267 = scalar_lea.vmem %s178, 704
      %v268 = vld [vmem:[%s267] sm:$0xff]
      %s269 = scalar_lea.vmem %s200, 352
      %s270 = scalar_lea.vmem %s178, 736
      %v271 = vld [vmem:[%s270] sm:$0xff]
      %s272 = scalar_lea.vmem %s200, 368
      %s273 = scalar_lea.vmem %s178, 768
      %v274 = vld [vmem:[%s273] sm:$0xff]
      %s275 = scalar_lea.vmem %s200, 384
      %s276 = scalar_lea.vmem %s178, 800
      %v277 = vld [vmem:[%s276] sm:$0xff]
      %s278 = scalar_lea.vmem %s200, 400
      %s279 = scalar_lea.vmem %s178, 832
      %v280 = vld [vmem:[%s279] sm:$0xff]
      %s281 = scalar_lea.vmem %s200, 416
      %s282 = scalar_lea.vmem %s178, 864
      %v283 = vld [vmem:[%s282] sm:$0xff]
      %s284 = scalar_lea.vmem %s200, 432
      %s285 = scalar_lea.vmem %s178, 896
      %v286 = vld [vmem:[%s285] sm:$0xff]
      %s287 = scalar_lea.vmem %s200, 448
      %s288 = scalar_lea.vmem %s178, 928
      %v289 = vld [vmem:[%s288] sm:$0xff]
      %s290 = scalar_lea.vmem %s200, 464
      %s291 = scalar_lea.vmem %s178, 960
      %v292 = vld [vmem:[%s291] sm:$0xff]
      %s293 = scalar_lea.vmem %s200, 480
      %s294 = scalar_lea.vmem %s178, 992
      %v295 = vld [vmem:[%s294] sm:$0xff]
      %s296 = scalar_lea.vmem %s200, 496
      %s297 = scalar_lea.vmem %s178, 8
      %v298 = vld [vmem:[%s297] sm:$0xff]
      %s299 = scalar_lea.vmem %s200, 4
      %s300 = scalar_lea.vmem %s299, 4294967292
      %v301 = vpack.c.bf16 %v298, %v203
      %302 = vst [vmem:[%s300] sm:$0xff] %v301
      %s303 = scalar_lea.vmem %s178, 40
      %v304 = vld [vmem:[%s303] sm:$0xff]
      %s305 = scalar_lea.vmem %s200, 20
      %s306 = scalar_lea.vmem %s305, 4294967292
      %v307 = vpack.c.bf16 %v304, %v205
      %308 = vst [vmem:[%s306] sm:$0xff] %v307
      %s309 = scalar_lea.vmem %s178, 72
      %v310 = vld [vmem:[%s309] sm:$0xff]
      %s311 = scalar_lea.vmem %s200, 36
      %s312 = scalar_lea.vmem %s311, 4294967292
      %v313 = vpack.c.bf16 %v310, %v208
      %314 = vst [vmem:[%s312] sm:$0xff] %v313
      %s315 = scalar_lea.vmem %s178, 104
      %v316 = vld [vmem:[%s315] sm:$0xff]
      %s317 = scalar_lea.vmem %s200, 52
      %s318 = scalar_lea.vmem %s317, 4294967292
      %v319 = vpack.c.bf16 %v316, %v211
      %320 = vst [vmem:[%s318] sm:$0xff] %v319
      %s321 = scalar_lea.vmem %s178, 136
      %v322 = vld [vmem:[%s321] sm:$0xff]
      %s323 = scalar_lea.vmem %s200, 68
      %s324 = scalar_lea.vmem %s323, 4294967292
      %v325 = vpack.c.bf16 %v322, %v214
      %326 = vst [vmem:[%s324] sm:$0xff] %v325
      %s327 = scalar_lea.vmem %s178, 168
      %v328 = vld [vmem:[%s327] sm:$0xff]
      %s329 = scalar_lea.vmem %s200, 84
      %s330 = scalar_lea.vmem %s329, 4294967292
      %v331 = vpack.c.bf16 %v328, %v217
      %332 = vst [vmem:[%s330] sm:$0xff] %v331
      %s333 = scalar_lea.vmem %s178, 200
      %v334 = vld [vmem:[%s333] sm:$0xff]
      %s335 = scalar_lea.vmem %s200, 100
      %s336 = scalar_lea.vmem %s335, 4294967292
      %v337 = vpack.c.bf16 %v334, %v220
      %338 = vst [vmem:[%s336] sm:$0xff] %v337
      %s339 = scalar_lea.vmem %s178, 232
      %v340 = vld [vmem:[%s339] sm:$0xff]
      %s341 = scalar_lea.vmem %s200, 116
      %s342 = scalar_lea.vmem %s341, 4294967292
      %v343 = vpack.c.bf16 %v340, %v223
      %344 = vst [vmem:[%s342] sm:$0xff] %v343
      %s345 = scalar_lea.vmem %s178, 264
      %v346 = vld [vmem:[%s345] sm:$0xff]
      %s347 = scalar_lea.vmem %s200, 132
      %s348 = scalar_lea.vmem %s347, 4294967292
      %v349 = vpack.c.bf16 %v346, %v226
      %350 = vst [vmem:[%s348] sm:$0xff] %v349
      %s351 = scalar_lea.vmem %s178, 296
      %v352 = vld [vmem:[%s351] sm:$0xff]
      %s353 = scalar_lea.vmem %s200, 148
      %s354 = scalar_lea.vmem %s353, 4294967292
      %v355 = vpack.c.bf16 %v352, %v229
      %356 = vst [vmem:[%s354] sm:$0xff] %v355
      %s357 = scalar_lea.vmem %s178, 328
      %v358 = vld [vmem:[%s357] sm:$0xff]
      %s359 = scalar_lea.vmem %s200, 164
      %s360 = scalar_lea.vmem %s359, 4294967292
      %v361 = vpack.c.bf16 %v358, %v232
      %362 = vst [vmem:[%s360] sm:$0xff] %v361
      %s363 = scalar_lea.vmem %s178, 360
      %v364 = vld [vmem:[%s363] sm:$0xff]
      %s365 = scalar_lea.vmem %s200, 180
      %s366 = scalar_lea.vmem %s365, 4294967292
      %v367 = vpack.c.bf16 %v364, %v235
      %368 = vst [vmem:[%s366] sm:$0xff] %v367
      %s369 = scalar_lea.vmem %s178, 392
      %v370 = vld [vmem:[%s369] sm:$0xff]
      %s371 = scalar_lea.vmem %s200, 196
      %s372 = scalar_lea.vmem %s371, 4294967292
      %v373 = vpack.c.bf16 %v370, %v238
      %374 = vst [vmem:[%s372] sm:$0xff] %v373
      %s375 = scalar_lea.vmem %s178, 424
      %v376 = vld [vmem:[%s375] sm:$0xff]
      %s377 = scalar_lea.vmem %s200, 212
      %s378 = scalar_lea.vmem %s377, 4294967292
      %v379 = vpack.c.bf16 %v376, %v241
      %380 = vst [vmem:[%s378] sm:$0xff] %v379
      %s381 = scalar_lea.vmem %s178, 456
      %v382 = vld [vmem:[%s381] sm:$0xff]
      %s383 = scalar_lea.vmem %s200, 228
      %s384 = scalar_lea.vmem %s383, 4294967292
      %v385 = vpack.c.bf16 %v382, %v244
      %386 = vst [vmem:[%s384] sm:$0xff] %v385
      %s387 = scalar_lea.vmem %s178, 488
      %v388 = vld [vmem:[%s387] sm:$0xff]
      %s389 = scalar_lea.vmem %s200, 244
      %s390 = scalar_lea.vmem %s389, 4294967292
      %v391 = vpack.c.bf16 %v388, %v247
      %392 = vst [vmem:[%s390] sm:$0xff] %v391
      %s393 = scalar_lea.vmem %s178, 520
      %v394 = vld [vmem:[%s393] sm:$0xff]
      %s395 = scalar_lea.vmem %s200, 260
      %s396 = scalar_lea.vmem %s395, 4294967292
      %v397 = vpack.c.bf16 %v394, %v250
      %398 = vst [vmem:[%s396] sm:$0xff] %v397
      %s399 = scalar_lea.vmem %s178, 552
      %v400 = vld [vmem:[%s399] sm:$0xff]
      %s401 = scalar_lea.vmem %s200, 276
      %s402 = scalar_lea.vmem %s401, 4294967292
      %v403 = vpack.c.bf16 %v400, %v253
      %404 = vst [vmem:[%s402] sm:$0xff] %v403
      %s405 = scalar_lea.vmem %s178, 584
      %v406 = vld [vmem:[%s405] sm:$0xff]
      %s407 = scalar_lea.vmem %s200, 292
      %s408 = scalar_lea.vmem %s407, 4294967292
      %v409 = vpack.c.bf16 %v406, %v256
      %410 = vst [vmem:[%s408] sm:$0xff] %v409
      %s411 = scalar_lea.vmem %s178, 616
      %v412 = vld [vmem:[%s411] sm:$0xff]
      %s413 = scalar_lea.vmem %s200, 308
      %s414 = scalar_lea.vmem %s413, 4294967292
      %v415 = vpack.c.bf16 %v412, %v259
      %416 = vst [vmem:[%s414] sm:$0xff] %v415
      %s417 = scalar_lea.vmem %s178, 648
      %v418 = vld [vmem:[%s417] sm:$0xff]
      %s419 = scalar_lea.vmem %s200, 324
      %s420 = scalar_lea.vmem %s419, 4294967292
      %v421 = vpack.c.bf16 %v418, %v262
      %422 = vst [vmem:[%s420] sm:$0xff] %v421
      %s423 = scalar_lea.vmem %s178, 680
      %v424 = vld [vmem:[%s423] sm:$0xff]
      %s425 = scalar_lea.vmem %s200, 340
      %s426 = scalar_lea.vmem %s425, 4294967292
      %v427 = vpack.c.bf16 %v424, %v265
      %428 = vst [vmem:[%s426] sm:$0xff] %v427
      %s429 = scalar_lea.vmem %s178, 712
      %v430 = vld [vmem:[%s429] sm:$0xff]
      %s431 = scalar_lea.vmem %s200, 356
      %s432 = scalar_lea.vmem %s431, 4294967292
      %v433 = vpack.c.bf16 %v430, %v268
      %434 = vst [vmem:[%s432] sm:$0xff] %v433
      %s435 = scalar_lea.vmem %s178, 744
      %v436 = vld [vmem:[%s435] sm:$0xff]
      %s437 = scalar_lea.vmem %s200, 372
      %s438 = scalar_lea.vmem %s437, 4294967292
      %v439 = vpack.c.bf16 %v436, %v271
      %440 = vst [vmem:[%s438] sm:$0xff] %v439
      %s441 = scalar_lea.vmem %s178, 776
      %v442 = vld [vmem:[%s441] sm:$0xff]
      %s443 = scalar_lea.vmem %s200, 388
      %s444 = scalar_lea.vmem %s443, 4294967292
      %v445 = vpack.c.bf16 %v442, %v274
      %446 = vst [vmem:[%s444] sm:$0xff] %v445
      %s447 = scalar_lea.vmem %s178, 808
      %v448 = vld [vmem:[%s447] sm:$0xff]
      %s449 = scalar_lea.vmem %s200, 404
      %s450 = scalar_lea.vmem %s449, 4294967292
      %v451 = vpack.c.bf16 %v448, %v277
      %452 = vst [vmem:[%s450] sm:$0xff] %v451
      %s453 = scalar_lea.vmem %s178, 840
      %v454 = vld [vmem:[%s453] sm:$0xff]
      %s455 = scalar_lea.vmem %s200, 420
      %s456 = scalar_lea.vmem %s455, 4294967292
      %v457 = vpack.c.bf16 %v454, %v280
      %458 = vst [vmem:[%s456] sm:$0xff] %v457
      %s459 = scalar_lea.vmem %s178, 872
      %v460 = vld [vmem:[%s459] sm:$0xff]
      %s461 = scalar_lea.vmem %s200, 436
      %s462 = scalar_lea.vmem %s461, 4294967292
      %v463 = vpack.c.bf16 %v460, %v283
      %464 = vst [vmem:[%s462] sm:$0xff] %v463
      %s465 = scalar_lea.vmem %s178, 904
      %v466 = vld [vmem:[%s465] sm:$0xff]
      %s467 = scalar_lea.vmem %s200, 452
      %s468 = scalar_lea.vmem %s467, 4294967292
      %v469 = vpack.c.bf16 %v466, %v286
      %470 = vst [vmem:[%s468] sm:$0xff] %v469
      %s471 = scalar_lea.vmem %s178, 936
      %v472 = vld [vmem:[%s471] sm:$0xff]
      %s473 = scalar_lea.vmem %s200, 468
      %s474 = scalar_lea.vmem %s473, 4294967292
      %v475 = vpack.c.bf16 %v472, %v289
      %476 = vst [vmem:[%s474] sm:$0xff] %v475
      %s477 = scalar_lea.vmem %s178, 968
      %v478 = vld [vmem:[%s477] sm:$0xff]
      %s479 = scalar_lea.vmem %s200, 484
      %s480 = scalar_lea.vmem %s479, 4294967292
      %v481 = vpack.c.bf16 %v478, %v292
      %482 = vst [vmem:[%s480] sm:$0xff] %v481
      %s483 = scalar_lea.vmem %s178, 1000
      %v484 = vld [vmem:[%s483] sm:$0xff]
      %s485 = scalar_lea.vmem %s200, 500
      %s486 = scalar_lea.vmem %s485, 4294967292
      %v487 = vpack.c.bf16 %v484, %v295
      %488 = vst [vmem:[%s486] sm:$0xff] %v487
      %s489 = scalar_lea.vmem %s178, 16
      %v490 = vld [vmem:[%s489] sm:$0xff]
      %s491 = scalar_lea.vmem %s200, 8
      %s492 = scalar_lea.vmem %s178, 48
      %v493 = vld [vmem:[%s492] sm:$0xff]
      %s494 = scalar_lea.vmem %s200, 24
      %s495 = scalar_lea.vmem %s178, 80
      %v496 = vld [vmem:[%s495] sm:$0xff]
      %s497 = scalar_lea.vmem %s200, 40
      %s498 = scalar_lea.vmem %s178, 112
      %v499 = vld [vmem:[%s498] sm:$0xff]
      %s500 = scalar_lea.vmem %s200, 56
      %s501 = scalar_lea.vmem %s178, 144
      %v502 = vld [vmem:[%s501] sm:$0xff]
      %s503 = scalar_lea.vmem %s200, 72
      %s504 = scalar_lea.vmem %s178, 176
      %v505 = vld [vmem:[%s504] sm:$0xff]
      %s506 = scalar_lea.vmem %s200, 88
      %s507 = scalar_lea.vmem %s178, 208
      %v508 = vld [vmem:[%s507] sm:$0xff]
      %s509 = scalar_lea.vmem %s200, 104
      %s510 = scalar_lea.vmem %s178, 240
      %v511 = vld [vmem:[%s510] sm:$0xff]
      %s512 = scalar_lea.vmem %s200, 120
      %s513 = scalar_lea.vmem %s178, 272
      %v514 = vld [vmem:[%s513] sm:$0xff]
      %s515 = scalar_lea.vmem %s200, 136
      %s516 = scalar_lea.vmem %s178, 304
      %v517 = vld [vmem:[%s516] sm:$0xff]
      %s518 = scalar_lea.vmem %s200, 152
      %s519 = scalar_lea.vmem %s178, 336
      %v520 = vld [vmem:[%s519] sm:$0xff]
      %s521 = scalar_lea.vmem %s200, 168
      %s522 = scalar_lea.vmem %s178, 368
      %v523 = vld [vmem:[%s522] sm:$0xff]
      %s524 = scalar_lea.vmem %s200, 184
      %s525 = scalar_lea.vmem %s178, 400
      %v526 = vld [vmem:[%s525] sm:$0xff]
      %s527 = scalar_lea.vmem %s200, 200
      %s528 = scalar_lea.vmem %s178, 432
      %v529 = vld [vmem:[%s528] sm:$0xff]
      %s530 = scalar_lea.vmem %s200, 216
      %s531 = scalar_lea.vmem %s178, 464
      %v532 = vld [vmem:[%s531] sm:$0xff]
      %s533 = scalar_lea.vmem %s200, 232
      %s534 = scalar_lea.vmem %s178, 496
      %v535 = vld [vmem:[%s534] sm:$0xff]
      %s536 = scalar_lea.vmem %s200, 248
      %s537 = scalar_lea.vmem %s178, 528
      %v538 = vld [vmem:[%s537] sm:$0xff]
      %s539 = scalar_lea.vmem %s200, 264
      %s540 = scalar_lea.vmem %s178, 560
      %v541 = vld [vmem:[%s540] sm:$0xff]
      %s542 = scalar_lea.vmem %s200, 280
      %s543 = scalar_lea.vmem %s178, 592
      %v544 = vld [vmem:[%s543] sm:$0xff]
      %s545 = scalar_lea.vmem %s200, 296
      %s546 = scalar_lea.vmem %s178, 624
      %v547 = vld [vmem:[%s546] sm:$0xff]
      %s548 = scalar_lea.vmem %s200, 312
      %s549 = scalar_lea.vmem %s178, 656
      %v550 = vld [vmem:[%s549] sm:$0xff]
      %s551 = scalar_lea.vmem %s200, 328
      %s552 = scalar_lea.vmem %s178, 688
      %v553 = vld [vmem:[%s552] sm:$0xff]
      %s554 = scalar_lea.vmem %s200, 344
      %s555 = scalar_lea.vmem %s178, 720
      %v556 = vld [vmem:[%s555] sm:$0xff]
      %s557 = scalar_lea.vmem %s200, 360
      %s558 = scalar_lea.vmem %s178, 752
      %v559 = vld [vmem:[%s558] sm:$0xff]
      %s560 = scalar_lea.vmem %s200, 376
      %s561 = scalar_lea.vmem %s178, 784
      %v562 = vld [vmem:[%s561] sm:$0xff]
      %s563 = scalar_lea.vmem %s200, 392
      %s564 = scalar_lea.vmem %s178, 816
      %v565 = vld [vmem:[%s564] sm:$0xff]
      %s566 = scalar_lea.vmem %s200, 408
      %s567 = scalar_lea.vmem %s178, 848
      %v568 = vld [vmem:[%s567] sm:$0xff]
      %s569 = scalar_lea.vmem %s200, 424
      %s570 = scalar_lea.vmem %s178, 880
      %v571 = vld [vmem:[%s570] sm:$0xff]
      %s572 = scalar_lea.vmem %s200, 440
      %s573 = scalar_lea.vmem %s178, 912
      %v574 = vld [vmem:[%s573] sm:$0xff]
      %s575 = scalar_lea.vmem %s200, 456
      %s576 = scalar_lea.vmem %s178, 944
      %v577 = vld [vmem:[%s576] sm:$0xff]
      %s578 = scalar_lea.vmem %s200, 472
      %s579 = scalar_lea.vmem %s178, 976
      %v580 = vld [vmem:[%s579] sm:$0xff]
      %s581 = scalar_lea.vmem %s200, 488
      %s582 = scalar_lea.vmem %s178, 1008
      %v583 = vld [vmem:[%s582] sm:$0xff]
      %s584 = scalar_lea.vmem %s200, 504
      %s585 = scalar_lea.vmem %s178, 24
      %v586 = vld [vmem:[%s585] sm:$0xff]
      %s587 = scalar_lea.vmem %s200, 12
      %s588 = scalar_lea.vmem %s587, 4294967292
      %v589 = vpack.c.bf16 %v586, %v490
      %590 = vst [vmem:[%s588] sm:$0xff] %v589
      %s591 = scalar_lea.vmem %s178, 56
      %v592 = vld [vmem:[%s591] sm:$0xff]
      %s593 = scalar_lea.vmem %s200, 28
      %s594 = scalar_lea.vmem %s593, 4294967292
      %v595 = vpack.c.bf16 %v592, %v493
      %596 = vst [vmem:[%s594] sm:$0xff] %v595
      %s597 = scalar_lea.vmem %s178, 88
      %v598 = vld [vmem:[%s597] sm:$0xff]
      %s599 = scalar_lea.vmem %s200, 44
      %s600 = scalar_lea.vmem %s599, 4294967292
      %v601 = vpack.c.bf16 %v598, %v496
      %602 = vst [vmem:[%s600] sm:$0xff] %v601
      %s603 = scalar_lea.vmem %s178, 120
      %v604 = vld [vmem:[%s603] sm:$0xff]
      %s605 = scalar_lea.vmem %s200, 60
      %s606 = scalar_lea.vmem %s605, 4294967292
      %v607 = vpack.c.bf16 %v604, %v499
      %608 = vst [vmem:[%s606] sm:$0xff] %v607
      %s609 = scalar_lea.vmem %s178, 152
      %v610 = vld [vmem:[%s609] sm:$0xff]
      %s611 = scalar_lea.vmem %s200, 76
      %s612 = scalar_lea.vmem %s611, 4294967292
      %v613 = vpack.c.bf16 %v610, %v502
      %614 = vst [vmem:[%s612] sm:$0xff] %v613
      %s615 = scalar_lea.vmem %s178, 184
      %v616 = vld [vmem:[%s615] sm:$0xff]
      %s617 = scalar_lea.vmem %s200, 92
      %s618 = scalar_lea.vmem %s617, 4294967292
      %v619 = vpack.c.bf16 %v616, %v505
      %620 = vst [vmem:[%s618] sm:$0xff] %v619
      %s621 = scalar_lea.vmem %s178, 216
      %v622 = vld [vmem:[%s621] sm:$0xff]
      %s623 = scalar_lea.vmem %s200, 108
      %s624 = scalar_lea.vmem %s623, 4294967292
      %v625 = vpack.c.bf16 %v622, %v508
      %626 = vst [vmem:[%s624] sm:$0xff] %v625
      %s627 = scalar_lea.vmem %s178, 248
      %v628 = vld [vmem:[%s627] sm:$0xff]
      %s629 = scalar_lea.vmem %s200, 124
      %s630 = scalar_lea.vmem %s629, 4294967292
      %v631 = vpack.c.bf16 %v628, %v511
      %632 = vst [vmem:[%s630] sm:$0xff] %v631
      %s633 = scalar_lea.vmem %s178, 280
      %v634 = vld [vmem:[%s633] sm:$0xff]
      %s635 = scalar_lea.vmem %s200, 140
      %s636 = scalar_lea.vmem %s635, 4294967292
      %v637 = vpack.c.bf16 %v634, %v514
      %638 = vst [vmem:[%s636] sm:$0xff] %v637
      %s639 = scalar_lea.vmem %s178, 312
      %v640 = vld [vmem:[%s639] sm:$0xff]
      %s641 = scalar_lea.vmem %s200, 156
      %s642 = scalar_lea.vmem %s641, 4294967292
      %v643 = vpack.c.bf16 %v640, %v517
      %644 = vst [vmem:[%s642] sm:$0xff] %v643
      %s645 = scalar_lea.vmem %s178, 344
      %v646 = vld [vmem:[%s645] sm:$0xff]
      %s647 = scalar_lea.vmem %s200, 172
      %s648 = scalar_lea.vmem %s647, 4294967292
      %v649 = vpack.c.bf16 %v646, %v520
      %650 = vst [vmem:[%s648] sm:$0xff] %v649
      %s651 = scalar_lea.vmem %s178, 376
      %v652 = vld [vmem:[%s651] sm:$0xff]
      %s653 = scalar_lea.vmem %s200, 188
      %s654 = scalar_lea.vmem %s653, 4294967292
      %v655 = vpack.c.bf16 %v652, %v523
      %656 = vst [vmem:[%s654] sm:$0xff] %v655
      %s657 = scalar_lea.vmem %s178, 408
      %v658 = vld [vmem:[%s657] sm:$0xff]
      %s659 = scalar_lea.vmem %s200, 204
      %s660 = scalar_lea.vmem %s659, 4294967292
      %v661 = vpack.c.bf16 %v658, %v526
      %662 = vst [vmem:[%s660] sm:$0xff] %v661
      %s663 = scalar_lea.vmem %s178, 440
      %v664 = vld [vmem:[%s663] sm:$0xff]
      %s665 = scalar_lea.vmem %s200, 220
      %s666 = scalar_lea.vmem %s665, 4294967292
      %v667 = vpack.c.bf16 %v664, %v529
      %668 = vst [vmem:[%s666] sm:$0xff] %v667
      %s669 = scalar_lea.vmem %s178, 472
      %v670 = vld [vmem:[%s669] sm:$0xff]
      %s671 = scalar_lea.vmem %s200, 236
      %s672 = scalar_lea.vmem %s671, 4294967292
      %v673 = vpack.c.bf16 %v670, %v532
      %674 = vst [vmem:[%s672] sm:$0xff] %v673
      %s675 = scalar_lea.vmem %s178, 504
      %v676 = vld [vmem:[%s675] sm:$0xff]
      %s677 = scalar_lea.vmem %s200, 252
      %s678 = scalar_lea.vmem %s677, 4294967292
      %v679 = vpack.c.bf16 %v676, %v535
      %680 = vst [vmem:[%s678] sm:$0xff] %v679
      %s681 = scalar_lea.vmem %s178, 536
      %v682 = vld [vmem:[%s681] sm:$0xff]
      %s683 = scalar_lea.vmem %s200, 268
      %s684 = scalar_lea.vmem %s683, 4294967292
      %v685 = vpack.c.bf16 %v682, %v538
      %686 = vst [vmem:[%s684] sm:$0xff] %v685
      %s687 = scalar_lea.vmem %s178, 568
      %v688 = vld [vmem:[%s687] sm:$0xff]
      %s689 = scalar_lea.vmem %s200, 284
      %s690 = scalar_lea.vmem %s689, 4294967292
      %v691 = vpack.c.bf16 %v688, %v541
      %692 = vst [vmem:[%s690] sm:$0xff] %v691
      %s693 = scalar_lea.vmem %s178, 600
      %v694 = vld [vmem:[%s693] sm:$0xff]
      %s695 = scalar_lea.vmem %s200, 300
      %s696 = scalar_lea.vmem %s695, 4294967292
      %v697 = vpack.c.bf16 %v694, %v544
      %698 = vst [vmem:[%s696] sm:$0xff] %v697
      %s699 = scalar_lea.vmem %s178, 632
      %v700 = vld [vmem:[%s699] sm:$0xff]
      %s701 = scalar_lea.vmem %s200, 316
      %s702 = scalar_lea.vmem %s701, 4294967292
      %v703 = vpack.c.bf16 %v700, %v547
      %704 = vst [vmem:[%s702] sm:$0xff] %v703
      %s705 = scalar_lea.vmem %s178, 664
      %v706 = vld [vmem:[%s705] sm:$0xff]
      %s707 = scalar_lea.vmem %s200, 332
      %s708 = scalar_lea.vmem %s707, 4294967292
      %v709 = vpack.c.bf16 %v706, %v550
      %710 = vst [vmem:[%s708] sm:$0xff] %v709
      %s711 = scalar_lea.vmem %s178, 696
      %v712 = vld [vmem:[%s711] sm:$0xff]
      %s713 = scalar_lea.vmem %s200, 348
      %s714 = scalar_lea.vmem %s713, 4294967292
      %v715 = vpack.c.bf16 %v712, %v553
      %716 = vst [vmem:[%s714] sm:$0xff] %v715
      %s717 = scalar_lea.vmem %s178, 728
      %v718 = vld [vmem:[%s717] sm:$0xff]
      %s719 = scalar_lea.vmem %s200, 364
      %s720 = scalar_lea.vmem %s719, 4294967292
      %v721 = vpack.c.bf16 %v718, %v556
      %722 = vst [vmem:[%s720] sm:$0xff] %v721
      %s723 = scalar_lea.vmem %s178, 760
      %v724 = vld [vmem:[%s723] sm:$0xff]
      %s725 = scalar_lea.vmem %s200, 380
      %s726 = scalar_lea.vmem %s725, 4294967292
      %v727 = vpack.c.bf16 %v724, %v559
      %728 = vst [vmem:[%s726] sm:$0xff] %v727
      %s729 = scalar_lea.vmem %s178, 792
      %v730 = vld [vmem:[%s729] sm:$0xff]
      %s731 = scalar_lea.vmem %s200, 396
      %s732 = scalar_lea.vmem %s731, 4294967292
      %v733 = vpack.c.bf16 %v730, %v562
      %734 = vst [vmem:[%s732] sm:$0xff] %v733
      %s735 = scalar_lea.vmem %s178, 824
      %v736 = vld [vmem:[%s735] sm:$0xff]
      %s737 = scalar_lea.vmem %s200, 412
      %s738 = scalar_lea.vmem %s737, 4294967292
      %v739 = vpack.c.bf16 %v736, %v565
      %740 = vst [vmem:[%s738] sm:$0xff] %v739
      %s741 = scalar_lea.vmem %s178, 856
      %v742 = vld [vmem:[%s741] sm:$0xff]
      %s743 = scalar_lea.vmem %s200, 428
      %s744 = scalar_lea.vmem %s743, 4294967292
      %v745 = vpack.c.bf16 %v742, %v568
      %746 = vst [vmem:[%s744] sm:$0xff] %v745
      %s747 = scalar_lea.vmem %s178, 888
      %v748 = vld [vmem:[%s747] sm:$0xff]
      %s749 = scalar_lea.vmem %s200, 444
      %s750 = scalar_lea.vmem %s749, 4294967292
      %v751 = vpack.c.bf16 %v748, %v571
      %752 = vst [vmem:[%s750] sm:$0xff] %v751
      %s753 = scalar_lea.vmem %s178, 920
      %v754 = vld [vmem:[%s753] sm:$0xff]
      %s755 = scalar_lea.vmem %s200, 460
      %s756 = scalar_lea.vmem %s755, 4294967292
      %v757 = vpack.c.bf16 %v754, %v574
      %758 = vst [vmem:[%s756] sm:$0xff] %v757
      %s759 = scalar_lea.vmem %s178, 952
      %v760 = vld [vmem:[%s759] sm:$0xff]
      %s761 = scalar_lea.vmem %s200, 476
      %s762 = scalar_lea.vmem %s761, 4294967292
      %v763 = vpack.c.bf16 %v760, %v577
      %764 = vst [vmem:[%s762] sm:$0xff] %v763
      %s765 = scalar_lea.vmem %s178, 984
      %v766 = vld [vmem:[%s765] sm:$0xff]
      %s767 = scalar_lea.vmem %s200, 492
      %s768 = scalar_lea.vmem %s767, 4294967292
      %v769 = vpack.c.bf16 %v766, %v580
      %770 = vst [vmem:[%s768] sm:$0xff] %v769
      %s771 = scalar_lea.vmem %s178, 1016
      %v772 = vld [vmem:[%s771] sm:$0xff]
      %s773 = scalar_lea.vmem %s200, 508
      %s774 = scalar_lea.vmem %s773, 4294967292
      %v775 = vpack.c.bf16 %v772, %v583
      %776 = vst [vmem:[%s774] sm:$0xff] %v775
      %s777 = smul.u32 32, %s40
      %s778 = smul.u32 4, %s41
      %p779 = scmp.lt.s32.totalorder %s38, 2
      %s780 = scalar_select %p779, %s38, 2
      %p781 = scmp.lt.s32.totalorder %s39, 2
      %s782 = scalar_select %p781, %s39, 2
      %p783 = scmp.lt.s32.totalorder %s777, 63
      %s784 = scalar_select %p783, %s777, 63
      %p785 = scmp.lt.s32.totalorder %s778, 3
      %s786 = scalar_select %p785, %s778, 3
      %s787 = smul.addr %s784, 4
      %s788 = sadd.s32 %s786, %s787
      %s789 = smul.addr %s782, 256
      %s790 = sadd.s32 %s788, %s789
      %s791 = smul.addr %s780, 768
      %s792 = sadd.s32 %s790, %s791
      %s793 = smul.addr %s792, 4
      %s794 = scalar_lea.vmem %s1, %s793
      %s795 = smul.u32 32, %s40
      %s796 = smul.u32 4, %s41
    $region20: #{reverse.5} parent=5 // pred_fallthru
      _
    %p797 = scmp.le.s32.totalorder 10, %s3
    // Predicated region
    $region21: #{reverse.5} parent=5 // pred_check
      %p798 = pneg %p797
    $region22: #{reverse.5} parent=5 // pred_check_branch
      %800 = sbr.rel (%p798) target = $region24
    $region23: #{reverse.5} parent=5 // pred_region
      %s801 = ssub.s32 %s3, 10
      %s802 = smul.u32 32, %s60
      %s803 = smul.u32 4, %s61
      %p804 = scmp.lt.s32.totalorder %s58, 2
      %s805 = scalar_select %p804, %s58, 2
      %p806 = scmp.lt.s32.totalorder %s59, 2
      %s807 = scalar_select %p806, %s59, 2
      %p808 = scmp.lt.s32.totalorder %s802, 63
      %s809 = scalar_select %p808, %s802, 63
      %p810 = scmp.lt.s32.totalorder %s803, 3
      %s811 = scalar_select %p810, %s803, 3
      %s812 = smul.addr %s809, 4
      %s813 = sadd.s32 %s811, %s812
      %s814 = smul.addr %s807, 256
      %s815 = sadd.s32 %s813, %s814
      %s816 = smul.addr %s805, 768
      %s817 = sadd.s32 %s815, %s816
      %s818 = smul.addr %s817, 4
      %s819 = scalar_lea.vmem %s1, %s818
    $region24: #{reverse.5} parent=5 // pred_fallthru
      _
  $region6: #{reverse.5} parent=0 // loop_footer
    %s7 = sadd.s32 1, %s3
  $region7: #{reverse.5} parent=0 // loop_footer_branch
    %2 = sbr.rel target = $region3
  $region8: #{reverse.5} parent=0 // loop_exit
    _

// kernel: barlow_twins_forward.1
$region0: #{barlow_twins_forward.1}
  #allocation0 [shape = 'u32[]', space=smem, size = 0x4, offset = 0x4, fixed_abs, tag = 'smem constant byte address 0x4 - core index']
  #allocation1 [shape = 'u32[72,128]{1,0:T(1,128)}', space=vmem, size = 0x9000, scoped, tag = 'internal scratch']
  %s0 = inlined_call_operand.vmem [shape: f32[4,2048], index: 0, kind: input, shape index: {}]
  %s1 = inlined_call_operand.vmem [shape: bf16[2048,256], index: 1, kind: input, shape index: {}]
  %s2 = inlined_call_operand.vmem [shape: f32[1,256], index: 2, kind: input, shape index: {}]
  %s3 = inlined_call_operand.vmem [shape: f32[1,256], index: 3, kind: input, shape index: {}]
  %s4 = inlined_call_operand.vmem [shape: bf16[256,256], index: 4, kind: input, shape index: {}]
  %s5 = inlined_call_operand.vmem [shape: f32[1,256], index: 5, kind: input, shape index: {}]
  %s6 = inlined_call_operand.vmem [shape: f32[1,256], index: 6, kind: input, shape index: {}]
  %s7 = inlined_call_operand.vmem [shape: bf16[256,128], index: 7, kind: input, shape index: {}]
  %s8 = inlined_call_operand.hbm [shape: f32[1,1], index: 8, kind: output, shape index: {}]
  %s9 = sld [smem:[#allocation0]]
  $region42: #{barlow_twins_forward.1} parent=0
    _
  %s11 = ssub.s32 1, %s9
  %s12 = scalar_select 0, %s11, %s9
  $region1: #{barlow_twins_forward.1} parent=0
    #allocation2 [shape = 'u8[512]{0}', space=smem, size = 0x200, scoped, tag = 'output window, operand 0, single buffered']
    #allocation3 [shape = 's32[1]{0}', space=sflag, size = 0x4, scoped, tag = 'scoped memory for barlow_twins_forward.1']
    %13 = vsyncpa [#allocation3], 0
    // Predicated region
    $region2: #{barlow_twins_forward.1} parent=1 // pred_check
      _
    $region3: #{barlow_twins_forward.1} parent=1 // pred_check_branch
      %15 = sbr.rel (0) target = $region5
    $region4: #{barlow_twins_forward.1} parent=1 // pred_region
      _
    $region5: #{barlow_twins_forward.1} parent=1 // pred_fallthru
      _
    // Predicated region
    $region6: #{barlow_twins_forward.1} parent=1 // pred_check
      _
    $region7: #{barlow_twins_forward.1} parent=1 // pred_check_branch
      %17 = sbr.rel (0) target = $region9
    $region8: #{barlow_twins_forward.1} parent=1 // pred_region
      _
    $region9: #{barlow_twins_forward.1} parent=1 // pred_fallthru
      _
    // Predicated region
    $region10: #{barlow_twins_forward.1} parent=1 // pred_check
      _
    $region11: #{barlow_twins_forward.1} parent=1 // pred_check_branch
      %19 = sbr.rel (0) target = $region13
    $region12: #{barlow_twins_forward.1} parent=1 // pred_region
      _
    $region13: #{barlow_twins_forward.1} parent=1 // pred_fallthru
      _
    // Predicated region
    $region14: #{barlow_twins_forward.1} parent=1 // pred_check
      _
    $region15: #{barlow_twins_forward.1} parent=1 // pred_check_branch
      %21 = sbr.rel (0) target = $region17
    $region16: #{barlow_twins_forward.1} parent=1 // pred_region
      _
    $region17: #{barlow_twins_forward.1} parent=1 // pred_fallthru
      _
    // Predicated region
    $region18: #{barlow_twins_forward.1} parent=1 // pred_check
      _
    $region19: #{barlow_twins_forward.1} parent=1 // pred_check_branch
      %23 = sbr.rel (0) target = $region21
    $region20: #{barlow_twins_forward.1} parent=1 // pred_region
      _
    $region21: #{barlow_twins_forward.1} parent=1 // pred_fallthru
      _
    // Predicated region
    $region22: #{barlow_twins_forward.1} parent=1 // pred_check
      _
    $region23: #{barlow_twins_forward.1} parent=1 // pred_check_branch
      %25 = sbr.rel (0) target = $region25
    $region24: #{barlow_twins_forward.1} parent=1 // pred_region
      _
    $region25: #{barlow_twins_forward.1} parent=1 // pred_fallthru
      _
    // Predicated region
    $region26: #{barlow_twins_forward.1} parent=1 // pred_check
      _
    $region27: #{barlow_twins_forward.1} parent=1 // pred_check_branch
      %27 = sbr.rel (0) target = $region29
    $region28: #{barlow_twins_forward.1} parent=1 // pred_region
      _
    $region29: #{barlow_twins_forward.1} parent=1 // pred_fallthru
      _
    // Predicated region
    $region30: #{barlow_twins_forward.1} parent=1 // pred_check
      _
    $region31: #{barlow_twins_forward.1} parent=1 // pred_check_branch
      %29 = sbr.rel (0) target = $region33
    $region32: #{barlow_twins_forward.1} parent=1 // pred_region
      _
    $region33: #{barlow_twins_forward.1} parent=1 // pred_fallthru
      _
    %v30 = vld [vmem:[%s0] sm:$0xff]
    %v31 = vld [vmem:[%s0 + $0x8] sm:$0xff]
    %v32 = vld [vmem:[%s0 + $0x10] sm:$0xff]
    %v33 = vld [vmem:[%s0 + $0x18] sm:$0xff]
    %v34 = vld [vmem:[%s0 + $0x20] sm:$0xff]
    %v35 = vld [vmem:[%s0 + $0x28] sm:$0xff]
    %v36 = vld [vmem:[%s0 + $0x30] sm:$0xff]
    %v37 = vld [vmem:[%s0 + $0x38] sm:$0xff]
    %46 = vst [vmem:[#allocation1] ss:$2 sm:$0xff] %v30
    %s47 = scalar_lea.vmem [#allocation1], 16
    %48 = vst [vmem:[%s47] ss:$2 sm:$0xff] %v31
    %s49 = scalar_lea.vmem [#allocation1], 32
    %50 = vst [vmem:[%s49] ss:$2 sm:$0xff] %v32
    %s51 = scalar_lea.vmem [#allocation1], 48
    %52 = vst [vmem:[%s51] ss:$2 sm:$0xff] %v33
    %v53 = vld.sshfl [vmem:[#allocation1] sm:$0xff pattern:$0x75316420]
    %v54 = vld.sshfl [vmem:[#allocation1 + $0x8] sm:$0xff pattern:$0x75316420]
    %v55 = vld.sshfl [vmem:[#allocation1 + $0x10] sm:$0xff pattern:$0x75316420]
    %v56 = vld.sshfl [vmem:[#allocation1 + $0x18] sm:$0xff pattern:$0x75316420]
    %v57 = vld.sshfl [vmem:[#allocation1 + $0x20] sm:$0xff pattern:$0x75316420]
    %v58 = vld.sshfl [vmem:[#allocation1 + $0x28] sm:$0xff pattern:$0x75316420]
    %v59 = vld.sshfl [vmem:[#allocation1 + $0x30] sm:$0xff pattern:$0x75316420]
    %v60 = vld.sshfl [vmem:[#allocation1 + $0x38] sm:$0xff pattern:$0x75316420]
    %61 = vst [vmem:[#allocation1] ss:$2 sm:$0xff] %v34
    %62 = vst [vmem:[%s47] ss:$2 sm:$0xff] %v35
    %63 = vst [vmem:[%s49] ss:$2 sm:$0xff] %v36
    %64 = vst [vmem:[%s51] ss:$2 sm:$0xff] %v37
    %v65 = vld.sshfl [vmem:[#allocation1] sm:$0xff pattern:$0x75316420]
    %v66 = vld.sshfl [vmem:[#allocation1 + $0x8] sm:$0xff pattern:$0x75316420]
    %v67 = vld.sshfl [vmem:[#allocation1 + $0x10] sm:$0xff pattern:$0x75316420]
    %v68 = vld.sshfl [vmem:[#allocation1 + $0x18] sm:$0xff pattern:$0x75316420]
    %v69 = vld.sshfl [vmem:[#allocation1 + $0x20] sm:$0xff pattern:$0x75316420]
    %v70 = vld.sshfl [vmem:[#allocation1 + $0x28] sm:$0xff pattern:$0x75316420]
    %v71 = vld.sshfl [vmem:[#allocation1 + $0x30] sm:$0xff pattern:$0x75316420]
    %v72 = vld.sshfl [vmem:[#allocation1 + $0x38] sm:$0xff pattern:$0x75316420]
    %v89 = vpack.c.bf16 %v53, %v53
    %v90 = vpack.c.bf16 %v54, %v54
    %v91 = vpack.c.bf16 %v55, %v55
    %v92 = vpack.c.bf16 %v56, %v56
    %v93 = vpack.c.bf16 %v57, %v57
    %v94 = vpack.c.bf16 %v58, %v58
    %v95 = vpack.c.bf16 %v59, %v59
    %v96 = vpack.c.bf16 %v60, %v60
    %v97 = vpack.c.bf16 %v65, %v65
    %v98 = vpack.c.bf16 %v66, %v66
    %v99 = vpack.c.bf16 %v67, %v67
    %v100 = vpack.c.bf16 %v68, %v68
    %v101 = vpack.c.bf16 %v69, %v69
    %v102 = vpack.c.bf16 %v70, %v70
    %v103 = vpack.c.bf16 %v71, %v71
    %v104 = vpack.c.bf16 %v72, %v72
    %v105 = vld [vmem:[%s1] sm:$0xff]
    %v106 = vld [vmem:[%s1 + $0x8] sm:$0xff]
    %v107 = vld [vmem:[%s1 + $0x10] sm:$0xff]
    %v108 = vld [vmem:[%s1 + $0x18] sm:$0xff]
    %v109 = vld [vmem:[%s1 + $0x20] sm:$0xff]
    %v110 = vld [vmem:[%s1 + $0x28] sm:$0xff]
    %v111 = vld [vmem:[%s1 + $0x30] sm:$0xff]
    %v112 = vld [vmem:[%s1 + $0x38] sm:$0xff]
    %v113 = vld [vmem:[%s1 + $0x40] sm:$0xff]
    %v114 = vld [vmem:[%s1 + $0x48] sm:$0xff]
    %v115 = vld [vmem:[%s1 + $0x50] sm:$0xff]
    %v116 = vld [vmem:[%s1 + $0x58] sm:$0xff]
    %v117 = vld [vmem:[%s1 + $0x60] sm:$0xff]
    %v118 = vld [vmem:[%s1 + $0x68] sm:$0xff]
    %v119 = vld [vmem:[%s1 + $0x70] sm:$0xff]
    %v120 = vld [vmem:[%s1 + $0x78] sm:$0xff]
    %v121 = vld [vmem:[%s1 + $0x80] sm:$0xff]
    %v122 = vld [vmem:[%s1 + $0x88] sm:$0xff]
    %v123 = vld [vmem:[%s1 + $0x90] sm:$0xff]
    %v124 = vld [vmem:[%s1 + $0x98] sm:$0xff]
    %v125 = vld [vmem:[%s1 + $0xa0] sm:$0xff]
    %v126 = vld [vmem:[%s1 + $0xa8] sm:$0xff]
    %v127 = vld [vmem:[%s1 + $0xb0] sm:$0xff]
    %v128 = vld [vmem:[%s1 + $0xb8] sm:$0xff]
    %v129 = vld [vmem:[%s1 + $0xc0] sm:$0xff]
    %v130 = vld [vmem:[%s1 + $0xc8] sm:$0xff]
    %v131 = vld [vmem:[%s1 + $0xd0] sm:$0xff]
    %v132 = vld [vmem:[%s1 + $0xd8] sm:$0xff]
    %v133 = vld [vmem:[%s1 + $0xe0] sm:$0xff]
    %v134 = vld [vmem:[%s1 + $0xe8] sm:$0xff]
    %v135 = vld [vmem:[%s1 + $0xf0] sm:$0xff]
    %v136 = vld [vmem:[%s1 + $0xf8] sm:$0xff]
    %v137 = vld [vmem:[%s1 + $0x100] sm:$0xff]
    %v138 = vld [vmem:[%s1 + $0x108] sm:$0xff]
    %v139 = vld [vmem:[%s1 + $0x110] sm:$0xff]
    %v140 = vld [vmem:[%s1 + $0x118] sm:$0xff]
    %v141 = vld [vmem:[%s1 + $0x120] sm:$0xff]
    %v142 = vld [vmem:[%s1 + $0x128] sm:$0xff]
    %v143 = vld [vmem:[%s1 + $0x130] sm:$0xff]
    %v144 = vld [vmem:[%s1 + $0x138] sm:$0xff]
    %v145 = vld [vmem:[%s1 + $0x140] sm:$0xff]
    %v146 = vld [vmem:[%s1 + $0x148] sm:$0xff]
    %v147 = vld [vmem:[%s1 + $0x150] sm:$0xff]
    %v148 = vld [vmem:[%s1 + $0x158] sm:$0xff]
    %v149 = vld [vmem:[%s1 + $0x160] sm:$0xff]
    %v150 = vld [vmem:[%s1 + $0x168] sm:$0xff]
    %v151 = vld [vmem:[%s1 + $0x170] sm:$0xff]
    %v152 = vld [vmem:[%s1 + $0x178] sm:$0xff]
    %v153 = vld [vmem:[%s1 + $0x180] sm:$0xff]
    %v154 = vld [vmem:[%s1 + $0x188] sm:$0xff]
    %v155 = vld [vmem:[%s1 + $0x190] sm:$0xff]
    %v156 = vld [vmem:[%s1 + $0x198] sm:$0xff]
    %v157 = vld [vmem:[%s1 + $0x1a0] sm:$0xff]
    %v158 = vld [vmem:[%s1 + $0x1a8] sm:$0xff]
    %v159 = vld [vmem:[%s1 + $0x1b0] sm:$0xff]
    %v160 = vld [vmem:[%s1 + $0x1b8] sm:$0xff]
    %v161 = vld [vmem:[%s1 + $0x1c0] sm:$0xff]
    %v162 = vld [vmem:[%s1 + $0x1c8] sm:$0xff]
    %v163 = vld [vmem:[%s1 + $0x1d0] sm:$0xff]
    %v164 = vld [vmem:[%s1 + $0x1d8] sm:$0xff]
    %v165 = vld [vmem:[%s1 + $0x1e0] sm:$0xff]
    %v166 = vld [vmem:[%s1 + $0x1e8] sm:$0xff]
    %v167 = vld [vmem:[%s1 + $0x1f0] sm:$0xff]
    %v168 = vld [vmem:[%s1 + $0x1f8] sm:$0xff]
    %v169 = vld [vmem:[%s1 + $0x200] sm:$0xff]
    %v170 = vld [vmem:[%s1 + $0x208] sm:$0xff]
    %v171 = vld [vmem:[%s1 + $0x210] sm:$0xff]
    %v172 = vld [vmem:[%s1 + $0x218] sm:$0xff]
    %v173 = vld [vmem:[%s1 + $0x220] sm:$0xff]
    %v174 = vld [vmem:[%s1 + $0x228] sm:$0xff]
    %v175 = vld [vmem:[%s1 + $0x230] sm:$0xff]
    %v176 = vld [vmem:[%s1 + $0x238] sm:$0xff]
    %v177 = vld [vmem:[%s1 + $0x240] sm:$0xff]
    %v178 = vld [vmem:[%s1 + $0x248] sm:$0xff]
    %v179 = vld [vmem:[%s1 + $0x250] sm:$0xff]
    %v180 = vld [vmem:[%s1 + $0x258] sm:$0xff]
    %v181 = vld [vmem:[%s1 + $0x260] sm:$0xff]
    %v182 = vld [vmem:[%s1 + $0x268] sm:$0xff]
    %v183 = vld [vmem:[%s1 + $0x270] sm:$0xff]
    %v184 = vld [vmem:[%s1 + $0x278] sm:$0xff]
    %v185 = vld [vmem:[%s1 + $0x280] sm:$0xff]
    %v186 = vld [vmem:[%s1 + $0x288] sm:$0xff]
    %v187 = vld [vmem:[%s1 + $0x290] sm:$0xff]
    %v188 = vld [vmem:[%s1 + $0x298] sm:$0xff]
    %v189 = vld [vmem:[%s1 + $0x2a0] sm:$0xff]
    %v190 = vld [vmem:[%s1 + $0x2a8] sm:$0xff]
    %v191 = vld [vmem:[%s1 + $0x2b0] sm:$0xff]
    %v192 = vld [vmem:[%s1 + $0x2b8] sm:$0xff]
    %v193 = vld [vmem:[%s1 + $0x2c0] sm:$0xff]
    %v194 = vld [vmem:[%s1 + $0x2c8] sm:$0xff]
    %v195 = vld [vmem:[%s1 + $0x2d0] sm:$0xff]
    %v196 = vld [vmem:[%s1 + $0x2d8] sm:$0xff]
    %v197 = vld [vmem:[%s1 + $0x2e0] sm:$0xff]
    %v198 = vld [vmem:[%s1 + $0x2e8] sm:$0xff]
    %v199 = vld [vmem:[%s1 + $0x2f0] sm:$0xff]
    %v200 = vld [vmem:[%s1 + $0x2f8] sm:$0xff]
    %v201 = vld [vmem:[%s1 + $0x300] sm:$0xff]
    %v202 = vld [vmem:[%s1 + $0x308] sm:$0xff]
    %v203 = vld [vmem:[%s1 + $0x310] sm:$0xff]
    %v204 = vld [vmem:[%s1 + $0x318] sm:$0xff]
    %v205 = vld [vmem:[%s1 + $0x320] sm:$0xff]
    %v206 = vld [vmem:[%s1 + $0x328] sm:$0xff]
    %v207 = vld [vmem:[%s1 + $0x330] sm:$0xff]
    %v208 = vld [vmem:[%s1 + $0x338] sm:$0xff]
    %v209 = vld [vmem:[%s1 + $0x340] sm:$0xff]
    %v210 = vld [vmem:[%s1 + $0x348] sm:$0xff]
    %v211 = vld [vmem:[%s1 + $0x350] sm:$0xff]
    %v212 = vld [vmem:[%s1 + $0x358] sm:$0xff]
    %v213 = vld [vmem:[%s1 + $0x360] sm:$0xff]
    %v214 = vld [vmem:[%s1 + $0x368] sm:$0xff]
    %v215 = vld [vmem:[%s1 + $0x370] sm:$0xff]
    %v216 = vld [vmem:[%s1 + $0x378] sm:$0xff]
    %v217 = vld [vmem:[%s1 + $0x380] sm:$0xff]
    %v218 = vld [vmem:[%s1 + $0x388] sm:$0xff]
    %v219 = vld [vmem:[%s1 + $0x390] sm:$0xff]
    %v220 = vld [vmem:[%s1 + $0x398] sm:$0xff]
    %v221 = vld [vmem:[%s1 + $0x3a0] sm:$0xff]
    %v222 = vld [vmem:[%s1 + $0x3a8] sm:$0xff]
    %v223 = vld [vmem:[%s1 + $0x3b0] sm:$0xff]
    %v224 = vld [vmem:[%s1 + $0x3b8] sm:$0xff]
    %v225 = vld [vmem:[%s1 + $0x3c0] sm:$0xff]
    %v226 = vld [vmem:[%s1 + $0x3c8] sm:$0xff]
    %v227 = vld [vmem:[%s1 + $0x3d0] sm:$0xff]
    %v228 = vld [vmem:[%s1 + $0x3d8] sm:$0xff]
    %v229 = vld [vmem:[%s1 + $0x3e0] sm:$0xff]
    %v230 = vld [vmem:[%s1 + $0x3e8] sm:$0xff]
    %v231 = vld [vmem:[%s1 + $0x3f0] sm:$0xff]
    %v232 = vld [vmem:[%s1 + $0x3f8] sm:$0xff]
    %v233 = vld [vmem:[%s1 + $0x400] sm:$0xff]
    %v234 = vld [vmem:[%s1 + $0x408] sm:$0xff]
    %v235 = vld [vmem:[%s1 + $0x410] sm:$0xff]
    %v236 = vld [vmem:[%s1 + $0x418] sm:$0xff]
    %v237 = vld [vmem:[%s1 + $0x420] sm:$0xff]
    %v238 = vld [vmem:[%s1 + $0x428] sm:$0xff]
    %v239 = vld [vmem:[%s1 + $0x430] sm:$0xff]
    %v240 = vld [vmem:[%s1 + $0x438] sm:$0xff]
    %v241 = vld [vmem:[%s1 + $0x440] sm:$0xff]
    %v242 = vld [vmem:[%s1 + $0x448] sm:$0xff]
    %v243 = vld [vmem:[%s1 + $0x450] sm:$0xff]
    %v244 = vld [vmem:[%s1 + $0x458] sm:$0xff]
    %v245 = vld [vmem:[%s1 + $0x460] sm:$0xff]
    %v246 = vld [vmem:[%s1 + $0x468] sm:$0xff]
    %v247 = vld [vmem:[%s1 + $0x470] sm:$0xff]
    %v248 = vld [vmem:[%s1 + $0x478] sm:$0xff]
    %v249 = vld [vmem:[%s1 + $0x480] sm:$0xff]
    %v250 = vld [vmem:[%s1 + $0x488] sm:$0xff]
    %v251 = vld [vmem:[%s1 + $0x490] sm:$0xff]
    %v252 = vld [vmem:[%s1 + $0x498] sm:$0xff]
    %v253 = vld [vmem:[%s1 + $0x4a0] sm:$0xff]
    %v254 = vld [vmem:[%s1 + $0x4a8] sm:$0xff]
    %v255 = vld [vmem:[%s1 + $0x4b0] sm:$0xff]
    %v256 = vld [vmem:[%s1 + $0x4b8] sm:$0xff]
    %v257 = vld [vmem:[%s1 + $0x4c0] sm:$0xff]
    %v258 = vld [vmem:[%s1 + $0x4c8] sm:$0xff]
    %v259 = vld [vmem:[%s1 + $0x4d0] sm:$0xff]
    %v260 = vld [vmem:[%s1 + $0x4d8] sm:$0xff]
    %v261 = vld [vmem:[%s1 + $0x4e0] sm:$0xff]
    %v262 = vld [vmem:[%s1 + $0x4e8] sm:$0xff]
    %v263 = vld [vmem:[%s1 + $0x4f0] sm:$0xff]
    %v264 = vld [vmem:[%s1 + $0x4f8] sm:$0xff]
    %v265 = vld [vmem:[%s1 + $0x500] sm:$0xff]
    %v266 = vld [vmem:[%s1 + $0x508] sm:$0xff]
    %v267 = vld [vmem:[%s1 + $0x510] sm:$0xff]
    %v268 = vld [vmem:[%s1 + $0x518] sm:$0xff]
    %v269 = vld [vmem:[%s1 + $0x520] sm:$0xff]
    %v270 = vld [vmem:[%s1 + $0x528] sm:$0xff]
    %v271 = vld [vmem:[%s1 + $0x530] sm:$0xff]
    %v272 = vld [vmem:[%s1 + $0x538] sm:$0xff]
    %v273 = vld [vmem:[%s1 + $0x540] sm:$0xff]
    %v274 = vld [vmem:[%s1 + $0x548] sm:$0xff]
    %v275 = vld [vmem:[%s1 + $0x550] sm:$0xff]
    %v276 = vld [vmem:[%s1 + $0x558] sm:$0xff]
    %v277 = vld [vmem:[%s1 + $0x560] sm:$0xff]
    %v278 = vld [vmem:[%s1 + $0x568] sm:$0xff]
    %v279 = vld [vmem:[%s1 + $0x570] sm:$0xff]
    %v280 = vld [vmem:[%s1 + $0x578] sm:$0xff]
    %v281 = vld [vmem:[%s1 + $0x580] sm:$0xff]
    %v282 = vld [vmem:[%s1 + $0x588] sm:$0xff]
    %v283 = vld [vmem:[%s1 + $0x590] sm:$0xff]
    %v284 = vld [vmem:[%s1 + $0x598] sm:$0xff]
    %v285 = vld [vmem:[%s1 + $0x5a0] sm:$0xff]
    %v286 = vld [vmem:[%s1 + $0x5a8] sm:$0xff]
    %v287 = vld [vmem:[%s1 + $0x5b0] sm:$0xff]
    %v288 = vld [vmem:[%s1 + $0x5b8] sm:$0xff]
    %v289 = vld [vmem:[%s1 + $0x5c0] sm:$0xff]
    %v290 = vld [vmem:[%s1 + $0x5c8] sm:$0xff]
    %v291 = vld [vmem:[%s1 + $0x5d0] sm:$0xff]
    %v292 = vld [vmem:[%s1 + $0x5d8] sm:$0xff]
    %v293 = vld [vmem:[%s1 + $0x5e0] sm:$0xff]
    %v294 = vld [vmem:[%s1 + $0x5e8] sm:$0xff]
    %v295 = vld [vmem:[%s1 + $0x5f0] sm:$0xff]
    %v296 = vld [vmem:[%s1 + $0x5f8] sm:$0xff]
    %v297 = vld [vmem:[%s1 + $0x600] sm:$0xff]
    %v298 = vld [vmem:[%s1 + $0x608] sm:$0xff]
    %v299 = vld [vmem:[%s1 + $0x610] sm:$0xff]
    %v300 = vld [vmem:[%s1 + $0x618] sm:$0xff]
    %v301 = vld [vmem:[%s1 + $0x620] sm:$0xff]
    %v302 = vld [vmem:[%s1 + $0x628] sm:$0xff]
    %v303 = vld [vmem:[%s1 + $0x630] sm:$0xff]
    %v304 = vld [vmem:[%s1 + $0x638] sm:$0xff]
    %v305 = vld [vmem:[%s1 + $0x640] sm:$0xff]
    %v306 = vld [vmem:[%s1 + $0x648] sm:$0xff]
    %v307 = vld [vmem:[%s1 + $0x650] sm:$0xff]
    %v308 = vld [vmem:[%s1 + $0x658] sm:$0xff]
    %v309 = vld [vmem:[%s1 + $0x660] sm:$0xff]
    %v310 = vld [vmem:[%s1 + $0x668] sm:$0xff]
    %v311 = vld [vmem:[%s1 + $0x670] sm:$0xff]
    %v312 = vld [vmem:[%s1 + $0x678] sm:$0xff]
    %v313 = vld [vmem:[%s1 + $0x680] sm:$0xff]
    %v314 = vld [vmem:[%s1 + $0x688] sm:$0xff]
    %v315 = vld [vmem:[%s1 + $0x690] sm:$0xff]
    %v316 = vld [vmem:[%s1 + $0x698] sm:$0xff]
    %v317 = vld [vmem:[%s1 + $0x6a0] sm:$0xff]
    %v318 = vld [vmem:[%s1 + $0x6a8] sm:$0xff]
    %v319 = vld [vmem:[%s1 + $0x6b0] sm:$0xff]
    %v320 = vld [vmem:[%s1 + $0x6b8] sm:$0xff]
    %v321 = vld [vmem:[%s1 + $0x6c0] sm:$0xff]
    %v322 = vld [vmem:[%s1 + $0x6c8] sm:$0xff]
    %v323 = vld [vmem:[%s1 + $0x6d0] sm:$0xff]
    %v324 = vld [vmem:[%s1 + $0x6d8] sm:$0xff]
    %v325 = vld [vmem:[%s1 + $0x6e0] sm:$0xff]
    %v326 = vld [vmem:[%s1 + $0x6e8] sm:$0xff]
    %v327 = vld [vmem:[%s1 + $0x6f0] sm:$0xff]
    %v328 = vld [vmem:[%s1 + $0x6f8] sm:$0xff]
    %v329 = vld [vmem:[%s1 + $0x700] sm:$0xff]
    %v330 = vld [vmem:[%s1 + $0x708] sm:$0xff]
    %v331 = vld [vmem:[%s1 + $0x710] sm:$0xff]
    %v332 = vld [vmem:[%s1 + $0x718] sm:$0xff]
    %v333 = vld [vmem:[%s1 + $0x720] sm:$0xff]
    %v334 = vld [vmem:[%s1 + $0x728] sm:$0xff]
    %v335 = vld [vmem:[%s1 + $0x730] sm:$0xff]
    %v336 = vld [vmem:[%s1 + $0x738] sm:$0xff]
    %v337 = vld [vmem:[%s1 + $0x740] sm:$0xff]
    %v338 = vld [vmem:[%s1 + $0x748] sm:$0xff]
    %v339 = vld [vmem:[%s1 + $0x750] sm:$0xff]
    %v340 = vld [vmem:[%s1 + $0x758] sm:$0xff]
    %v341 = vld [vmem:[%s1 + $0x760] sm:$0xff]
    %v342 = vld [vmem:[%s1 + $0x768] sm:$0xff]
    %v343 = vld [vmem:[%s1 + $0x770] sm:$0xff]
    %v344 = vld [vmem:[%s1 + $0x778] sm:$0xff]
    %v345 = vld [vmem:[%s1 + $0x780] sm:$0xff]
    %v346 = vld [vmem:[%s1 + $0x788] sm:$0xff]
    %v347 = vld [vmem:[%s1 + $0x790] sm:$0xff]
    %v348 = vld [vmem:[%s1 + $0x798] sm:$0xff]
    %v349 = vld [vmem:[%s1 + $0x7a0] sm:$0xff]
    %v350 = vld [vmem:[%s1 + $0x7a8] sm:$0xff]
    %v351 = vld [vmem:[%s1 + $0x7b0] sm:$0xff]
    %v352 = vld [vmem:[%s1 + $0x7b8] sm:$0xff]
    %v353 = vld [vmem:[%s1 + $0x7c0] sm:$0xff]
    %v354 = vld [vmem:[%s1 + $0x7c8] sm:$0xff]
    %v355 = vld [vmem:[%s1 + $0x7d0] sm:$0xff]
    %v356 = vld [vmem:[%s1 + $0x7d8] sm:$0xff]
    %v357 = vld [vmem:[%s1 + $0x7e0] sm:$0xff]
    %v358 = vld [vmem:[%s1 + $0x7e8] sm:$0xff]
    %v359 = vld [vmem:[%s1 + $0x7f0] sm:$0xff]
    %v360 = vld [vmem:[%s1 + $0x7f8] sm:$0xff]
    %v617 = vunpack.c.l.b16 %v105
    %v618 = vunpack.c.h.b16 %v105
    %v619 = vunpack.c.l.b16 %v106
    %v620 = vunpack.c.h.b16 %v106
    %v621 = vunpack.c.l.b16 %v107
    %v622 = vunpack.c.h.b16 %v107
    %v623 = vunpack.c.l.b16 %v108
    %v624 = vunpack.c.h.b16 %v108
    %v625 = vunpack.c.l.b16 %v109
    %v626 = vunpack.c.h.b16 %v109
    %v627 = vunpack.c.l.b16 %v110
    %v628 = vunpack.c.h.b16 %v110
    %v629 = vunpack.c.l.b16 %v111
    %v630 = vunpack.c.h.b16 %v111
    %v631 = vunpack.c.l.b16 %v112
    %v632 = vunpack.c.h.b16 %v112
    %v633 = vunpack.c.l.b16 %v113
    %v634 = vunpack.c.h.b16 %v113
    %v635 = vunpack.c.l.b16 %v114
    %v636 = vunpack.c.h.b16 %v114
    %v637 = vunpack.c.l.b16 %v115
    %v638 = vunpack.c.h.b16 %v115
    %v639 = vunpack.c.l.b16 %v116
    %v640 = vunpack.c.h.b16 %v116
    %v641 = vunpack.c.l.b16 %v117
    %v642 = vunpack.c.h.b16 %v117
    %v643 = vunpack.c.l.b16 %v118
    %v644 = vunpack.c.h.b16 %v118
    %v645 = vunpack.c.l.b16 %v119
    %v646 = vunpack.c.h.b16 %v119
    %v647 = vunpack.c.l.b16 %v120
    %v648 = vunpack.c.h.b16 %v120
    %v649 = vunpack.c.l.b16 %v121
    %v650 = vunpack.c.h.b16 %v121
    %v651 = vunpack.c.l.b16 %v122
    %v652 = vunpack.c.h.b16 %v122
    %v653 = vunpack.c.l.b16 %v123
    %v654 = vunpack.c.h.b16 %v123
    %v655 = vunpack.c.l.b16 %v124
    %v656 = vunpack.c.h.b16 %v124
    %v657 = vunpack.c.l.b16 %v125
    %v658 = vunpack.c.h.b16 %v125
    %v659 = vunpack.c.l.b16 %v126
    %v660 = vunpack.c.h.b16 %v126
    %v661 = vunpack.c.l.b16 %v127
    %v662 = vunpack.c.h.b16 %v127
    %v663 = vunpack.c.l.b16 %v128
    %v664 = vunpack.c.h.b16 %v128
    %v665 = vunpack.c.l.b16 %v129
    %v666 = vunpack.c.h.b16 %v129
    %v667 = vunpack.c.l.b16 %v130
    %v668 = vunpack.c.h.b16 %v130
    %v669 = vunpack.c.l.b16 %v131
    %v670 = vunpack.c.h.b16 %v131
    %v671 = vunpack.c.l.b16 %v132
    %v672 = vunpack.c.h.b16 %v132
    %v673 = vunpack.c.l.b16 %v133
    %v674 = vunpack.c.h.b16 %v133
    %v675 = vunpack.c.l.b16 %v134
    %v676 = vunpack.c.h.b16 %v134
    %v677 = vunpack.c.l.b16 %v135
    %v678 = vunpack.c.h.b16 %v135
    %v679 = vunpack.c.l.b16 %v136
    %v680 = vunpack.c.h.b16 %v136
    %v681 = vunpack.c.l.b16 %v137
    %v682 = vunpack.c.h.b16 %v137
    %v683 = vunpack.c.l.b16 %v138
    %v684 = vunpack.c.h.b16 %v138
    %v685 = vunpack.c.l.b16 %v139
    %v686 = vunpack.c.h.b16 %v139
    %v687 = vunpack.c.l.b16 %v140
    %v688 = vunpack.c.h.b16 %v140
    %v689 = vunpack.c.l.b16 %v141
    %v690 = vunpack.c.h.b16 %v141
    %v691 = vunpack.c.l.b16 %v142
    %v692 = vunpack.c.h.b16 %v142
    %v693 = vunpack.c.l.b16 %v143
    %v694 = vunpack.c.h.b16 %v143
    %v695 = vunpack.c.l.b16 %v144
    %v696 = vunpack.c.h.b16 %v144
    %v697 = vunpack.c.l.b16 %v145
    %v698 = vunpack.c.h.b16 %v145
    %v699 = vunpack.c.l.b16 %v146
    %v700 = vunpack.c.h.b16 %v146
    %v701 = vunpack.c.l.b16 %v147
    %v702 = vunpack.c.h.b16 %v147
    %v703 = vunpack.c.l.b16 %v148
    %v704 = vunpack.c.h.b16 %v148
    %v705 = vunpack.c.l.b16 %v149
    %v706 = vunpack.c.h.b16 %v149
    %v707 = vunpack.c.l.b16 %v150
    %v708 = vunpack.c.h.b16 %v150
    %v709 = vunpack.c.l.b16 %v151
    %v710 = vunpack.c.h.b16 %v151
    %v711 = vunpack.c.l.b16 %v152
    %v712 = vunpack.c.h.b16 %v152
    %v713 = vunpack.c.l.b16 %v153
    %v714 = vunpack.c.h.b16 %v153
    %v715 = vunpack.c.l.b16 %v154
    %v716 = vunpack.c.h.b16 %v154
    %v717 = vunpack.c.l.b16 %v155
    %v718 = vunpack.c.h.b16 %v155
    %v719 = vunpack.c.l.b16 %v156
    %v720 = vunpack.c.h.b16 %v156
    %v721 = vunpack.c.l.b16 %v157
    %v722 = vunpack.c.h.b16 %v157
    %v723 = vunpack.c.l.b16 %v158
    %v724 = vunpack.c.h.b16 %v158
    %v725 = vunpack.c.l.b16 %v159
    %v726 = vunpack.c.h.b16 %v159
    %v727 = vunpack.c.l.b16 %v160
    %v728 = vunpack.c.h.b16 %v160
    %v729 = vunpack.c.l.b16 %v161
    %v730 = vunpack.c.h.b16 %v161
    %v731 = vunpack.c.l.b16 %v162
    %v732 = vunpack.c.h.b16 %v162
    %v733 = vunpack.c.l.b16 %v163
    %v734 = vunpack.c.h.b16 %v163
    %v735 = vunpack.c.l.b16 %v164
    %v736 = vunpack.c.h.b16 %v164
    %v737 = vunpack.c.l.b16 %v165
    %v738 = vunpack.c.h.b16 %v165
    %v739 = vunpack.c.l.b16 %v166
    %v740 = vunpack.c.h.b16 %v166
    %v741 = vunpack.c.l.b16 %v167
    %v742 = vunpack.c.h.b16 %v167
    %v743 = vunpack.c.l.b16 %v168
    %v744 = vunpack.c.h.b16 %v168
    %v745 = vunpack.c.l.b16 %v169
    %v746 = vunpack.c.h.b16 %v169
    %v747 = vunpack.c.l.b16 %v170
    %v748 = vunpack.c.h.b16 %v170
    %v749 = vunpack.c.l.b16 %v171
    %v750 = vunpack.c.h.b16 %v171
    %v751 = vunpack.c.l.b16 %v172
    %v752 = vunpack.c.h.b16 %v172
    %v753 = vunpack.c.l.b16 %v173
    %v754 = vunpack.c.h.b16 %v173
    %v755 = vunpack.c.l.b16 %v174
    %v756 = vunpack.c.h.b16 %v174
    %v757 = vunpack.c.l.b16 %v175
    %v758 = vunpack.c.h.b16 %v175
    %v759 = vunpack.c.l.b16 %v176
    %v760 = vunpack.c.h.b16 %v176
    %v761 = vunpack.c.l.b16 %v177
    %v762 = vunpack.c.h.b16 %v177
    %v763 = vunpack.c.l.b16 %v178
    %v764 = vunpack.c.h.b16 %v178
    %v765 = vunpack.c.l.b16 %v179
    %v766 = vunpack.c.h.b16 %v179
    %v767 = vunpack.c.l.b16 %v180
    %v768 = vunpack.c.h.b16 %v180
    %v769 = vunpack.c.l.b16 %v181
    %v770 = vunpack.c.h.b16 %v181
    %v771 = vunpack.c.l.b16 %v182
    %v772 = vunpack.c.h.b16 %v182
    %v773 = vunpack.c.l.b16 %v183
    %v774 = vunpack.c.h.b16 %v183
    %v775 = vunpack.c.l.b16 %v184
    %v776 = vunpack.c.h.b16 %v184
    %v777 = vunpack.c.l.b16 %v185
    %v778 = vunpack.c.h.b16 %v185
    %v779 = vunpack.c.l.b16 %v186
    %v780 = vunpack.c.h.b16 %v186
    %v781 = vunpack.c.l.b16 %v187
    %v782 = vunpack.c.h.b16 %v187
    %v783 = vunpack.c.l.b16 %v188
    %v784 = vunpack.c.h.b16 %v188
    %v785 = vunpack.c.l.b16 %v189
    %v786 = vunpack.c.h.b16 %v189
    %v787 = vunpack.c.l.b16 %v190
    %v788 = vunpack.c.h.b16 %v190
    %v789 = vunpack.c.l.b16 %v191
    %v790 = vunpack.c.h.b16 %v191
    %v791 = vunpack.c.l.b16 %v192
    %v792 = vunpack.c.h.b16 %v192
    %v793 = vunpack.c.l.b16 %v193
    %v794 = vunpack.c.h.b16 %v193
    %v795 = vunpack.c.l.b16 %v194
    %v796 = vunpack.c.h.b16 %v194
    %v797 = vunpack.c.l.b16 %v195
    %v798 = vunpack.c.h.b16 %v195
    %v799 = vunpack.c.l.b16 %v196
    %v800 = vunpack.c.h.b16 %v196
    %v801 = vunpack.c.l.b16 %v197
    %v802 = vunpack.c.h.b16 %v197
    %v803 = vunpack.c.l.b16 %v198
    %v804 = vunpack.c.h.b16 %v198
    %v805 = vunpack.c.l.b16 %v199
    %v806 = vunpack.c.h.b16 %v199
    %v807 = vunpack.c.l.b16 %v200
    %v808 = vunpack.c.h.b16 %v200
    %v809 = vunpack.c.l.b16 %v201
    %v810 = vunpack.c.h.b16 %v201
    %v811 = vunpack.c.l.b16 %v202
    %v812 = vunpack.c.h.b16 %v202
    %v813 = vunpack.c.l.b16 %v203
    %v814 = vunpack.c.h.b16 %v203
    %v815 = vunpack.c.l.b16 %v204
    %v816 = vunpack.c.h.b16 %v204
    %v817 = vunpack.c.l.b16 %v205
    %v818 = vunpack.c.h.b16 %v205
    %v819 = vunpack.c.l.b16 %v206
    %v820 = vunpack.c.h.b16 %v206
    %v821 = vunpack.c.l.b16 %v207
    %v822 = vunpack.c.h.b16 %v207
    %v823 = vunpack.c.l.b16 %v208
    %v824 = vunpack.c.h.b16 %v208
    %v825 = vunpack.c.l.b16 %v209
    %v826 = vunpack.c.h.b16 %v209
    %v827 = vunpack.c.l.b16 %v210
    %v828 = vunpack.c.h.b16 %v210
    %v829 = vunpack.c.l.b16 %v211
    %v830 = vunpack.c.h.b16 %v211
    %v831 = vunpack.c.l.b16 %v212
    %v832 = vunpack.c.h.b16 %v212
    %v833 = vunpack.c.l.b16 %v213
    %v834 = vunpack.c.h.b16 %v213
    %v835 = vunpack.c.l.b16 %v214
    %v836 = vunpack.c.h.b16 %v214
    %v837 = vunpack.c.l.b16 %v215
    %v838 = vunpack.c.h.b16 %v215
    %v839 = vunpack.c.l.b16 %v216
    %v840 = vunpack.c.h.b16 %v216
    %v841 = vunpack.c.l.b16 %v217
    %v842 = vunpack.c.h.b16 %v217
    %v843 = vunpack.c.l.b16 %v218
    %v844 = vunpack.c.h.b16 %v218
    %v845 = vunpack.c.l.b16 %v219
    %v846 = vunpack.c.h.b16 %v219
    %v847 = vunpack.c.l.b16 %v220
    %v848 = vunpack.c.h.b16 %v220
    %v849 = vunpack.c.l.b16 %v221
    %v850 = vunpack.c.h.b16 %v221
    %v851 = vunpack.c.l.b16 %v222
    %v852 = vunpack.c.h.b16 %v222
    %v853 = vunpack.c.l.b16 %v223
    %v854 = vunpack.c.h.b16 %v223
    %v855 = vunpack.c.l.b16 %v224
    %v856 = vunpack.c.h.b16 %v224
    %v857 = vunpack.c.l.b16 %v225
    %v858 = vunpack.c.h.b16 %v225
    %v859 = vunpack.c.l.b16 %v226
    %v860 = vunpack.c.h.b16 %v226
    %v861 = vunpack.c.l.b16 %v227
    %v862 = vunpack.c.h.b16 %v227
    %v863 = vunpack.c.l.b16 %v228
    %v864 = vunpack.c.h.b16 %v228
    %v865 = vunpack.c.l.b16 %v229
    %v866 = vunpack.c.h.b16 %v229
    %v867 = vunpack.c.l.b16 %v230
    %v868 = vunpack.c.h.b16 %v230
    %v869 = vunpack.c.l.b16 %v231
    %v870 = vunpack.c.h.b16 %v231
    %v871 = vunpack.c.l.b16 %v232
    %v872 = vunpack.c.h.b16 %v232
    %v873 = vunpack.c.l.b16 %v233
    %v874 = vunpack.c.h.b16 %v233
    %v875 = vunpack.c.l.b16 %v234
    %v876 = vunpack.c.h.b16 %v234
    %v877 = vunpack.c.l.b16 %v235
    %v878 = vunpack.c.h.b16 %v235
    %v879 = vunpack.c.l.b16 %v236
    %v880 = vunpack.c.h.b16 %v236
    %v881 = vunpack.c.l.b16 %v237
    %v882 = vunpack.c.h.b16 %v237
    %v883 = vunpack.c.l.b16 %v238
    %v884 = vunpack.c.h.b16 %v238
    %v885 = vunpack.c.l.b16 %v239
    %v886 = vunpack.c.h.b16 %v239
    %v887 = vunpack.c.l.b16 %v240
    %v888 = vunpack.c.h.b16 %v240
    %v889 = vunpack.c.l.b16 %v241
    %v890 = vunpack.c.h.b16 %v241
    %v891 = vunpack.c.l.b16 %v242
    %v892 = vunpack.c.h.b16 %v242
    %v893 = vunpack.c.l.b16 %v243
    %v894 = vunpack.c.h.b16 %v243
    %v895 = vunpack.c.l.b16 %v244
    %v896 = vunpack.c.h.b16 %v244
    %v897 = vunpack.c.l.b16 %v245
    %v898 = vunpack.c.h.b16 %v245
    %v899 = vunpack.c.l.b16 %v246
    %v900 = vunpack.c.h.b16 %v246
    %v901 = vunpack.c.l.b16 %v247
    %v902 = vunpack.c.h.b16 %v247
    %v903 = vunpack.c.l.b16 %v248
    %v904 = vunpack.c.h.b16 %v248
    %v905 = vunpack.c.l.b16 %v249
    %v906 = vunpack.c.h.b16 %v249
    %v907 = vunpack.c.l.b16 %v250
    %v908 = vunpack.c.h.b16 %v250
    %v909 = vunpack.c.l.b16 %v251
    %v910 = vunpack.c.h.b16 %v251
    %v911 = vunpack.c.l.b16 %v252
    %v912 = vunpack.c.h.b16 %v252
    %v913 = vunpack.c.l.b16 %v253
    %v914 = vunpack.c.h.b16 %v253
    %v915 = vunpack.c.l.b16 %v254
    %v916 = vunpack.c.h.b16 %v254
    %v917 = vunpack.c.l.b16 %v255
    %v918 = vunpack.c.h.b16 %v255
    %v919 = vunpack.c.l.b16 %v256
    %v920 = vunpack.c.h.b16 %v256
    %v921 = vunpack.c.l.b16 %v257
    %v922 = vunpack.c.h.b16 %v257
    %v923 = vunpack.c.l.b16 %v258
    %v924 = vunpack.c.h.b16 %v258
    %v925 = vunpack.c.l.b16 %v259
    %v926 = vunpack.c.h.b16 %v259
    %v927 = vunpack.c.l.b16 %v260
    %v928 = vunpack.c.h.b16 %v260
    %v929 = vunpack.c.l.b16 %v261
    %v930 = vunpack.c.h.b16 %v261
    %v931 = vunpack.c.l.b16 %v262
    %v932 = vunpack.c.h.b16 %v262
    %v933 = vunpack.c.l.b16 %v263
    %v934 = vunpack.c.h.b16 %v263
    %v935 = vunpack.c.l.b16 %v264
    %v936 = vunpack.c.h.b16 %v264
    %v937 = vunpack.c.l.b16 %v265
    %v938 = vunpack.c.h.b16 %v265
    %v939 = vunpack.c.l.b16 %v266
    %v940 = vunpack.c.h.b16 %v266
    %v941 = vunpack.c.l.b16 %v267
    %v942 = vunpack.c.h.b16 %v267
    %v943 = vunpack.c.l.b16 %v268
    %v944 = vunpack.c.h.b16 %v268
    %v945 = vunpack.c.l.b16 %v269
    %v946 = vunpack.c.h.b16 %v269
    %v947 = vunpack.c.l.b16 %v270
    %v948 = vunpack.c.h.b16 %v270
    %v949 = vunpack.c.l.b16 %v271
    %v950 = vunpack.c.h.b16 %v271
    %v951 = vunpack.c.l.b16 %v272
    %v952 = vunpack.c.h.b16 %v272
    %v953 = vunpack.c.l.b16 %v273
    %v954 = vunpack.c.h.b16 %v273
    %v955 = vunpack.c.l.b16 %v274
    %v956 = vunpack.c.h.b16 %v274
    %v957 = vunpack.c.l.b16 %v275
    %v958 = vunpack.c.h.b16 %v275
    %v959 = vunpack.c.l.b16 %v276
    %v960 = vunpack.c.h.b16 %v276
    %v961 = vunpack.c.l.b16 %v277
    %v962 = vunpack.c.h.b16 %v277
    %v963 = vunpack.c.l.b16 %v278
    %v964 = vunpack.c.h.b16 %v278
    %v965 = vunpack.c.l.b16 %v279
    %v966 = vunpack.c.h.b16 %v279
    %v967 = vunpack.c.l.b16 %v280
    %v968 = vunpack.c.h.b16 %v280
    %v969 = vunpack.c.l.b16 %v281
    %v970 = vunpack.c.h.b16 %v281
    %v971 = vunpack.c.l.b16 %v282
    %v972 = vunpack.c.h.b16 %v282
    %v973 = vunpack.c.l.b16 %v283
    %v974 = vunpack.c.h.b16 %v283
    %v975 = vunpack.c.l.b16 %v284
    %v976 = vunpack.c.h.b16 %v284
    %v977 = vunpack.c.l.b16 %v285
    %v978 = vunpack.c.h.b16 %v285
    %v979 = vunpack.c.l.b16 %v286
    %v980 = vunpack.c.h.b16 %v286
    %v981 = vunpack.c.l.b16 %v287
    %v982 = vunpack.c.h.b16 %v287
    %v983 = vunpack.c.l.b16 %v288
    %v984 = vunpack.c.h.b16 %v288
    %v985 = vunpack.c.l.b16 %v289
    %v986 = vunpack.c.h.b16 %v289
    %v987 = vunpack.c.l.b16 %v290
    %v988 = vunpack.c.h.b16 %v290
    %v989 = vunpack.c.l.b16 %v291
    %v990 = vunpack.c.h.b16 %v291
    %v991 = vunpack.c.l.b16 %v292
    %v992 = vunpack.c.h.b16 %v292
    %v993 = vunpack.c.l.b16 %v293
    %v994 = vunpack.c.h.b16 %v293
    %v995 = vunpack.c.l.b16 %v294
    %v996 = vunpack.c.h.b16 %v294
    %v997 = vunpack.c.l.b16 %v295
    %v998 = vunpack.c.h.b16 %v295
    %v999 = vunpack.c.l.b16 %v296
    %v1000 = vunpack.c.h.b16 %v296
    %v1001 = vunpack.c.l.b16 %v297
    %v1002 = vunpack.c.h.b16 %v297
    %v1003 = vunpack.c.l.b16 %v298
    %v1004 = vunpack.c.h.b16 %v298
    %v1005 = vunpack.c.l.b16 %v299
    %v1006 = vunpack.c.h.b16 %v299
    %v1007 = vunpack.c.l.b16 %v300
    %v1008 = vunpack.c.h.b16 %v300
    %v1009 = vunpack.c.l.b16 %v301
    %v1010 = vunpack.c.h.b16 %v301
    %v1011 = vunpack.c.l.b16 %v302
    %v1012 = vunpack.c.h.b16 %v302
    %v1013 = vunpack.c.l.b16 %v303
    %v1014 = vunpack.c.h.b16 %v303
    %v1015 = vunpack.c.l.b16 %v304
    %v1016 = vunpack.c.h.b16 %v304
    %v1017 = vunpack.c.l.b16 %v305
    %v1018 = vunpack.c.h.b16 %v305
    %v1019 = vunpack.c.l.b16 %v306
    %v1020 = vunpack.c.h.b16 %v306
    %v1021 = vunpack.c.l.b16 %v307
    %v1022 = vunpack.c.h.b16 %v307
    %v1023 = vunpack.c.l.b16 %v308
    %v1024 = vunpack.c.h.b16 %v308
    %v1025 = vunpack.c.l.b16 %v309
    %v1026 = vunpack.c.h.b16 %v309
    %v1027 = vunpack.c.l.b16 %v310
    %v1028 = vunpack.c.h.b16 %v310
    %v1029 = vunpack.c.l.b16 %v311
    %v1030 = vunpack.c.h.b16 %v311
    %v1031 = vunpack.c.l.b16 %v312
    %v1032 = vunpack.c.h.b16 %v312
    %v1033 = vunpack.c.l.b16 %v313
    %v1034 = vunpack.c.h.b16 %v313
    %v1035 = vunpack.c.l.b16 %v314
    %v1036 = vunpack.c.h.b16 %v314
    %v1037 = vunpack.c.l.b16 %v315
    %v1038 = vunpack.c.h.b16 %v315
    %v1039 = vunpack.c.l.b16 %v316
    %v1040 = vunpack.c.h.b16 %v316
    %v1041 = vunpack.c.l.b16 %v317
    %v1042 = vunpack.c.h.b16 %v317
    %v1043 = vunpack.c.l.b16 %v318
    %v1044 = vunpack.c.h.b16 %v318
    %v1045 = vunpack.c.l.b16 %v319
    %v1046 = vunpack.c.h.b16 %v319
    %v1047 = vunpack.c.l.b16 %v320
    %v1048 = vunpack.c.h.b16 %v320
    %v1049 = vunpack.c.l.b16 %v321
    %v1050 = vunpack.c.h.b16 %v321
    %v1051 = vunpack.c.l.b16 %v322
    %v1052 = vunpack.c.h.b16 %v322
    %v1053 = vunpack.c.l.b16 %v323
    %v1054 = vunpack.c.h.b16 %v323
    %v1055 = vunpack.c.l.b16 %v324
    %v1056 = vunpack.c.h.b16 %v324
    %v1057 = vunpack.c.l.b16 %v325
    %v1058 = vunpack.c.h.b16 %v325
    %v1059 = vunpack.c.l.b16 %v326
    %v1060 = vunpack.c.h.b16 %v326
    %v1061 = vunpack.c.l.b16 %v327
    %v1062 = vunpack.c.h.b16 %v327
    %v1063 = vunpack.c.l.b16 %v328
    %v1064 = vunpack.c.h.b16 %v328
    %v1065 = vunpack.c.l.b16 %v329
    %v1066 = vunpack.c.h.b16 %v329
    %v1067 = vunpack.c.l.b16 %v330
    %v1068 = vunpack.c.h.b16 %v330
    %v1069 = vunpack.c.l.b16 %v331
    %v1070 = vunpack.c.h.b16 %v331
    %v1071 = vunpack.c.l.b16 %v332
    %v1072 = vunpack.c.h.b16 %v332
    %v1073 = vunpack.c.l.b16 %v333
    %v1074 = vunpack.c.h.b16 %v333
    %v1075 = vunpack.c.l.b16 %v334
    %v1076 = vunpack.c.h.b16 %v334
    %v1077 = vunpack.c.l.b16 %v335
    %v1078 = vunpack.c.h.b16 %v335
    %v1079 = vunpack.c.l.b16 %v336
    %v1080 = vunpack.c.h.b16 %v336
    %v1081 = vunpack.c.l.b16 %v337
    %v1082 = vunpack.c.h.b16 %v337
    %v1083 = vunpack.c.l.b16 %v338
    %v1084 = vunpack.c.h.b16 %v338
    %v1085 = vunpack.c.l.b16 %v339
    %v1086 = vunpack.c.h.b16 %v339
    %v1087 = vunpack.c.l.b16 %v340
    %v1088 = vunpack.c.h.b16 %v340
    %v1089 = vunpack.c.l.b16 %v341
    %v1090 = vunpack.c.h.b16 %v341
    %v1091 = vunpack.c.l.b16 %v342
    %v1092 = vunpack.c.h.b16 %v342
    %v1093 = vunpack.c.l.b16 %v343
    %v1094 = vunpack.c.h.b16 %v343
    %v1095 = vunpack.c.l.b16 %v344
    %v1096 = vunpack.c.h.b16 %v344
    %v1097 = vunpack.c.l.b16 %v345
    %v1098 = vunpack.c.h.b16 %v345
    %v1099 = vunpack.c.l.b16 %v346
    %v1100 = vunpack.c.h.b16 %v346
    %v1101 = vunpack.c.l.b16 %v347
    %v1102 = vunpack.c.h.b16 %v347
    %v1103 = vunpack.c.l.b16 %v348
    %v1104 = vunpack.c.h.b16 %v348
    %v1105 = vunpack.c.l.b16 %v349
    %v1106 = vunpack.c.h.b16 %v349
    %v1107 = vunpack.c.l.b16 %v350
    %v1108 = vunpack.c.h.b16 %v350
    %v1109 = vunpack.c.l.b16 %v351
    %v1110 = vunpack.c.h.b16 %v351
    %v1111 = vunpack.c.l.b16 %v352
    %v1112 = vunpack.c.h.b16 %v352
    %v1113 = vunpack.c.l.b16 %v353
    %v1114 = vunpack.c.h.b16 %v353
    %v1115 = vunpack.c.l.b16 %v354
    %v1116 = vunpack.c.h.b16 %v354
    %v1117 = vunpack.c.l.b16 %v355
    %v1118 = vunpack.c.h.b16 %v355
    %v1119 = vunpack.c.l.b16 %v356
    %v1120 = vunpack.c.h.b16 %v356
    %v1121 = vunpack.c.l.b16 %v357
    %v1122 = vunpack.c.h.b16 %v357
    %v1123 = vunpack.c.l.b16 %v358
    %v1124 = vunpack.c.h.b16 %v358
    %v1125 = vunpack.c.l.b16 %v359
    %v1126 = vunpack.c.h.b16 %v359
    %v1127 = vunpack.c.l.b16 %v360
    %v1128 = vunpack.c.h.b16 %v360
    %v1129 = vpack.c.b16 %v619, %v617
    %v1130 = vpack.c.b16 %v620, %v618
    %v1131 = vpack.c.b16 %v623, %v621
    %v1132 = vpack.c.b16 %v624, %v622
    %v1133 = vpack.c.b16 %v627, %v625
    %v1134 = vpack.c.b16 %v628, %v626
    %v1135 = vpack.c.b16 %v631, %v629
    %v1136 = vpack.c.b16 %v632, %v630
    %v1137 = vpack.c.b16 %v635, %v633
    %v1138 = vpack.c.b16 %v636, %v634
    %v1139 = vpack.c.b16 %v639, %v637
    %v1140 = vpack.c.b16 %v640, %v638
    %v1141 = vpack.c.b16 %v643, %v641
    %v1142 = vpack.c.b16 %v644, %v642
    %v1143 = vpack.c.b16 %v647, %v645
    %v1144 = vpack.c.b16 %v648, %v646
    %v1145 = vpack.c.b16 %v651, %v649
    %v1146 = vpack.c.b16 %v652, %v650
    %v1147 = vpack.c.b16 %v655, %v653
    %v1148 = vpack.c.b16 %v656, %v654
    %v1149 = vpack.c.b16 %v659, %v657
    %v1150 = vpack.c.b16 %v660, %v658
    %v1151 = vpack.c.b16 %v663, %v661
    %v1152 = vpack.c.b16 %v664, %v662
    %v1153 = vpack.c.b16 %v667, %v665
    %v1154 = vpack.c.b16 %v668, %v666
    %v1155 = vpack.c.b16 %v671, %v669
    %v1156 = vpack.c.b16 %v672, %v670
    %v1157 = vpack.c.b16 %v675, %v673
    %v1158 = vpack.c.b16 %v676, %v674
    %v1159 = vpack.c.b16 %v679, %v677
    %v1160 = vpack.c.b16 %v680, %v678
    %v1161 = vpack.c.b16 %v683, %v681
    %v1162 = vpack.c.b16 %v684, %v682
    %v1163 = vpack.c.b16 %v687, %v685
    %v1164 = vpack.c.b16 %v688, %v686
    %v1165 = vpack.c.b16 %v691, %v689
    %v1166 = vpack.c.b16 %v692, %v690
    %v1167 = vpack.c.b16 %v695, %v693
    %v1168 = vpack.c.b16 %v696, %v694
    %v1169 = vpack.c.b16 %v699, %v697
    %v1170 = vpack.c.b16 %v700, %v698
    %v1171 = vpack.c.b16 %v703, %v701
    %v1172 = vpack.c.b16 %v704, %v702
    %v1173 = vpack.c.b16 %v707, %v705
    %v1174 = vpack.c.b16 %v708, %v706
    %v1175 = vpack.c.b16 %v711, %v709
    %v1176 = vpack.c.b16 %v712, %v710
    %v1177 = vpack.c.b16 %v715, %v713
    %v1178 = vpack.c.b16 %v716, %v714
    %v1179 = vpack.c.b16 %v719, %v717
    %v1180 = vpack.c.b16 %v720, %v718
    %v1181 = vpack.c.b16 %v723, %v721
    %v1182 = vpack.c.b16 %v724, %v722
    %v1183 = vpack.c.b16 %v727, %v725
    %v1184 = vpack.c.b16 %v728, %v726
    %v1185 = vpack.c.b16 %v731, %v729
    %v1186 = vpack.c.b16 %v732, %v730
    %v1187 = vpack.c.b16 %v735, %v733
    %v1188 = vpack.c.b16 %v736, %v734
    %v1189 = vpack.c.b16 %v739, %v737
    %v1190 = vpack.c.b16 %v740, %v738
    %v1191 = vpack.c.b16 %v743, %v741
    %v1192 = vpack.c.b16 %v744, %v742
    %v1193 = vpack.c.b16 %v747, %v745
    %v1194 = vpack.c.b16 %v748, %v746
    %v1195 = vpack.c.b16 %v751, %v749
    %v1196 = vpack.c.b16 %v752, %v750
    %v1197 = vpack.c.b16 %v755, %v753
    %v1198 = vpack.c.b16 %v756, %v754
    %v1199 = vpack.c.b16 %v759, %v757
    %v1200 = vpack.c.b16 %v760, %v758
    %v1201 = vpack.c.b16 %v763, %v761
    %v1202 = vpack.c.b16 %v764, %v762
    %v1203 = vpack.c.b16 %v767, %v765
    %v1204 = vpack.c.b16 %v768, %v766
    %v1205 = vpack.c.b16 %v771, %v769
    %v1206 = vpack.c.b16 %v772, %v770
    %v1207 = vpack.c.b16 %v775, %v773
    %v1208 = vpack.c.b16 %v776, %v774
    %v1209 = vpack.c.b16 %v779, %v777
    %v1210 = vpack.c.b16 %v780, %v778
    %v1211 = vpack.c.b16 %v783, %v781
    %v1212 = vpack.c.b16 %v784, %v782
    %v1213 = vpack.c.b16 %v787, %v785
    %v1214 = vpack.c.b16 %v788, %v786
    %v1215 = vpack.c.b16 %v791, %v789
    %v1216 = vpack.c.b16 %v792, %v790
    %v1217 = vpack.c.b16 %v795, %v793
    %v1218 = vpack.c.b16 %v796, %v794
    %v1219 = vpack.c.b16 %v799, %v797
    %v1220 = vpack.c.b16 %v800, %v798
    %v1221 = vpack.c.b16 %v803, %v801
    %v1222 = vpack.c.b16 %v804, %v802
    %v1223 = vpack.c.b16 %v807, %v805
    %v1224 = vpack.c.b16 %v808, %v806
    %v1225 = vpack.c.b16 %v811, %v809
    %v1226 = vpack.c.b16 %v812, %v810
    %v1227 = vpack.c.b16 %v815, %v813
    %v1228 = vpack.c.b16 %v816, %v814
    %v1229 = vpack.c.b16 %v819, %v817
    %v1230 = vpack.c.b16 %v820, %v818
    %v1231 = vpack.c.b16 %v823, %v821
    %v1232 = vpack.c.b16 %v824, %v822
    %v1233 = vpack.c.b16 %v827, %v825
    %v1234 = vpack.c.b16 %v828, %v826
    %v1235 = vpack.c.b16 %v831, %v829
    %v1236 = vpack.c.b16 %v832, %v830
    %v1237 = vpack.c.b16 %v835, %v833
    %v1238 = vpack.c.b16 %v836, %v834
    %v1239 = vpack.c.b16 %v839, %v837
    %v1240 = vpack.c.b16 %v840, %v838
    %v1241 = vpack.c.b16 %v843, %v841
    %v1242 = vpack.c.b16 %v844, %v842
    %v1243 = vpack.c.b16 %v847, %v845
    %v1244 = vpack.c.b16 %v848, %v846
    %v1245 = vpack.c.b16 %v851, %v849
    %v1246 = vpack.c.b16 %v852, %v850
    %v1247 = vpack.c.b16 %v855, %v853
    %v1248 = vpack.c.b16 %v856, %v854
    %v1249 = vpack.c.b16 %v859, %v857
    %v1250 = vpack.c.b16 %v860, %v858
    %v1251 = vpack.c.b16 %v863, %v861
    %v1252 = vpack.c.b16 %v864, %v862
    %v1253 = vpack.c.b16 %v867, %v865
    %v1254 = vpack.c.b16 %v868, %v866
    %v1255 = vpack.c.b16 %v871, %v869
    %v1256 = vpack.c.b16 %v872, %v870
    %v1257 = vpack.c.b16 %v875, %v873
    %v1258 = vpack.c.b16 %v876, %v874
    %v1259 = vpack.c.b16 %v879, %v877
    %v1260 = vpack.c.b16 %v880, %v878
    %v1261 = vpack.c.b16 %v883, %v881
    %v1262 = vpack.c.b16 %v884, %v882
    %v1263 = vpack.c.b16 %v887, %v885
    %v1264 = vpack.c.b16 %v888, %v886
    %v1265 = vpack.c.b16 %v891, %v889
    %v1266 = vpack.c.b16 %v892, %v890
    %v1267 = vpack.c.b16 %v895, %v893
    %v1268 = vpack.c.b16 %v896, %v894
    %v1269 = vpack.c.b16 %v899, %v897
    %v1270 = vpack.c.b16 %v900, %v898
    %v1271 = vpack.c.b16 %v903, %v901
    %v1272 = vpack.c.b16 %v904, %v902
    %v1273 = vpack.c.b16 %v907, %v905
    %v1274 = vpack.c.b16 %v908, %v906
    %v1275 = vpack.c.b16 %v911, %v909
    %v1276 = vpack.c.b16 %v912, %v910
    %v1277 = vpack.c.b16 %v915, %v913
    %v1278 = vpack.c.b16 %v916, %v914
    %v1279 = vpack.c.b16 %v919, %v917
    %v1280 = vpack.c.b16 %v920, %v918
    %v1281 = vpack.c.b16 %v923, %v921
    %v1282 = vpack.c.b16 %v924, %v922
    %v1283 = vpack.c.b16 %v927, %v925
    %v1284 = vpack.c.b16 %v928, %v926
    %v1285 = vpack.c.b16 %v931, %v929
    %v1286 = vpack.c.b16 %v932, %v930
    %v1287 = vpack.c.b16 %v935, %v933
    %v1288 = vpack.c.b16 %v936, %v934
    %v1289 = vpack.c.b16 %v939, %v937
    %v1290 = vpack.c.b16 %v940, %v938
    %v1291 = vpack.c.b16 %v943, %v941
    %v1292 = vpack.c.b16 %v944, %v942
    %v1293 = vpack.c.b16 %v947, %v945
    %v1294 = vpack.c.b16 %v948, %v946
    %v1295 = vpack.c.b16 %v951, %v949
    %v1296 = vpack.c.b16 %v952, %v950
    %v1297 = vpack.c.b16 %v955, %v953
    %v1298 = vpack.c.b16 %v956, %v954
    %v1299 = vpack.c.b16 %v959, %v957
    %v1300 = vpack.c.b16 %v960, %v958
    %v1301 = vpack.c.b16 %v963, %v961
    %v1302 = vpack.c.b16 %v964, %v962
    %v1303 = vpack.c.b16 %v967, %v965
    %v1304 = vpack.c.b16 %v968, %v966
    %v1305 = vpack.c.b16 %v971, %v969
    %v1306 = vpack.c.b16 %v972, %v970
    %v1307 = vpack.c.b16 %v975, %v973
    %v1308 = vpack.c.b16 %v976, %v974
    %v1309 = vpack.c.b16 %v979, %v977
    %v1310 = vpack.c.b16 %v980, %v978
    %v1311 = vpack.c.b16 %v983, %v981
    %v1312 = vpack.c.b16 %v984, %v982
    %v1313 = vpack.c.b16 %v987, %v985
    %v1314 = vpack.c.b16 %v988, %v986
    %v1315 = vpack.c.b16 %v991, %v989
    %v1316 = vpack.c.b16 %v992, %v990
    %v1317 = vpack.c.b16 %v995, %v993
    %v1318 = vpack.c.b16 %v996, %v994
    %v1319 = vpack.c.b16 %v999, %v997
    %v1320 = vpack.c.b16 %v1000, %v998
    %v1321 = vpack.c.b16 %v1003, %v1001
    %v1322 = vpack.c.b16 %v1004, %v1002
    %v1323 = vpack.c.b16 %v1007, %v1005
    %v1324 = vpack.c.b16 %v1008, %v1006
    %v1325 = vpack.c.b16 %v1011, %v1009
    %v1326 = vpack.c.b16 %v1012, %v1010
    %v1327 = vpack.c.b16 %v1015, %v1013
    %v1328 = vpack.c.b16 %v1016, %v1014
    %v1329 = vpack.c.b16 %v1019, %v1017
    %v1330 = vpack.c.b16 %v1020, %v1018
    %v1331 = vpack.c.b16 %v1023, %v1021
    %v1332 = vpack.c.b16 %v1024, %v1022
    %v1333 = vpack.c.b16 %v1027, %v1025
    %v1334 = vpack.c.b16 %v1028, %v1026
    %v1335 = vpack.c.b16 %v1031, %v1029
    %v1336 = vpack.c.b16 %v1032, %v1030
    %v1337 = vpack.c.b16 %v1035, %v1033
    %v1338 = vpack.c.b16 %v1036, %v1034
    %v1339 = vpack.c.b16 %v1039, %v1037
    %v1340 = vpack.c.b16 %v1040, %v1038
    %v1341 = vpack.c.b16 %v1043, %v1041
    %v1342 = vpack.c.b16 %v1044, %v1042
    %v1343 = vpack.c.b16 %v1047, %v1045
    %v1344 = vpack.c.b16 %v1048, %v1046
    %v1345 = vpack.c.b16 %v1051, %v1049
    %v1346 = vpack.c.b16 %v1052, %v1050
    %v1347 = vpack.c.b16 %v1055, %v1053
    %v1348 = vpack.c.b16 %v1056, %v1054
    %v1349 = vpack.c.b16 %v1059, %v1057
    %v1350 = vpack.c.b16 %v1060, %v1058
    %v1351 = vpack.c.b16 %v1063, %v1061
    %v1352 = vpack.c.b16 %v1064, %v1062
    %v1353 = vpack.c.b16 %v1067, %v1065
    %v1354 = vpack.c.b16 %v1068, %v1066
    %v1355 = vpack.c.b16 %v1071, %v1069
    %v1356 = vpack.c.b16 %v1072, %v1070
    %v1357 = vpack.c.b16 %v1075, %v1073
    %v1358 = vpack.c.b16 %v1076, %v1074
    %v1359 = vpack.c.b16 %v1079, %v1077
    %v1360 = vpack.c.b16 %v1080, %v1078
    %v1361 = vpack.c.b16 %v1083, %v1081
    %v1362 = vpack.c.b16 %v1084, %v1082
    %v1363 = vpack.c.b16 %v1087, %v1085
    %v1364 = vpack.c.b16 %v1088, %v1086
    %v1365 = vpack.c.b16 %v1091, %v1089
    %v1366 = vpack.c.b16 %v1092, %v1090
    %v1367 = vpack.c.b16 %v1095, %v1093
    %v1368 = vpack.c.b16 %v1096, %v1094
    %v1369 = vpack.c.b16 %v1099, %v1097
    %v1370 = vpack.c.b16 %v1100, %v1098
    %v1371 = vpack.c.b16 %v1103, %v1101
    %v1372 = vpack.c.b16 %v1104, %v1102
    %v1373 = vpack.c.b16 %v1107, %v1105
    %v1374 = vpack.c.b16 %v1108, %v1106
    %v1375 = vpack.c.b16 %v1111, %v1109
    %v1376 = vpack.c.b16 %v1112, %v1110
    %v1377 = vpack.c.b16 %v1115, %v1113
    %v1378 = vpack.c.b16 %v1116, %v1114
    %v1379 = vpack.c.b16 %v1119, %v1117
    %v1380 = vpack.c.b16 %v1120, %v1118
    %v1381 = vpack.c.b16 %v1123, %v1121
    %v1382 = vpack.c.b16 %v1124, %v1122
    %v1383 = vpack.c.b16 %v1127, %v1125
    %v1384 = vpack.c.b16 %v1128, %v1126
    %1641 = vmatpush.bf16.msra.mxu0 %v1143
    %1642 = vmatpush.bf16.msra.mxu0 %v1141
    %1643 = vmatpush.bf16.msra.mxu0 %v1139
    %1644 = vmatpush.bf16.msra.mxu0 %v1137
    %1645 = vmatpush.bf16.msra.mxu0 %v1135
    %1646 = vmatpush.bf16.msra.mxu0 %v1133
    %1647 = vmatpush.bf16.msra.mxu0 %v1131
    %1648 = vmatpush.bf16.msra.mxu0 %v1129
    %1649 = vmatmul.bf16.gmra.mxu0 %v89
    %v1650 = vpop.f32.mrf.mxu0
    %v1651 = vadd.f32 0.0, %v1650
    %v1652 = vpop.f32.mrf.mxu0
    %1653 = vdwg.mxu0
    %1654 = vmatpush.bf16.msra.mxu0 %v1159
    %1655 = vmatpush.bf16.msra.mxu0 %v1157
    %1656 = vmatpush.bf16.msra.mxu0 %v1155
    %1657 = vmatpush.bf16.msra.mxu0 %v1153
    %1658 = vmatpush.bf16.msra.mxu0 %v1151
    %1659 = vmatpush.bf16.msra.mxu0 %v1149
    %1660 = vmatpush.bf16.msra.mxu0 %v1147
    %1661 = vmatpush.bf16.msra.mxu0 %v1145
    %1662 = vmatmul.bf16.gmra.mxu0 %v90
    %v1663 = vpop.f32.mrf.mxu0
    %v1664 = vadd.f32 %v1651, %v1663
    %v1665 = vpop.f32.mrf.mxu0
    %1666 = vdwg.mxu0
    %1667 = vmatpush.bf16.msra.mxu0 %v1175
    %1668 = vmatpush.bf16.msra.mxu0 %v1173
    %1669 = vmatpush.bf16.msra.mxu0 %v1171
    %1670 = vmatpush.bf16.msra.mxu0 %v1169
    %1671 = vmatpush.bf16.msra.mxu0 %v1167
    %1672 = vmatpush.bf16.msra.mxu0 %v1165
    %1673 = vmatpush.bf16.msra.mxu0 %v1163
    %1674 = vmatpush.bf16.msra.mxu0 %v1161
    %1675 = vmatmul.bf16.gmra.mxu0 %v91
    %v1676 = vpop.f32.mrf.mxu0
    %v1677 = vadd.f32 %v1664, %v1676
    %v1678 = vpop.f32.mrf.mxu0
    %1679 = vdwg.mxu0
    %1680 = vmatpush.bf16.msra.mxu0 %v1191
    %1681 = vmatpush.bf16.msra.mxu0 %v1189
    %1682 = vmatpush.bf16.msra.mxu0 %v1187
    %1683 = vmatpush.bf16.msra.mxu0 %v1185
    %1684 = vmatpush.bf16.msra.mxu0 %v1183
    %1685 = vmatpush.bf16.msra.mxu0 %v1181
    %1686 = vmatpush.bf16.msra.mxu0 %v1179
    %1687 = vmatpush.bf16.msra.mxu0 %v1177
    %1688 = vmatmul.bf16.gmra.mxu0 %v92
    %v1689 = vpop.f32.mrf.mxu0
    %v1690 = vadd.f32 %v1677, %v1689
    %v1691 = vpop.f32.mrf.mxu0
    %1692 = vdwg.mxu0
    %1693 = vmatpush.bf16.msra.mxu0 %v1207
    %1694 = vmatpush.bf16.msra.mxu0 %v1205
    %1695 = vmatpush.bf16.msra.mxu0 %v1203
    %1696 = vmatpush.bf16.msra.mxu0 %v1201
    %1697 = vmatpush.bf16.msra.mxu0 %v1199
    %1698 = vmatpush.bf16.msra.mxu0 %v1197
    %1699 = vmatpush.bf16.msra.mxu0 %v1195
    %1700 = vmatpush.bf16.msra.mxu0 %v1193
    %1701 = vmatmul.bf16.gmra.mxu0 %v93
    %v1702 = vpop.f32.mrf.mxu0
    %v1703 = vadd.f32 %v1690, %v1702
    %v1704 = vpop.f32.mrf.mxu0
    %1705 = vdwg.mxu0
    %1706 = vmatpush.bf16.msra.mxu0 %v1223
    %1707 = vmatpush.bf16.msra.mxu0 %v1221
    %1708 = vmatpush.bf16.msra.mxu0 %v1219
    %1709 = vmatpush.bf16.msra.mxu0 %v1217
    %1710 = vmatpush.bf16.msra.mxu0 %v1215
    %1711 = vmatpush.bf16.msra.mxu0 %v1213
    %1712 = vmatpush.bf16.msra.mxu0 %v1211
    %1713 = vmatpush.bf16.msra.mxu0 %v1209
    %1714 = vmatmul.bf16.gmra.mxu0 %v94
    %v1715 = vpop.f32.mrf.mxu0
    %v1716 = vadd.f32 %v1703, %v1715
    %v1717 = vpop.f32.mrf.mxu0
    %1718 = vdwg.mxu0
    %1719 = vmatpush.bf16.msra.mxu0 %v1239
    %1720 = vmatpush.bf16.msra.mxu0 %v1237
    %1721 = vmatpush.bf16.msra.mxu0 %v1235
    %1722 = vmatpush.bf16.msra.mxu0 %v1233
    %1723 = vmatpush.bf16.msra.mxu0 %v1231
    %1724 = vmatpush.bf16.msra.mxu0 %v1229
    %1725 = vmatpush.bf16.msra.mxu0 %v1227
    %1726 = vmatpush.bf16.msra.mxu0 %v1225
    %1727 = vmatmul.bf16.gmra.mxu0 %v95
    %v1728 = vpop.f32.mrf.mxu0
    %v1729 = vadd.f32 %v1716, %v1728
    %v1730 = vpop.f32.mrf.mxu0
    %1731 = vdwg.mxu0
    %1732 = vmatpush.bf16.msra.mxu0 %v1255
    %1733 = vmatpush.bf16.msra.mxu0 %v1253
    %1734 = vmatpush.bf16.msra.mxu0 %v1251
    %1735 = vmatpush.bf16.msra.mxu0 %v1249
    %1736 = vmatpush.bf16.msra.mxu0 %v1247
    %1737 = vmatpush.bf16.msra.mxu0 %v1245
    %1738 = vmatpush.bf16.msra.mxu0 %v1243
    %1739 = vmatpush.bf16.msra.mxu0 %v1241
    %1740 = vmatmul.bf16.gmra.mxu0 %v96
    %v1741 = vpop.f32.mrf.mxu0
    %v1742 = vadd.f32 %v1729, %v1741
    %v1743 = vpop.f32.mrf.mxu0
    %1744 = vdwg.mxu0
    %1745 = vmatpush.bf16.msra.mxu0 %v1271
    %1746 = vmatpush.bf16.msra.mxu0 %v1269
    %1747 = vmatpush.bf16.msra.mxu0 %v1267
    %1748 = vmatpush.bf16.msra.mxu0 %v1265
    %1749 = vmatpush.bf16.msra.mxu0 %v1263
    %1750 = vmatpush.bf16.msra.mxu0 %v1261
    %1751 = vmatpush.bf16.msra.mxu0 %v1259
    %1752 = vmatpush.bf16.msra.mxu0 %v1257
    %1753 = vmatmul.bf16.gmra.mxu0 %v97
    %v1754 = vpop.f32.mrf.mxu0
    %v1755 = vadd.f32 %v1742, %v1754
    %v1756 = vpop.f32.mrf.mxu0
    %1757 = vdwg.mxu0
    %1758 = vmatpush.bf16.msra.mxu0 %v1287
    %1759 = vmatpush.bf16.msra.mxu0 %v1285
    %1760 = vmatpush.bf16.msra.mxu0 %v1283
    %1761 = vmatpush.bf16.msra.mxu0 %v1281
    %1762 = vmatpush.bf16.msra.mxu0 %v1279
    %1763 = vmatpush.bf16.msra.mxu0 %v1277
    %1764 = vmatpush.bf16.msra.mxu0 %v1275
    %1765 = vmatpush.bf16.msra.mxu0 %v1273
    %1766 = vmatmul.bf16.gmra.mxu0 %v98
    %v1767 = vpop.f32.mrf.mxu0
    %v1768 = vadd.f32 %v1755, %v1767
    %v1769 = vpop.f32.mrf.mxu0
    %1770 = vdwg.mxu0
    %1771 = vmatpush.bf16.msra.mxu0 %v1303
    %1772 = vmatpush.bf16.msra.mxu0 %v1301
    %1773 = vmatpush.bf16.msra.mxu0 %v1299
    %1774 = vmatpush.bf16.msra.mxu0 %v1297
    %1775 = vmatpush.bf16.msra.mxu0 %v1295
    %1776 = vmatpush.bf16.msra.mxu0 %v1293
    %1777 = vmatpush.bf16.msra.mxu0 %v1291
    %1778 = vmatpush.bf16.msra.mxu0 %v1289
    %1779 = vmatmul.bf16.gmra.mxu0 %v99
    %v1780 = vpop.f32.mrf.mxu0
    %v1781 = vadd.f32 %v1768, %v1780
    %v1782 = vpop.f32.mrf.mxu0
    %1783 = vdwg.mxu0
    %1784 = vmatpush.bf16.msra.mxu0 %v1319
    %1785 = vmatpush.bf16.msra.mxu0 %v1317
    %1786 = vmatpush.bf16.msra.mxu0 %v1315
    %1787 = vmatpush.bf16.msra.mxu0 %v1313
    %1788 = vmatpush.bf16.msra.mxu0 %v1311
    %1789 = vmatpush.bf16.msra.mxu0 %v1309
    %1790 = vmatpush.bf16.msra.mxu0 %v1307
    %1791 = vmatpush.bf16.msra.mxu0 %v1305
    %1792 = vmatmul.bf16.gmra.mxu0 %v100
    %v1793 = vpop.f32.mrf.mxu0
    %v1794 = vadd.f32 %v1781, %v1793
    %v1795 = vpop.f32.mrf.mxu0
    %1796 = vdwg.mxu0
    %1797 = vmatpush.bf16.msra.mxu0 %v1335
    %1798 = vmatpush.bf16.msra.mxu0 %v1333
    %1799 = vmatpush.bf16.msra.mxu0 %v1331
    %1800 = vmatpush.bf16.msra.mxu0 %v1329
    %1801 = vmatpush.bf16.msra.mxu0 %v1327
    %1802 = vmatpush.bf16.msra.mxu0 %v1325
    %1803 = vmatpush.bf16.msra.mxu0 %v1323
    %1804 = vmatpush.bf16.msra.mxu0 %v1321
    %1805 = vmatmul.bf16.gmra.mxu0 %v101
    %v1806 = vpop.f32.mrf.mxu0
    %v1807 = vadd.f32 %v1794, %v1806
    %v1808 = vpop.f32.mrf.mxu0
    %1809 = vdwg.mxu0
    %1810 = vmatpush.bf16.msra.mxu0 %v1351
    %1811 = vmatpush.bf16.msra.mxu0 %v1349
    %1812 = vmatpush.bf16.msra.mxu0 %v1347
    %1813 = vmatpush.bf16.msra.mxu0 %v1345
    %1814 = vmatpush.bf16.msra.mxu0 %v1343
    %1815 = vmatpush.bf16.msra.mxu0 %v1341
    %1816 = vmatpush.bf16.msra.mxu0 %v1339
    %1817 = vmatpush.bf16.msra.mxu0 %v1337
    %1818 = vmatmul.bf16.gmra.mxu0 %v102
    %v1819 = vpop.f32.mrf.mxu0
    %v1820 = vadd.f32 %v1807, %v1819
    %v1821 = vpop.f32.mrf.mxu0
    %1822 = vdwg.mxu0
    %1823 = vmatpush.bf16.msra.mxu0 %v1367
    %1824 = vmatpush.bf16.msra.mxu0 %v1365
    %1825 = vmatpush.bf16.msra.mxu0 %v1363
    %1826 = vmatpush.bf16.msra.mxu0 %v1361
    %1827 = vmatpush.bf16.msra.mxu0 %v1359
    %1828 = vmatpush.bf16.msra.mxu0 %v1357
    %1829 = vmatpush.bf16.msra.mxu0 %v1355
    %1830 = vmatpush.bf16.msra.mxu0 %v1353
    %1831 = vmatmul.bf16.gmra.mxu0 %v103
    %v1832 = vpop.f32.mrf.mxu0
    %v1833 = vadd.f32 %v1820, %v1832
    %v1834 = vpop.f32.mrf.mxu0
    %1835 = vdwg.mxu0
    %1836 = vmatpush.bf16.msra.mxu0 %v1383
    %1837 = vmatpush.bf16.msra.mxu0 %v1381
    %1838 = vmatpush.bf16.msra.mxu0 %v1379
    %1839 = vmatpush.bf16.msra.mxu0 %v1377
    %1840 = vmatpush.bf16.msra.mxu0 %v1375
    %1841 = vmatpush.bf16.msra.mxu0 %v1373
    %1842 = vmatpush.bf16.msra.mxu0 %v1371
    %1843 = vmatpush.bf16.msra.mxu0 %v1369
    %1844 = vmatmul.bf16.gmra.mxu0 %v104
    %v1845 = vpop.f32.mrf.mxu0
    %v1846 = vadd.f32 %v1833, %v1845
    %v1847 = vpop.f32.mrf.mxu0
    %1848 = vdwg.mxu0
    %1849 = vmatpush.bf16.msra.mxu0 %v1144
    %1850 = vmatpush.bf16.msra.mxu0 %v1142
    %1851 = vmatpush.bf16.msra.mxu0 %v1140
    %1852 = vmatpush.bf16.msra.mxu0 %v1138
    %1853 = vmatpush.bf16.msra.mxu0 %v1136
    %1854 = vmatpush.bf16.msra.mxu0 %v1134
    %1855 = vmatpush.bf16.msra.mxu0 %v1132
    %1856 = vmatpush.bf16.msra.mxu0 %v1130
    %1857 = vmatmul.bf16.gmra.mxu0 %v89
    %v1858 = vpop.f32.mrf.mxu0
    %v1859 = vadd.f32 0.0, %v1858
    %v1860 = vpop.f32.mrf.mxu0
    %1861 = vdwg.mxu0
    %1862 = vmatpush.bf16.msra.mxu0 %v1160
    %1863 = vmatpush.bf16.msra.mxu0 %v1158
    %1864 = vmatpush.bf16.msra.mxu0 %v1156
    %1865 = vmatpush.bf16.msra.mxu0 %v1154
    %1866 = vmatpush.bf16.msra.mxu0 %v1152
    %1867 = vmatpush.bf16.msra.mxu0 %v1150
    %1868 = vmatpush.bf16.msra.mxu0 %v1148
    %1869 = vmatpush.bf16.msra.mxu0 %v1146
    %1870 = vmatmul.bf16.gmra.mxu0 %v90
    %v1871 = vpop.f32.mrf.mxu0
    %v1872 = vadd.f32 %v1859, %v1871
    %v1873 = vpop.f32.mrf.mxu0
    %1874 = vdwg.mxu0
    %1875 = vmatpush.bf16.msra.mxu0 %v1176
    %1876 = vmatpush.bf16.msra.mxu0 %v1174
    %1877 = vmatpush.bf16.msra.mxu0 %v1172
    %1878 = vmatpush.bf16.msra.mxu0 %v1170
    %1879 = vmatpush.bf16.msra.mxu0 %v1168
    %1880 = vmatpush.bf16.msra.mxu0 %v1166
    %1881 = vmatpush.bf16.msra.mxu0 %v1164
    %1882 = vmatpush.bf16.msra.mxu0 %v1162
    %1883 = vmatmul.bf16.gmra.mxu0 %v91
    %v1884 = vpop.f32.mrf.mxu0
    %v1885 = vadd.f32 %v1872, %v1884
    %v1886 = vpop.f32.mrf.mxu0
    %1887 = vdwg.mxu0
    %1888 = vmatpush.bf16.msra.mxu0 %v1192
    %1889 = vmatpush.bf16.msra.mxu0 %v1190
    %1890 = vmatpush.bf16.msra.mxu0 %v1188
    %1891 = vmatpush.bf16.msra.mxu0 %v1186
    %1892 = vmatpush.bf16.msra.mxu0 %v1184
    %1893 = vmatpush.bf16.msra.mxu0 %v1182
    %1894 = vmatpush.bf16.msra.mxu0 %v1180
    %1895 = vmatpush.bf16.msra.mxu0 %v1178
    %1896 = vmatmul.bf16.gmra.mxu0 %v92
    %v1897 = vpop.f32.mrf.mxu0
    %v1898 = vadd.f32 %v1885, %v1897
    %v1899 = vpop.f32.mrf.mxu0
    %1900 = vdwg.mxu0
    %1901 = vmatpush.bf16.msra.mxu0 %v1208
    %1902 = vmatpush.bf16.msra.mxu0 %v1206
    %1903 = vmatpush.bf16.msra.mxu0 %v1204
    %1904 = vmatpush.bf16.msra.mxu0 %v1202
    %1905 = vmatpush.bf16.msra.mxu0 %v1200
    %1906 = vmatpush.bf16.msra.mxu0 %v1198
    %1907 = vmatpush.bf16.msra.mxu0 %v1196
    %1908 = vmatpush.bf16.msra.mxu0 %v1194
    %1909 = vmatmul.bf16.gmra.mxu0 %v93
    %v1910 = vpop.f32.mrf.mxu0
    %v1911 = vadd.f32 %v1898, %v1910
    %v1912 = vpop.f32.mrf.mxu0
    %1913 = vdwg.mxu0
    %1914 = vmatpush.bf16.msra.mxu0 %v1224
    %1915 = vmatpush.bf16.msra.mxu0 %v1222
    %1916 = vmatpush.bf16.msra.mxu0 %v1220
    %1917 = vmatpush.bf16.msra.mxu0 %v1218
    %1918 = vmatpush.bf16.msra.mxu0 %v1216
    %1919 = vmatpush.bf16.msra.mxu0 %v1214
    %1920 = vmatpush.bf16.msra.mxu0 %v1212
    %1921 = vmatpush.bf16.msra.mxu0 %v1210
    %1922 = vmatmul.bf16.gmra.mxu0 %v94
    %v1923 = vpop.f32.mrf.mxu0
    %v1924 = vadd.f32 %v1911, %v1923
    %v1925 = vpop.f32.mrf.mxu0
    %1926 = vdwg.mxu0
    %1927 = vmatpush.bf16.msra.mxu0 %v1240
    %1928 = vmatpush.bf16.msra.mxu0 %v1238
    %1929 = vmatpush.bf16.msra.mxu0 %v1236
    %1930 = vmatpush.bf16.msra.mxu0 %v1234
    %1931 = vmatpush.bf16.msra.mxu0 %v1232
    %1932 = vmatpush.bf16.msra.mxu0 %v1230
    %1933 = vmatpush.bf16.msra.mxu0 %v1228
    %1934 = vmatpush.bf16.msra.mxu0 %v1226
    %1935 = vmatmul.bf16.gmra.mxu0 %v95
    %v1936 = vpop.f32.mrf.mxu0
    %v1937 = vadd.f32 %v1924, %v1936
    %v1938 = vpop.f32.mrf.mxu0
    %1939 = vdwg.mxu0
    %1940 = vmatpush.bf16.msra.mxu0 %v1256
    %1941 = vmatpush.bf16.msra.mxu0 %v1254
    %1942 = vmatpush.bf16.msra.mxu0 %v1252
    %1943 = vmatpush.bf16.msra.mxu0 %v1250
    %1944 = vmatpush.bf16.msra.mxu0 %v1248
    %1945 = vmatpush.bf16.msra.mxu0 %v1246
    %1946 = vmatpush.bf16.msra.mxu0 %v1244
    %1947 = vmatpush.bf16.msra.mxu0 %v1242
    %1948 = vmatmul.bf16.gmra.mxu0 %v96
    %v1949 = vpop.f32.mrf.mxu0
    %v1950 = vadd.f32 %v1937, %v1949
    %v1951 = vpop.f32.mrf.mxu0
    %1952 = vdwg.mxu0
    %1953 = vmatpush.bf16.msra.mxu0 %v1272
    %1954 = vmatpush.bf16.msra.mxu0 %v1270
    %1955 = vmatpush.bf16.msra.mxu0 %v1268
    %1956 = vmatpush.bf16.msra.mxu0 %v1266
    %1957 = vmatpush.bf16.msra.mxu0 %v1264
    %1958 = vmatpush.bf16.msra.mxu0 %v1262
    %1959 = vmatpush.bf16.msra.mxu0 %v1260
    %1960 = vmatpush.bf16.msra.mxu0 %v1258
    %1961 = vmatmul.bf16.gmra.mxu0 %v97
    %v1962 = vpop.f32.mrf.mxu0
    %v1963 = vadd.f32 %v1950, %v1962
    %v1964 = vpop.f32.mrf.mxu0
    %1965 = vdwg.mxu0
    %1966 = vmatpush.bf16.msra.mxu0 %v1288
    %1967 = vmatpush.bf16.msra.mxu0 %v1286
    %1968 = vmatpush.bf16.msra.mxu0 %v1284
    %1969 = vmatpush.bf16.msra.mxu0 %v1282
    %1970 = vmatpush.bf16.msra.mxu0 %v1280
    %1971 = vmatpush.bf16.msra.mxu0 %v1278
    %1972 = vmatpush.bf16.msra.mxu0 %v1276
    %1973 = vmatpush.bf16.msra.mxu0 %v1274
    %1974 = vmatmul.bf16.gmra.mxu0 %v98
    %v1975 = vpop.f32.mrf.mxu0
    %v1976 = vadd.f32 %v1963, %v1975
    %v1977 = vpop.f32.mrf.mxu0
    %1978 = vdwg.mxu0
    %1979 = vmatpush.bf16.msra.mxu0 %v1304
    %1980 = vmatpush.bf16.msra.mxu0 %v1302
    %1981 = vmatpush.bf16.msra.mxu0 %v1300
    %1982 = vmatpush.bf16.msra.mxu0 %v1298
    %1983 = vmatpush.bf16.msra.mxu0 %v1296
    %1984 = vmatpush.bf16.msra.mxu0 %v1294
    %1985 = vmatpush.bf16.msra.mxu0 %v1292
    %1986 = vmatpush.bf16.msra.mxu0 %v1290
    %1987 = vmatmul.bf16.gmra.mxu0 %v99
    %v1988 = vpop.f32.mrf.mxu0
    %v1989 = vadd.f32 %v1976, %v1988
    %v1990 = vpop.f32.mrf.mxu0
    %1991 = vdwg.mxu0
    %1992 = vmatpush.bf16.msra.mxu0 %v1320
    %1993 = vmatpush.bf16.msra.mxu0 %v1318
    %1994 = vmatpush.bf16.msra.mxu0 %v1316
    %1995 = vmatpush.bf16.msra.mxu0 %v1314
    %1996 = vmatpush.bf16.msra.mxu0 %v1312
    %1997 = vmatpush.bf16.msra.mxu0 %v1310
    %1998 = vmatpush.bf16.msra.mxu0 %v1308
    %1999 = vmatpush.bf16.msra.mxu0 %v1306
    %2000 = vmatmul.bf16.gmra.mxu0 %v100
    %v2001 = vpop.f32.mrf.mxu0
    %v2002 = vadd.f32 %v1989, %v2001
    %v2003 = vpop.f32.mrf.mxu0
    %2004 = vdwg.mxu0
    %2005 = vmatpush.bf16.msra.mxu0 %v1336
    %2006 = vmatpush.bf16.msra.mxu0 %v1334
    %2007 = vmatpush.bf16.msra.mxu0 %v1332
    %2008 = vmatpush.bf16.msra.mxu0 %v1330
    %2009 = vmatpush.bf16.msra.mxu0 %v1328
    %2010 = vmatpush.bf16.msra.mxu0 %v1326
    %2011 = vmatpush.bf16.msra.mxu0 %v1324
    %2012 = vmatpush.bf16.msra.mxu0 %v1322
    %2013 = vmatmul.bf16.gmra.mxu0 %v101
    %v2014 = vpop.f32.mrf.mxu0
    %v2015 = vadd.f32 %v2002, %v2014
    %v2016 = vpop.f32.mrf.mxu0
    %2017 = vdwg.mxu0
    %2018 = vmatpush.bf16.msra.mxu0 %v1352
    %2019 = vmatpush.bf16.msra.mxu0 %v1350
    %2020 = vmatpush.bf16.msra.mxu0 %v1348
    %2021 = vmatpush.bf16.msra.mxu0 %v1346
    %2022 = vmatpush.bf16.msra.mxu0 %v1344
    %2023 = vmatpush.bf16.msra.mxu0 %v1342
    %2024 = vmatpush.bf16.msra.mxu0 %v1340
    %2025 = vmatpush.bf16.msra.mxu0 %v1338
    %2026 = vmatmul.bf16.gmra.mxu0 %v102
    %v2027 = vpop.f32.mrf.mxu0
    %v2028 = vadd.f32 %v2015, %v2027
    %v2029 = vpop.f32.mrf.mxu0
    %2030 = vdwg.mxu0
    %2031 = vmatpush.bf16.msra.mxu0 %v1368
    %2032 = vmatpush.bf16.msra.mxu0 %v1366
    %2033 = vmatpush.bf16.msra.mxu0 %v1364
    %2034 = vmatpush.bf16.msra.mxu0 %v1362
    %2035 = vmatpush.bf16.msra.mxu0 %v1360
    %2036 = vmatpush.bf16.msra.mxu0 %v1358
    %2037 = vmatpush.bf16.msra.mxu0 %v1356
    %2038 = vmatpush.bf16.msra.mxu0 %v1354
    %2039 = vmatmul.bf16.gmra.mxu0 %v103
    %v2040 = vpop.f32.mrf.mxu0
    %v2041 = vadd.f32 %v2028, %v2040
    %v2042 = vpop.f32.mrf.mxu0
    %2043 = vdwg.mxu0
    %2044 = vmatpush.bf16.msra.mxu0 %v1384
    %2045 = vmatpush.bf16.msra.mxu0 %v1382
    %2046 = vmatpush.bf16.msra.mxu0 %v1380
    %2047 = vmatpush.bf16.msra.mxu0 %v1378
    %2048 = vmatpush.bf16.msra.mxu0 %v1376
    %2049 = vmatpush.bf16.msra.mxu0 %v1374
    %2050 = vmatpush.bf16.msra.mxu0 %v1372
    %2051 = vmatpush.bf16.msra.mxu0 %v1370
    %2052 = vmatmul.bf16.gmra.mxu0 %v104
    %v2053 = vpop.f32.mrf.mxu0
    %v2054 = vadd.f32 %v2041, %v2053
    %v2055 = vpop.f32.mrf.mxu0
    %2056 = vdwg.mxu0
    %vm2057 = vcmask 1041408
    %v2058 = vsel %vm2057, %v1846, 0.0
    %v2059 = vrot.slane %v2058, 4
    %v2060 = vadd.f32 %v2058, %v2059
    %v2061 = vrot.slane %v2060, 2
    %v2062 = vadd.f32 %v2060, %v2061
    %v2063 = vrot.slane %v2062, 1
    %v2064 = vadd.f32 %v2062, %v2063
    %v2065 = vsel %vm2057, %v2054, 0.0
    %v2066 = vrot.slane %v2065, 4
    %v2067 = vadd.f32 %v2065, %v2066
    %v2068 = vrot.slane %v2067, 2
    %v2069 = vadd.f32 %v2067, %v2068
    %v2070 = vrot.slane %v2069, 1
    %v2071 = vadd.f32 %v2069, %v2070
    %v2072 = vrcp.pop 2.0
    %v2073 = vmul.f32 2.0, %v2072
    %v2074 = vsub.f32 1.0, %v2073
    %v2075 = vmul.f32 %v2072, %v2074
    %v2076 = vadd.f32 %v2072, %v2075
    %vm2077 = vweird.f32 %v2072
    %v2078 = vsel %vm2077, %v2072, %v2076
    %v2079 = vmul.f32 %v2064, %v2078
    %v2080 = vmul.f32 %v2071, %v2078
    %v2081 = vsub.f32 %v1846, %v2079
    %v2082 = vsub.f32 %v2054, %v2080
    %v2083 = vmul.f32 %v2081, %v2081
    %v2084 = vmul.f32 %v2082, %v2082
    %v2085 = vsel %vm2057, %v2083, 0.0
    %v2086 = vrot.slane %v2085, 4
    %v2087 = vadd.f32 %v2085, %v2086
    %v2088 = vrot.slane %v2087, 2
    %v2089 = vadd.f32 %v2087, %v2088
    %v2090 = vrot.slane %v2089, 1
    %v2091 = vadd.f32 %v2089, %v2090
    %v2092 = vsel %vm2057, %v2084, 0.0
    %v2093 = vrot.slane %v2092, 4
    %v2094 = vadd.f32 %v2092, %v2093
    %v2095 = vrot.slane %v2094, 2
    %v2096 = vadd.f32 %v2094, %v2095
    %v2097 = vrot.slane %v2096, 1
    %v2098 = vadd.f32 %v2096, %v2097
    %v2099 = vmul.f32 %v2091, %v2078
    %v2100 = vmul.f32 %v2098, %v2078
    %v2101 = vadd.f32 %v2099, 1e-05
    %v2102 = vadd.f32 %v2100, 1e-05
    %v2103 = vrsqrt.pop %v2101
    %v2104 = vmul.f32 %v2103, %v2101
    %v2105 = vmul.f32 %v2104, %v2103
    %v2106 = vmul.f32 0.5, %v2105
    %v2107 = vsub.f32 1.5, %v2106
    %v2108 = vmul.f32 %v2103, %v2107
    %vm2109 = vweird.f32 %v2101
    %vm2110 = vweird.f32 %v2103
    %vm2111 = vmor %vm2109, %vm2110
    %v2112 = vsel %vm2111, %v2103, %v2108
    %v2113 = vrsqrt.pop %v2102
    %v2114 = vmul.f32 %v2113, %v2102
    %v2115 = vmul.f32 %v2114, %v2113
    %v2116 = vmul.f32 0.5, %v2115
    %v2117 = vsub.f32 1.5, %v2116
    %v2118 = vmul.f32 %v2113, %v2117
    %vm2119 = vweird.f32 %v2102
    %vm2120 = vweird.f32 %v2113
    %vm2121 = vmor %vm2119, %vm2120
    %v2122 = vsel %vm2121, %v2113, %v2118
    %v2123 = vmul.f32 %v2081, %v2112
    %v2124 = vmul.f32 %v2082, %v2122
    %v2127 = vrot.slane %v1846, 2
    %v2128 = vrot.slane %v2054, 2
    %v2131 = vsel %vm2057, %v2127, 0.0
    %v2132 = vrot.slane %v2131, 4
    %v2133 = vadd.f32 %v2131, %v2132
    %v2134 = vrot.slane %v2133, 2
    %v2135 = vadd.f32 %v2133, %v2134
    %v2136 = vrot.slane %v2135, 1
    %v2137 = vadd.f32 %v2135, %v2136
    %v2138 = vsel %vm2057, %v2128, 0.0
    %v2139 = vrot.slane %v2138, 4
    %v2140 = vadd.f32 %v2138, %v2139
    %v2141 = vrot.slane %v2140, 2
    %v2142 = vadd.f32 %v2140, %v2141
    %v2143 = vrot.slane %v2142, 1
    %v2144 = vadd.f32 %v2142, %v2143
    %v2145 = vmul.f32 %v2137, %v2078
    %v2146 = vmul.f32 %v2144, %v2078
    %v2147 = vsub.f32 %v1846, %v2145
    %v2148 = vsub.f32 %v2054, %v2146
    %v2149 = vmul.f32 %v2147, %v2147
    %v2150 = vmul.f32 %v2148, %v2148
    %v2153 = vrot.slane %v2149, 2
    %v2154 = vrot.slane %v2150, 2
    %v2157 = vsel %vm2057, %v2153, 0.0
    %v2158 = vrot.slane %v2157, 4
    %v2159 = vadd.f32 %v2157, %v2158
    %v2160 = vrot.slane %v2159, 2
    %v2161 = vadd.f32 %v2159, %v2160
    %v2162 = vrot.slane %v2161, 1
    %v2163 = vadd.f32 %v2161, %v2162
    %v2164 = vsel %vm2057, %v2154, 0.0
    %v2165 = vrot.slane %v2164, 4
    %v2166 = vadd.f32 %v2164, %v2165
    %v2167 = vrot.slane %v2166, 2
    %v2168 = vadd.f32 %v2166, %v2167
    %v2169 = vrot.slane %v2168, 1
    %v2170 = vadd.f32 %v2168, %v2169
    %v2171 = vmul.f32 %v2163, %v2078
    %v2172 = vmul.f32 %v2170, %v2078
    %v2173 = vadd.f32 %v2171, 1e-05
    %v2174 = vadd.f32 %v2172, 1e-05
    %v2175 = vrsqrt.pop %v2173
    %v2176 = vmul.f32 %v2175, %v2173
    %v2177 = vmul.f32 %v2176, %v2175
    %v2178 = vmul.f32 0.5, %v2177
    %v2179 = vsub.f32 1.5, %v2178
    %v2180 = vmul.f32 %v2175, %v2179
    %vm2181 = vweird.f32 %v2173
    %vm2182 = vweird.f32 %v2175
    %vm2183 = vmor %vm2181, %vm2182
    %v2184 = vsel %vm2183, %v2175, %v2180
    %v2185 = vrsqrt.pop %v2174
    %v2186 = vmul.f32 %v2185, %v2174
    %v2187 = vmul.f32 %v2186, %v2185
    %v2188 = vmul.f32 0.5, %v2187
    %v2189 = vsub.f32 1.5, %v2188
    %v2190 = vmul.f32 %v2185, %v2189
    %vm2191 = vweird.f32 %v2174
    %vm2192 = vweird.f32 %v2185
    %vm2193 = vmor %vm2191, %vm2192
    %v2194 = vsel %vm2193, %v2185, %v2190
    %v2195 = vmul.f32 %v2147, %v2184
    %v2196 = vmul.f32 %v2148, %v2194
    %v2197 = vsel %vm2057, %v2123, %v2195
    %v2198 = vsel %vm2057, %v2124, %v2196
    %v2199 = vld [vmem:[%s2] sm:$0x3]
    %v2201 = vperm.slane %v2199, 0
    %v2202 = vperm.slane %v2199, 1
    %v2205 = vmul.f32 %v2197, %v2201
    %v2206 = vmul.f32 %v2198, %v2202
    %v2207 = vld [vmem:[%s3] sm:$0x3]
    %v2209 = vperm.slane %v2207, 0
    %v2210 = vperm.slane %v2207, 1
    %v2213 = vadd.f32 %v2205, %v2209
    %v2214 = vadd.f32 %v2206, %v2210
    %v2215 = vmax.f32 %v2213, 0.0
    %v2216 = vmax.f32 %v2214, 0.0
    %v2217 = vpack.c.bf16 %v2215, %v2215
    %v2218 = vpack.c.bf16 %v2216, %v2216
    %v2219 = vld [vmem:[%s4] sm:$0xff]
    %v2220 = vld [vmem:[%s4 + $0x8] sm:$0xff]
    %v2221 = vld [vmem:[%s4 + $0x10] sm:$0xff]
    %v2222 = vld [vmem:[%s4 + $0x18] sm:$0xff]
    %v2223 = vld [vmem:[%s4 + $0x20] sm:$0xff]
    %v2224 = vld [vmem:[%s4 + $0x28] sm:$0xff]
    %v2225 = vld [vmem:[%s4 + $0x30] sm:$0xff]
    %v2226 = vld [vmem:[%s4 + $0x38] sm:$0xff]
    %v2227 = vld [vmem:[%s4 + $0x40] sm:$0xff]
    %v2228 = vld [vmem:[%s4 + $0x48] sm:$0xff]
    %v2229 = vld [vmem:[%s4 + $0x50] sm:$0xff]
    %v2230 = vld [vmem:[%s4 + $0x58] sm:$0xff]
    %v2231 = vld [vmem:[%s4 + $0x60] sm:$0xff]
    %v2232 = vld [vmem:[%s4 + $0x68] sm:$0xff]
    %v2233 = vld [vmem:[%s4 + $0x70] sm:$0xff]
    %v2234 = vld [vmem:[%s4 + $0x78] sm:$0xff]
    %v2235 = vld [vmem:[%s4 + $0x80] sm:$0xff]
    %v2236 = vld [vmem:[%s4 + $0x88] sm:$0xff]
    %v2237 = vld [vmem:[%s4 + $0x90] sm:$0xff]
    %v2238 = vld [vmem:[%s4 + $0x98] sm:$0xff]
    %v2239 = vld [vmem:[%s4 + $0xa0] sm:$0xff]
    %v2240 = vld [vmem:[%s4 + $0xa8] sm:$0xff]
    %v2241 = vld [vmem:[%s4 + $0xb0] sm:$0xff]
    %v2242 = vld [vmem:[%s4 + $0xb8] sm:$0xff]
    %v2243 = vld [vmem:[%s4 + $0xc0] sm:$0xff]
    %v2244 = vld [vmem:[%s4 + $0xc8] sm:$0xff]
    %v2245 = vld [vmem:[%s4 + $0xd0] sm:$0xff]
    %v2246 = vld [vmem:[%s4 + $0xd8] sm:$0xff]
    %v2247 = vld [vmem:[%s4 + $0xe0] sm:$0xff]
    %v2248 = vld [vmem:[%s4 + $0xe8] sm:$0xff]
    %v2249 = vld [vmem:[%s4 + $0xf0] sm:$0xff]
    %v2250 = vld [vmem:[%s4 + $0xf8] sm:$0xff]
    %v2283 = vunpack.c.l.b16 %v2219
    %v2284 = vunpack.c.h.b16 %v2219
    %v2285 = vunpack.c.l.b16 %v2220
    %v2286 = vunpack.c.h.b16 %v2220
    %v2287 = vunpack.c.l.b16 %v2221
    %v2288 = vunpack.c.h.b16 %v2221
    %v2289 = vunpack.c.l.b16 %v2222
    %v2290 = vunpack.c.h.b16 %v2222
    %v2291 = vunpack.c.l.b16 %v2223
    %v2292 = vunpack.c.h.b16 %v2223
    %v2293 = vunpack.c.l.b16 %v2224
    %v2294 = vunpack.c.h.b16 %v2224
    %v2295 = vunpack.c.l.b16 %v2225
    %v2296 = vunpack.c.h.b16 %v2225
    %v2297 = vunpack.c.l.b16 %v2226
    %v2298 = vunpack.c.h.b16 %v2226
    %v2299 = vunpack.c.l.b16 %v2227
    %v2300 = vunpack.c.h.b16 %v2227
    %v2301 = vunpack.c.l.b16 %v2228
    %v2302 = vunpack.c.h.b16 %v2228
    %v2303 = vunpack.c.l.b16 %v2229
    %v2304 = vunpack.c.h.b16 %v2229
    %v2305 = vunpack.c.l.b16 %v2230
    %v2306 = vunpack.c.h.b16 %v2230
    %v2307 = vunpack.c.l.b16 %v2231
    %v2308 = vunpack.c.h.b16 %v2231
    %v2309 = vunpack.c.l.b16 %v2232
    %v2310 = vunpack.c.h.b16 %v2232
    %v2311 = vunpack.c.l.b16 %v2233
    %v2312 = vunpack.c.h.b16 %v2233
    %v2313 = vunpack.c.l.b16 %v2234
    %v2314 = vunpack.c.h.b16 %v2234
    %v2315 = vunpack.c.l.b16 %v2235
    %v2316 = vunpack.c.h.b16 %v2235
    %v2317 = vunpack.c.l.b16 %v2236
    %v2318 = vunpack.c.h.b16 %v2236
    %v2319 = vunpack.c.l.b16 %v2237
    %v2320 = vunpack.c.h.b16 %v2237
    %v2321 = vunpack.c.l.b16 %v2238
    %v2322 = vunpack.c.h.b16 %v2238
    %v2323 = vunpack.c.l.b16 %v2239
    %v2324 = vunpack.c.h.b16 %v2239
    %v2325 = vunpack.c.l.b16 %v2240
    %v2326 = vunpack.c.h.b16 %v2240
    %v2327 = vunpack.c.l.b16 %v2241
    %v2328 = vunpack.c.h.b16 %v2241
    %v2329 = vunpack.c.l.b16 %v2242
    %v2330 = vunpack.c.h.b16 %v2242
    %v2331 = vunpack.c.l.b16 %v2243
    %v2332 = vunpack.c.h.b16 %v2243
    %v2333 = vunpack.c.l.b16 %v2244
    %v2334 = vunpack.c.h.b16 %v2244
    %v2335 = vunpack.c.l.b16 %v2245
    %v2336 = vunpack.c.h.b16 %v2245
    %v2337 = vunpack.c.l.b16 %v2246
    %v2338 = vunpack.c.h.b16 %v2246
    %v2339 = vunpack.c.l.b16 %v2247
    %v2340 = vunpack.c.h.b16 %v2247
    %v2341 = vunpack.c.l.b16 %v2248
    %v2342 = vunpack.c.h.b16 %v2248
    %v2343 = vunpack.c.l.b16 %v2249
    %v2344 = vunpack.c.h.b16 %v2249
    %v2345 = vunpack.c.l.b16 %v2250
    %v2346 = vunpack.c.h.b16 %v2250
    %v2347 = vpack.c.b16 %v2285, %v2283
    %v2348 = vpack.c.b16 %v2286, %v2284
    %v2349 = vpack.c.b16 %v2289, %v2287
    %v2350 = vpack.c.b16 %v2290, %v2288
    %v2351 = vpack.c.b16 %v2293, %v2291
    %v2352 = vpack.c.b16 %v2294, %v2292
    %v2353 = vpack.c.b16 %v2297, %v2295
    %v2354 = vpack.c.b16 %v2298, %v2296
    %v2355 = vpack.c.b16 %v2301, %v2299
    %v2356 = vpack.c.b16 %v2302, %v2300
    %v2357 = vpack.c.b16 %v2305, %v2303
    %v2358 = vpack.c.b16 %v2306, %v2304
    %v2359 = vpack.c.b16 %v2309, %v2307
    %v2360 = vpack.c.b16 %v2310, %v2308
    %v2361 = vpack.c.b16 %v2313, %v2311
    %v2362 = vpack.c.b16 %v2314, %v2312
    %v2363 = vpack.c.b16 %v2317, %v2315
    %v2364 = vpack.c.b16 %v2318, %v2316
    %v2365 = vpack.c.b16 %v2321, %v2319
    %v2366 = vpack.c.b16 %v2322, %v2320
    %v2367 = vpack.c.b16 %v2325, %v2323
    %v2368 = vpack.c.b16 %v2326, %v2324
    %v2369 = vpack.c.b16 %v2329, %v2327
    %v2370 = vpack.c.b16 %v2330, %v2328
    %v2371 = vpack.c.b16 %v2333, %v2331
    %v2372 = vpack.c.b16 %v2334, %v2332
    %v2373 = vpack.c.b16 %v2337, %v2335
    %v2374 = vpack.c.b16 %v2338, %v2336
    %v2375 = vpack.c.b16 %v2341, %v2339
    %v2376 = vpack.c.b16 %v2342, %v2340
    %v2377 = vpack.c.b16 %v2345, %v2343
    %v2378 = vpack.c.b16 %v2346, %v2344
    %2411 = vmatpush.bf16.msra.mxu0 %v2361
    %2412 = vmatpush.bf16.msra.mxu0 %v2359
    %2413 = vmatpush.bf16.msra.mxu0 %v2357
    %2414 = vmatpush.bf16.msra.mxu0 %v2355
    %2415 = vmatpush.bf16.msra.mxu0 %v2353
    %2416 = vmatpush.bf16.msra.mxu0 %v2351
    %2417 = vmatpush.bf16.msra.mxu0 %v2349
    %2418 = vmatpush.bf16.msra.mxu0 %v2347
    %2419 = vmatmul.bf16.gmra.mxu0 %v2217
    %v2420 = vpop.f32.mrf.mxu0
    %v2421 = vadd.f32 0.0, %v2420
    %v2422 = vpop.f32.mrf.mxu0
    %2423 = vdwg.mxu0
    %2424 = vmatpush.bf16.msra.mxu0 %v2377
    %2425 = vmatpush.bf16.msra.mxu0 %v2375
    %2426 = vmatpush.bf16.msra.mxu0 %v2373
    %2427 = vmatpush.bf16.msra.mxu0 %v2371
    %2428 = vmatpush.bf16.msra.mxu0 %v2369
    %2429 = vmatpush.bf16.msra.mxu0 %v2367
    %2430 = vmatpush.bf16.msra.mxu0 %v2365
    %2431 = vmatpush.bf16.msra.mxu0 %v2363
    %2432 = vmatmul.bf16.gmra.mxu0 %v2218
    %v2433 = vpop.f32.mrf.mxu0
    %v2434 = vadd.f32 %v2421, %v2433
    %v2435 = vpop.f32.mrf.mxu0
    %2436 = vdwg.mxu0
    %2437 = vmatpush.bf16.msra.mxu0 %v2362
    %2438 = vmatpush.bf16.msra.mxu0 %v2360
    %2439 = vmatpush.bf16.msra.mxu0 %v2358
    %2440 = vmatpush.bf16.msra.mxu0 %v2356
    %2441 = vmatpush.bf16.msra.mxu0 %v2354
    %2442 = vmatpush.bf16.msra.mxu0 %v2352
    %2443 = vmatpush.bf16.msra.mxu0 %v2350
    %2444 = vmatpush.bf16.msra.mxu0 %v2348
    %2445 = vmatmul.bf16.gmra.mxu0 %v2217
    %v2446 = vpop.f32.mrf.mxu0
    %v2447 = vadd.f32 0.0, %v2446
    %v2448 = vpop.f32.mrf.mxu0
    %2449 = vdwg.mxu0
    %2450 = vmatpush.bf16.msra.mxu0 %v2378
    %2451 = vmatpush.bf16.msra.mxu0 %v2376
    %2452 = vmatpush.bf16.msra.mxu0 %v2374
    %2453 = vmatpush.bf16.msra.mxu0 %v2372
    %2454 = vmatpush.bf16.msra.mxu0 %v2370
    %2455 = vmatpush.bf16.msra.mxu0 %v2368
    %2456 = vmatpush.bf16.msra.mxu0 %v2366
    %2457 = vmatpush.bf16.msra.mxu0 %v2364
    %2458 = vmatmul.bf16.gmra.mxu0 %v2218
    %v2459 = vpop.f32.mrf.mxu0
    %v2460 = vadd.f32 %v2447, %v2459
    %v2461 = vpop.f32.mrf.mxu0
    %2462 = vdwg.mxu0
    %v2463 = vsel %vm2057, %v2434, 0.0
    %v2464 = vrot.slane %v2463, 4
    %v2465 = vadd.f32 %v2463, %v2464
    %v2466 = vrot.slane %v2465, 2
    %v2467 = vadd.f32 %v2465, %v2466
    %v2468 = vrot.slane %v2467, 1
    %v2469 = vadd.f32 %v2467, %v2468
    %v2470 = vsel %vm2057, %v2460, 0.0
    %v2471 = vrot.slane %v2470, 4
    %v2472 = vadd.f32 %v2470, %v2471
    %v2473 = vrot.slane %v2472, 2
    %v2474 = vadd.f32 %v2472, %v2473
    %v2475 = vrot.slane %v2474, 1
    %v2476 = vadd.f32 %v2474, %v2475
    %v2477 = vmul.f32 %v2469, %v2078
    %v2478 = vmul.f32 %v2476, %v2078
    %v2479 = vsub.f32 %v2434, %v2477
    %v2480 = vsub.f32 %v2460, %v2478
    %v2481 = vmul.f32 %v2479, %v2479
    %v2482 = vmul.f32 %v2480, %v2480
    %v2483 = vsel %vm2057, %v2481, 0.0
    %v2484 = vrot.slane %v2483, 4
    %v2485 = vadd.f32 %v2483, %v2484
    %v2486 = vrot.slane %v2485, 2
    %v2487 = vadd.f32 %v2485, %v2486
    %v2488 = vrot.slane %v2487, 1
    %v2489 = vadd.f32 %v2487, %v2488
    %v2490 = vsel %vm2057, %v2482, 0.0
    %v2491 = vrot.slane %v2490, 4
    %v2492 = vadd.f32 %v2490, %v2491
    %v2493 = vrot.slane %v2492, 2
    %v2494 = vadd.f32 %v2492, %v2493
    %v2495 = vrot.slane %v2494, 1
    %v2496 = vadd.f32 %v2494, %v2495
    %v2497 = vmul.f32 %v2489, %v2078
    %v2498 = vmul.f32 %v2496, %v2078
    %v2499 = vadd.f32 %v2497, 1e-05
    %v2500 = vadd.f32 %v2498, 1e-05
    %v2501 = vrsqrt.pop %v2499
    %v2502 = vmul.f32 %v2501, %v2499
    %v2503 = vmul.f32 %v2502, %v2501
    %v2504 = vmul.f32 0.5, %v2503
    %v2505 = vsub.f32 1.5, %v2504
    %v2506 = vmul.f32 %v2501, %v2505
    %vm2507 = vweird.f32 %v2499
    %vm2508 = vweird.f32 %v2501
    %vm2509 = vmor %vm2507, %vm2508
    %v2510 = vsel %vm2509, %v2501, %v2506
    %v2511 = vrsqrt.pop %v2500
    %v2512 = vmul.f32 %v2511, %v2500
    %v2513 = vmul.f32 %v2512, %v2511
    %v2514 = vmul.f32 0.5, %v2513
    %v2515 = vsub.f32 1.5, %v2514
    %v2516 = vmul.f32 %v2511, %v2515
    %vm2517 = vweird.f32 %v2500
    %vm2518 = vweird.f32 %v2511
    %vm2519 = vmor %vm2517, %vm2518
    %v2520 = vsel %vm2519, %v2511, %v2516
    %v2521 = vmul.f32 %v2479, %v2510
    %v2522 = vmul.f32 %v2480, %v2520
    %v2525 = vrot.slane %v2434, 2
    %v2526 = vrot.slane %v2460, 2
    %v2529 = vsel %vm2057, %v2525, 0.0
    %v2530 = vrot.slane %v2529, 4
    %v2531 = vadd.f32 %v2529, %v2530
    %v2532 = vrot.slane %v2531, 2
    %v2533 = vadd.f32 %v2531, %v2532
    %v2534 = vrot.slane %v2533, 1
    %v2535 = vadd.f32 %v2533, %v2534
    %v2536 = vsel %vm2057, %v2526, 0.0
    %v2537 = vrot.slane %v2536, 4
    %v2538 = vadd.f32 %v2536, %v2537
    %v2539 = vrot.slane %v2538, 2
    %v2540 = vadd.f32 %v2538, %v2539
    %v2541 = vrot.slane %v2540, 1
    %v2542 = vadd.f32 %v2540, %v2541
    %v2543 = vmul.f32 %v2535, %v2078
    %v2544 = vmul.f32 %v2542, %v2078
    %v2545 = vsub.f32 %v2434, %v2543
    %v2546 = vsub.f32 %v2460, %v2544
    %v2547 = vmul.f32 %v2545, %v2545
    %v2548 = vmul.f32 %v2546, %v2546
    %v2551 = vrot.slane %v2547, 2
    %v2552 = vrot.slane %v2548, 2
    %v2555 = vsel %vm2057, %v2551, 0.0
    %v2556 = vrot.slane %v2555, 4
    %v2557 = vadd.f32 %v2555, %v2556
    %v2558 = vrot.slane %v2557, 2
    %v2559 = vadd.f32 %v2557, %v2558
    %v2560 = vrot.slane %v2559, 1
    %v2561 = vadd.f32 %v2559, %v2560
    %v2562 = vsel %vm2057, %v2552, 0.0
    %v2563 = vrot.slane %v2562, 4
    %v2564 = vadd.f32 %v2562, %v2563
    %v2565 = vrot.slane %v2564, 2
    %v2566 = vadd.f32 %v2564, %v2565
    %v2567 = vrot.slane %v2566, 1
    %v2568 = vadd.f32 %v2566, %v2567
    %v2569 = vmul.f32 %v2561, %v2078
    %v2570 = vmul.f32 %v2568, %v2078
    %v2571 = vadd.f32 %v2569, 1e-05
    %v2572 = vadd.f32 %v2570, 1e-05
    %v2573 = vrsqrt.pop %v2571
    %v2574 = vmul.f32 %v2573, %v2571
    %v2575 = vmul.f32 %v2574, %v2573
    %v2576 = vmul.f32 0.5, %v2575
    %v2577 = vsub.f32 1.5, %v2576
    %v2578 = vmul.f32 %v2573, %v2577
    %vm2579 = vweird.f32 %v2571
    %vm2580 = vweird.f32 %v2573
    %vm2581 = vmor %vm2579, %vm2580
    %v2582 = vsel %vm2581, %v2573, %v2578
    %v2583 = vrsqrt.pop %v2572
    %v2584 = vmul.f32 %v2583, %v2572
    %v2585 = vmul.f32 %v2584, %v2583
    %v2586 = vmul.f32 0.5, %v2585
    %v2587 = vsub.f32 1.5, %v2586
    %v2588 = vmul.f32 %v2583, %v2587
    %vm2589 = vweird.f32 %v2572
    %vm2590 = vweird.f32 %v2583
    %vm2591 = vmor %vm2589, %vm2590
    %v2592 = vsel %vm2591, %v2583, %v2588
    %v2593 = vmul.f32 %v2545, %v2582
    %v2594 = vmul.f32 %v2546, %v2592
    %v2595 = vsel %vm2057, %v2521, %v2593
    %v2596 = vsel %vm2057, %v2522, %v2594
    %v2597 = vld [vmem:[%s5] sm:$0x3]
    %v2599 = vperm.slane %v2597, 0
    %v2600 = vperm.slane %v2597, 1
    %v2603 = vmul.f32 %v2595, %v2599
    %v2604 = vmul.f32 %v2596, %v2600
    %v2605 = vld [vmem:[%s6] sm:$0x3]
    %v2607 = vperm.slane %v2605, 0
    %v2608 = vperm.slane %v2605, 1
    %v2611 = vadd.f32 %v2603, %v2607
    %v2612 = vadd.f32 %v2604, %v2608
    %v2613 = vmax.f32 %v2611, 0.0
    %v2614 = vmax.f32 %v2612, 0.0
    %v2615 = vpack.c.bf16 %v2613, %v2613
    %v2616 = vpack.c.bf16 %v2614, %v2614
    %v2617 = vld [vmem:[%s7] sm:$0xf]
    %v2618 = vld [vmem:[%s7 + $0x4] sm:$0xf]
    %v2619 = vld [vmem:[%s7 + $0x8] sm:$0xf]
    %v2620 = vld [vmem:[%s7 + $0xc] sm:$0xf]
    %v2621 = vld [vmem:[%s7 + $0x10] sm:$0xf]
    %v2622 = vld [vmem:[%s7 + $0x14] sm:$0xf]
    %v2623 = vld [vmem:[%s7 + $0x18] sm:$0xf]
    %v2624 = vld [vmem:[%s7 + $0x1c] sm:$0xf]
    %v2625 = vld [vmem:[%s7 + $0x20] sm:$0xf]
    %v2626 = vld [vmem:[%s7 + $0x24] sm:$0xf]
    %v2627 = vld [vmem:[%s7 + $0x28] sm:$0xf]
    %v2628 = vld [vmem:[%s7 + $0x2c] sm:$0xf]
    %v2629 = vld [vmem:[%s7 + $0x30] sm:$0xf]
    %v2630 = vld [vmem:[%s7 + $0x34] sm:$0xf]
    %v2631 = vld [vmem:[%s7 + $0x38] sm:$0xf]
    %v2632 = vld [vmem:[%s7 + $0x3c] sm:$0xf]
    %v2633 = vld [vmem:[%s7 + $0x40] sm:$0xf]
    %v2634 = vld [vmem:[%s7 + $0x44] sm:$0xf]
    %v2635 = vld [vmem:[%s7 + $0x48] sm:$0xf]
    %v2636 = vld [vmem:[%s7 + $0x4c] sm:$0xf]
    %v2637 = vld [vmem:[%s7 + $0x50] sm:$0xf]
    %v2638 = vld [vmem:[%s7 + $0x54] sm:$0xf]
    %v2639 = vld [vmem:[%s7 + $0x58] sm:$0xf]
    %v2640 = vld [vmem:[%s7 + $0x5c] sm:$0xf]
    %v2641 = vld [vmem:[%s7 + $0x60] sm:$0xf]
    %v2642 = vld [vmem:[%s7 + $0x64] sm:$0xf]
    %v2643 = vld [vmem:[%s7 + $0x68] sm:$0xf]
    %v2644 = vld [vmem:[%s7 + $0x6c] sm:$0xf]
    %v2645 = vld [vmem:[%s7 + $0x70] sm:$0xf]
    %v2646 = vld [vmem:[%s7 + $0x74] sm:$0xf]
    %v2647 = vld [vmem:[%s7 + $0x78] sm:$0xf]
    %v2648 = vld [vmem:[%s7 + $0x7c] sm:$0xf]
    %v2681 = vunpack.c.l.b16 %v2617
    %v2682 = vunpack.c.l.b16 %v2618
    %v2683 = vunpack.c.l.b16 %v2619
    %v2684 = vunpack.c.l.b16 %v2620
    %v2685 = vunpack.c.l.b16 %v2621
    %v2686 = vunpack.c.l.b16 %v2622
    %v2687 = vunpack.c.l.b16 %v2623
    %v2688 = vunpack.c.l.b16 %v2624
    %v2689 = vunpack.c.l.b16 %v2625
    %v2690 = vunpack.c.l.b16 %v2626
    %v2691 = vunpack.c.l.b16 %v2627
    %v2692 = vunpack.c.l.b16 %v2628
    %v2693 = vunpack.c.l.b16 %v2629
    %v2694 = vunpack.c.l.b16 %v2630
    %v2695 = vunpack.c.l.b16 %v2631
    %v2696 = vunpack.c.l.b16 %v2632
    %v2697 = vunpack.c.l.b16 %v2633
    %v2698 = vunpack.c.l.b16 %v2634
    %v2699 = vunpack.c.l.b16 %v2635
    %v2700 = vunpack.c.l.b16 %v2636
    %v2701 = vunpack.c.l.b16 %v2637
    %v2702 = vunpack.c.l.b16 %v2638
    %v2703 = vunpack.c.l.b16 %v2639
    %v2704 = vunpack.c.l.b16 %v2640
    %v2705 = vunpack.c.l.b16 %v2641
    %v2706 = vunpack.c.l.b16 %v2642
    %v2707 = vunpack.c.l.b16 %v2643
    %v2708 = vunpack.c.l.b16 %v2644
    %v2709 = vunpack.c.l.b16 %v2645
    %v2710 = vunpack.c.l.b16 %v2646
    %v2711 = vunpack.c.l.b16 %v2647
    %v2712 = vunpack.c.l.b16 %v2648
    %v2713 = vpack.c.b16 %v2682, %v2681
    %v2714 = vpack.c.b16 %v2684, %v2683
    %v2715 = vpack.c.b16 %v2686, %v2685
    %v2716 = vpack.c.b16 %v2688, %v2687
    %v2717 = vpack.c.b16 %v2690, %v2689
    %v2718 = vpack.c.b16 %v2692, %v2691
    %v2719 = vpack.c.b16 %v2694, %v2693
    %v2720 = vpack.c.b16 %v2696, %v2695
    %v2721 = vpack.c.b16 %v2698, %v2697
    %v2722 = vpack.c.b16 %v2700, %v2699
    %v2723 = vpack.c.b16 %v2702, %v2701
    %v2724 = vpack.c.b16 %v2704, %v2703
    %v2725 = vpack.c.b16 %v2706, %v2705
    %v2726 = vpack.c.b16 %v2708, %v2707
    %v2727 = vpack.c.b16 %v2710, %v2709
    %v2728 = vpack.c.b16 %v2712, %v2711
    %2745 = vmatpush.bf16.msra.mxu0 %v2720
    %2746 = vmatpush.bf16.msra.mxu0 %v2719
    %2747 = vmatpush.bf16.msra.mxu0 %v2718
    %2748 = vmatpush.bf16.msra.mxu0 %v2717
    %2749 = vmatpush.bf16.msra.mxu0 %v2716
    %2750 = vmatpush.bf16.msra.mxu0 %v2715
    %2751 = vmatpush.bf16.msra.mxu0 %v2714
    %2752 = vmatpush.bf16.msra.mxu0 %v2713
    %2753 = vmatmul.bf16.gmra.mxu0 %v2615
    %v2754 = vpop.f32.mrf.mxu0
    %v2755 = vadd.f32 0.0, %v2754
    %v2756 = vpop.f32.mrf.mxu0
    %2757 = vdwg.mxu0
    %2758 = vmatpush.bf16.msra.mxu0 %v2728
    %2759 = vmatpush.bf16.msra.mxu0 %v2727
    %2760 = vmatpush.bf16.msra.mxu0 %v2726
    %2761 = vmatpush.bf16.msra.mxu0 %v2725
    %2762 = vmatpush.bf16.msra.mxu0 %v2724
    %2763 = vmatpush.bf16.msra.mxu0 %v2723
    %2764 = vmatpush.bf16.msra.mxu0 %v2722
    %2765 = vmatpush.bf16.msra.mxu0 %v2721
    %2766 = vmatmul.bf16.gmra.mxu0 %v2616
    %v2767 = vpop.f32.mrf.mxu0
    %v2768 = vadd.f32 %v2755, %v2767
    %v2769 = vpop.f32.mrf.mxu0
    %2770 = vdwg.mxu0
    %v2771 = vsel %vm2057, %v2768, 0.0
    %v2772 = vrot.slane %v2771, 4
    %v2773 = vadd.f32 %v2771, %v2772
    %v2774 = vrot.slane %v2773, 2
    %v2775 = vadd.f32 %v2773, %v2774
    %v2776 = vrot.slane %v2775, 1
    %v2777 = vadd.f32 %v2775, %v2776
    %v2778 = vmul.f32 %v2777, %v2078
    %v2779 = vsub.f32 %v2768, %v2778
    %v2780 = vmul.f32 %v2779, %v2779
    %v2781 = vsel %vm2057, %v2780, 0.0
    %v2782 = vrot.slane %v2781, 4
    %v2783 = vadd.f32 %v2781, %v2782
    %v2784 = vrot.slane %v2783, 2
    %v2785 = vadd.f32 %v2783, %v2784
    %v2786 = vrot.slane %v2785, 1
    %v2787 = vadd.f32 %v2785, %v2786
    %v2788 = vmul.f32 %v2787, %v2078
    %v2789 = vadd.f32 %v2788, 1e-05
    %v2790 = vrsqrt.pop %v2789
    %v2791 = vmul.f32 %v2790, %v2789
    %v2792 = vmul.f32 %v2791, %v2790
    %v2793 = vmul.f32 0.5, %v2792
    %v2794 = vsub.f32 1.5, %v2793
    %v2795 = vmul.f32 %v2790, %v2794
    %vm2796 = vweird.f32 %v2789
    %vm2797 = vweird.f32 %v2790
    %vm2798 = vmor %vm2796, %vm2797
    %v2799 = vsel %vm2798, %v2790, %v2795
    %v2800 = vmul.f32 %v2779, %v2799
    %v2802 = vrot.slane %v2768, 2
    %v2804 = vsel %vm2057, %v2802, 0.0
    %v2805 = vrot.slane %v2804, 4
    %v2806 = vadd.f32 %v2804, %v2805
    %v2807 = vrot.slane %v2806, 2
    %v2808 = vadd.f32 %v2806, %v2807
    %v2809 = vrot.slane %v2808, 1
    %v2810 = vadd.f32 %v2808, %v2809
    %v2811 = vmul.f32 %v2810, %v2078
    %v2812 = vsub.f32 %v2768, %v2811
    %v2813 = vmul.f32 %v2812, %v2812
    %v2815 = vrot.slane %v2813, 2
    %v2817 = vsel %vm2057, %v2815, 0.0
    %v2818 = vrot.slane %v2817, 4
    %v2819 = vadd.f32 %v2817, %v2818
    %v2820 = vrot.slane %v2819, 2
    %v2821 = vadd.f32 %v2819, %v2820
    %v2822 = vrot.slane %v2821, 1
    %v2823 = vadd.f32 %v2821, %v2822
    %v2824 = vmul.f32 %v2823, %v2078
    %v2825 = vadd.f32 %v2824, 1e-05
    %v2826 = vrsqrt.pop %v2825
    %v2827 = vmul.f32 %v2826, %v2825
    %v2828 = vmul.f32 %v2827, %v2826
    %v2829 = vmul.f32 0.5, %v2828
    %v2830 = vsub.f32 1.5, %v2829
    %v2831 = vmul.f32 %v2826, %v2830
    %vm2832 = vweird.f32 %v2825
    %vm2833 = vweird.f32 %v2826
    %vm2834 = vmor %vm2832, %vm2833
    %v2835 = vsel %vm2834, %v2826, %v2831
    %v2836 = vmul.f32 %v2812, %v2835
    %2837 = vxpose.xlu0.b32.start [1/16] %v2800, 128
    %2838 = vxpose.xlu0.b32.cont [2/16] 0.0, 128
    %2839 = vxpose.xlu0.b32.cont [3/16] 0.0, 128
    %2840 = vxpose.xlu0.b32.cont [4/16] 0.0, 128
    %2841 = vxpose.xlu0.b32.cont [5/16] 0.0, 128
    %2842 = vxpose.xlu0.b32.cont [6/16] 0.0, 128
    %2843 = vxpose.xlu0.b32.cont [7/16] 0.0, 128
    %2844 = vxpose.xlu0.b32.cont [8/16] 0.0, 128
    %2845 = vxpose.xlu0.b32.cont [9/16] 0.0, 128
    %2846 = vxpose.xlu0.b32.cont [10/16] 0.0, 128
    %2847 = vxpose.xlu0.b32.cont [11/16] 0.0, 128
    %2848 = vxpose.xlu0.b32.cont [12/16] 0.0, 128
    %2849 = vxpose.xlu0.b32.cont [13/16] 0.0, 128
    %2850 = vxpose.xlu0.b32.cont [14/16] 0.0, 128
    %2851 = vxpose.xlu0.b32.cont [15/16] 0.0, 128
    %2852 = vxpose.xlu0.b32.end [16/16] 0.0, 128
    %v2853 = vpop.trf.xlu0
    %v2854 = vpop.trf.xlu0
    %v2855 = vpop.trf.xlu0
    %v2856 = vpop.trf.xlu0
    %v2857 = vpop.trf.xlu0
    %v2858 = vpop.trf.xlu0
    %v2859 = vpop.trf.xlu0
    %v2860 = vpop.trf.xlu0
    %v2861 = vpop.trf.xlu0
    %v2862 = vpop.trf.xlu0
    %v2863 = vpop.trf.xlu0
    %v2864 = vpop.trf.xlu0
    %v2865 = vpop.trf.xlu0
    %v2866 = vpop.trf.xlu0
    %v2867 = vpop.trf.xlu0
    %v2868 = vpop.trf.xlu0
    %v2870 = vrot.slane %v2836, 2
    %vm2871 = vcmask 15360
    %v2873 = vsel %vm2871, %v2853, 0
    %v2876 = vsel %vm2871, %v2854, 0
    %v2879 = vsel %vm2871, %v2855, 0
    %v2882 = vsel %vm2871, %v2856, 0
    %v2885 = vsel %vm2871, %v2857, 0
    %v2888 = vsel %vm2871, %v2858, 0
    %v2891 = vsel %vm2871, %v2859, 0
    %v2894 = vsel %vm2871, %v2860, 0
    %v2897 = vsel %vm2871, %v2861, 0
    %v2900 = vsel %vm2871, %v2862, 0
    %v2903 = vsel %vm2871, %v2863, 0
    %v2906 = vsel %vm2871, %v2864, 0
    %v2909 = vsel %vm2871, %v2865, 0
    %v2912 = vsel %vm2871, %v2866, 0
    %v2915 = vsel %vm2871, %v2867, 0
    %v2918 = vsel %vm2871, %v2868, 0
    %v2920 = vsel %vm2057, %v2870, 0
    %2922 = vmatpush.msra.mxu0 0.0
    %2923 = vmatpush.msra.mxu0 0.0
    %2924 = vmatpush.msra.mxu0 0.0
    %2925 = vmatpush.msra.mxu0 0.0
    %2926 = vmatpush.msra.mxu0 0.0
    %2927 = vmatpush.msra.mxu0 0.0
    %2928 = vmatpush.msra.mxu0 0.0
    %2929 = vmatpush.msra.mxu0 0.0
    %2930 = vmatpush.msra.mxu0 0.0
    %2931 = vmatpush.msra.mxu0 0.0
    %2932 = vmatpush.msra.mxu0 0.0
    %2933 = vmatpush.msra.mxu0 0.0
    %2934 = vmatpush.msra.mxu0 0.0
    %2935 = vmatpush.msra.mxu0 0.0
    %2936 = vmatpush.msra.mxu0 0.0
    %2937 = vmatpush.msra.mxu0 %v2920
    %2938 = vmatmul.f32.gmra.mxu0 %v2873
    %v2939 = vpop.f32.mrf.mxu0
    %v2940 = vadd.f32 0.0, %v2939
    %2941 = vmatmul.f32.gmra.mxu0 %v2876
    %v2942 = vpop.f32.mrf.mxu0
    %v2943 = vadd.f32 0.0, %v2942
    %2944 = vmatmul.f32.gmra.mxu0 %v2879
    %v2945 = vpop.f32.mrf.mxu0
    %v2946 = vadd.f32 0.0, %v2945
    %2947 = vmatmul.f32.gmra.mxu0 %v2882
    %v2948 = vpop.f32.mrf.mxu0
    %v2949 = vadd.f32 0.0, %v2948
    %2950 = vmatmul.f32.gmra.mxu0 %v2885
    %v2951 = vpop.f32.mrf.mxu0
    %v2952 = vadd.f32 0.0, %v2951
    %2953 = vmatmul.f32.gmra.mxu0 %v2888
    %v2954 = vpop.f32.mrf.mxu0
    %v2955 = vadd.f32 0.0, %v2954
    %2956 = vmatmul.f32.gmra.mxu0 %v2891
    %v2957 = vpop.f32.mrf.mxu0
    %v2958 = vadd.f32 0.0, %v2957
    %2959 = vmatmul.f32.gmra.mxu0 %v2894
    %v2960 = vpop.f32.mrf.mxu0
    %v2961 = vadd.f32 0.0, %v2960
    %2962 = vmatmul.f32.gmra.mxu0 %v2897
    %v2963 = vpop.f32.mrf.mxu0
    %v2964 = vadd.f32 0.0, %v2963
    %2965 = vmatmul.f32.gmra.mxu0 %v2900
    %v2966 = vpop.f32.mrf.mxu0
    %v2967 = vadd.f32 0.0, %v2966
    %2968 = vmatmul.f32.gmra.mxu0 %v2903
    %v2969 = vpop.f32.mrf.mxu0
    %v2970 = vadd.f32 0.0, %v2969
    %2971 = vmatmul.f32.gmra.mxu0 %v2906
    %v2972 = vpop.f32.mrf.mxu0
    %v2973 = vadd.f32 0.0, %v2972
    %2974 = vmatmul.f32.gmra.mxu0 %v2909
    %v2975 = vpop.f32.mrf.mxu0
    %v2976 = vadd.f32 0.0, %v2975
    %2977 = vmatmul.f32.gmra.mxu0 %v2912
    %v2978 = vpop.f32.mrf.mxu0
    %v2979 = vadd.f32 0.0, %v2978
    %2980 = vmatmul.f32.gmra.mxu0 %v2915
    %v2981 = vpop.f32.mrf.mxu0
    %v2982 = vadd.f32 0.0, %v2981
    %2983 = vmatmul.f32.gmra.mxu0 %v2918
    %v2984 = vpop.f32.mrf.mxu0
    %v2985 = vadd.f32 0.0, %v2984
    %2986 = vdwg.mxu0
    %v2987 = vmul.f32 %v2940, 0.5
    %v2988 = vmul.f32 %v2943, 0.5
    %v2989 = vmul.f32 %v2946, 0.5
    %v2990 = vmul.f32 %v2949, 0.5
    %v2991 = vmul.f32 %v2952, 0.5
    %v2992 = vmul.f32 %v2955, 0.5
    %v2993 = vmul.f32 %v2958, 0.5
    %v2994 = vmul.f32 %v2961, 0.5
    %v2995 = vmul.f32 %v2964, 0.5
    %v2996 = vmul.f32 %v2967, 0.5
    %v2997 = vmul.f32 %v2970, 0.5
    %v2998 = vmul.f32 %v2973, 0.5
    %v2999 = vmul.f32 %v2976, 0.5
    %v3000 = vmul.f32 %v2979, 0.5
    %v3001 = vmul.f32 %v2982, 0.5
    %v3002 = vmul.f32 %v2985, 0.5
    %v3004 = vmul.f32 %v2800, %v2870
    %v3005 = vsel %vm2057, %v3004, 0.0
    %v3006 = vrot.slane %v3005, 4
    %v3007 = vadd.f32 %v3005, %v3006
    %v3008 = vrot.slane %v3007, 2
    %v3009 = vadd.f32 %v3007, %v3008
    %v3010 = vrot.slane %v3009, 1
    %v3011 = vadd.f32 %v3009, %v3010
    %v3012 = vmul.f32 %v3011, 0.5
    %v3013 = vsub.f32 %v3012, 1.0
    %v3014 = vmul.f32 %v3013, %v3013
    %vm3015 = vcmask 1040384
    %v3016 = vsel %vm3015, %v3014, 0.0
    %3017 = vadd.xlane.f32.xlu0 %v3016
    %v3018 = vpop.xlane.xlu0 %3017
    %v3019 = vrot.slane %v3018, 4
    %v3020 = vadd.f32 %v3018, %v3019
    %v3021 = vrot.slane %v3020, 2
    %v3022 = vadd.f32 %v3020, %v3021
    %v3023 = vrot.slane %v3022, 1
    %v3024 = vadd.f32 %v3022, %v3023
    %s3025 = vtos %v3024
    %v3026 = vmul.f32 %v2987, %v2987
    %v3027 = vmul.f32 %v2988, %v2988
    %v3028 = vmul.f32 %v2989, %v2989
    %v3029 = vmul.f32 %v2990, %v2990
    %v3030 = vmul.f32 %v2991, %v2991
    %v3031 = vmul.f32 %v2992, %v2992
    %v3032 = vmul.f32 %v2993, %v2993
    %v3033 = vmul.f32 %v2994, %v2994
    %v3034 = vmul.f32 %v2995, %v2995
    %v3035 = vmul.f32 %v2996, %v2996
    %v3036 = vmul.f32 %v2997, %v2997
    %v3037 = vmul.f32 %v2998, %v2998
    %v3038 = vmul.f32 %v2999, %v2999
    %v3039 = vmul.f32 %v3000, %v3000
    %v3040 = vmul.f32 %v3001, %v3001
    %v3041 = vmul.f32 %v3002, %v3002
    %v3042 = vadd.f32 %v3026, %v3027
    %v3043 = vadd.f32 %v3042, %v3028
    %v3044 = vadd.f32 %v3043, %v3029
    %v3045 = vadd.f32 %v3044, %v3030
    %v3046 = vadd.f32 %v3045, %v3031
    %v3047 = vadd.f32 %v3046, %v3032
    %v3048 = vadd.f32 %v3047, %v3033
    %v3049 = vadd.f32 %v3048, %v3034
    %v3050 = vadd.f32 %v3049, %v3035
    %v3051 = vadd.f32 %v3050, %v3036
    %v3052 = vadd.f32 %v3051, %v3037
    %v3053 = vadd.f32 %v3052, %v3038
    %v3054 = vadd.f32 %v3053, %v3039
    %v3055 = vadd.f32 %v3054, %v3040
    %v3056 = vadd.f32 %v3055, %v3041
    %3057 = vadd.xlane.f32.xlu0 %v3056
    %v3058 = vpop.xlane.xlu0 %3057
    %v3059 = vrot.slane %v3058, 4
    %v3060 = vadd.f32 %v3058, %v3059
    %v3061 = vrot.slane %v3060, 2
    %v3062 = vadd.f32 %v3060, %v3061
    %v3063 = vrot.slane %v3062, 1
    %v3064 = vadd.f32 %v3062, %v3063
    %s3065 = vtos %v3064
    %v3066 = vmul.f32 %v3012, %v3012
    %v3067 = vsel %vm3015, %v3066, 0.0
    %3068 = vadd.xlane.f32.xlu0 %v3067
    %v3069 = vpop.xlane.xlu0 %3068
    %v3070 = vrot.slane %v3069, 4
    %v3071 = vadd.f32 %v3069, %v3070
    %v3072 = vrot.slane %v3071, 2
    %v3073 = vadd.f32 %v3071, %v3072
    %v3074 = vrot.slane %v3073, 1
    %v3075 = vadd.f32 %v3073, %v3074
    %s3076 = vtos %v3075
    %s3077 = ssub.f32 %s3065, %s3076
    %s3078 = smul.f32 %s3077, 0.0051
    %s3079 = sadd.f32 %s3025, %s3078
    %s3080 = scalar_lea.smem [#allocation2], 0
    %3081 = sst [smem:[%s3080]] %s3079
    // Predicated region
    $region34: #{barlow_twins_forward.1} parent=1 // pred_check
      _
    $region35: #{barlow_twins_forward.1} parent=1 // pred_check_branch
      %3083 = sbr.rel (0) target = $region37
    $region36: #{barlow_twins_forward.1} parent=1 // pred_region
      %3085 = vsyncadd [#allocation3], 0
      %s3087 = sshll.u32 %s8, 4
      %s3088 = int_to_ptr.hbm [resolvable:$true] %s3087
      %3090 = dma.smem_to_hbm [#allocation2], 16, %s3088, [#allocation3]
    $region37: #{barlow_twins_forward.1} parent=1 // pred_fallthru
      _
    // Predicated region
    $region38: #{barlow_twins_forward.1} parent=1 // pred_check
      _
    $region39: #{barlow_twins_forward.1} parent=1 // pred_check_branch
      %3092 = sbr.rel (0) target = $region41
    $region40: #{barlow_twins_forward.1} parent=1 // pred_region
      %3094 = dma.done [#allocation3], 16
    $region41: #{barlow_twins_forward.1} parent=1 // pred_fallthru
      _
    %3095 = sfence
    %3096 = vsyncpa [#allocation3], 1

</llo_original>
